<compile_context>
chip_gen: v5e
topology: v5e:2x2
jax: 0.10.0
libtpu: 0.0.40
codegen_flags: <defaults>
</compile_context>

<pallas_src>
import jax
import jax.numpy as jnp
from jax.experimental import pallas as pl
from jax.experimental.pallas import tpu as pltpu


def bn_add_relu_conv_kernel(x_ref, r_ref, gb_ref, w_ref, o_ref):
    # x_ref, r_ref : (TK, M)     f32 block of channels (full spatial extent)
    # gb_ref       : (TK, 2)     f32  (col 0 = gamma, col 1 = beta)
    # w_ref        : (CO_BLK,TK) bf16
    # o_ref        : (CO_BLK, M) f32  (VMEM-resident across the Cin axis)
    k = pl.program_id(1)

    x = x_ref[...]
    m = x.shape[1]
    inv_m = 1.0 / m

    # One-pass batch statistics per channel (row), routed through the MXU
    # (idle during this phase) instead of XLU lane reductions.
    ones = jnp.ones((m, 1), dtype=jnp.float32)
    s = jnp.dot(x, ones, preferred_element_type=jnp.float32)        # (TK, 1)
    ss = jnp.dot(x * x, ones, preferred_element_type=jnp.float32)   # (TK, 1)
    mean = s * inv_m
    var = ss * inv_m - mean * mean          # biased (training-mode) variance
    inv_std = jax.lax.rsqrt(var + 1e-5)

    # Fold BN affine into per-channel scale/shift before touching the big tensor.
    a = gb_ref[:, 0:1] * inv_std            # gamma * inv_std        (TK, 1)
    b = gb_ref[:, 1:2] - mean * a           # beta  - mean * a       (TK, 1)

    # Normalize + residual add + ReLU: 1 mul + 2 adds + 1 max per element.
    y = jnp.maximum(x * a + (b + r_ref[...]), 0.0)                   # (TK, M)

    # Partial 1x1 conv for this Cin block: (CO_BLK, TK) @ (TK, M) on the MXU.
    partial = jnp.dot(w_ref[...], y.astype(jnp.bfloat16),
                      preferred_element_type=jnp.float32)

    @pl.when(k == 0)
    def _init():
        o_ref[...] = partial

    @pl.when(k != 0)
    def _acc():
        o_ref[...] += partial


def fused_bn_add_relu_conv(x407, x400, bn_gamma, bn_beta, conv_w):
    """x407, x400: (N, C_in, H, W) f32; conv_w: (C_out, C_in, 1, 1) f32."""
    N, C, H, W = x407.shape
    Cout = conv_w.shape[0]
    M = N * H * W

    if N == 1:
        # Free reshapes: NCHW with N==1 is already channel-major.
        x2 = x407.reshape(C, M)
        r2 = x400.reshape(C, M)
    else:
        # General case needs a real transpose to put channels first.
        x2 = jnp.transpose(x407, (1, 0, 2, 3)).reshape(C, M)
        r2 = jnp.transpose(x400, (1, 0, 2, 3)).reshape(C, M)

    w2 = conv_w.reshape(Cout, C).astype(jnp.bfloat16)     # free reshape, no .T
    gb = jnp.concatenate(
        [bn_gamma.reshape(C, 1), bn_beta.reshape(C, 1)], axis=1)      # (C, 2)

    # Cin reduction tile: multiple of 128 (w block last dim) so the (8,128)
    # block constraint holds; 256 -> 4 pipelined grid steps for C=1024.
    TK = 256 if (C % 256 == 0) else C
    NK = C // TK

    # v7x has 2 TensorCores per chip: split Cout across them.  Keep 1 block on
    # single-TC chips (v5e/v6e), where the duplicated x/r HBM reads of a Cout
    # split would regress this HBM-bound kernel.
    kind = jax.devices()[0].device_kind.lower()
    is_v7 = ("v7" in kind) or ("7x" in kind)
    NC = 2 if (is_v7 and Cout % 2 == 0 and (Cout // 2) % 8 == 0) else 1
    CO_BLK = Cout // NC

    out2 = pl.pallas_call(
        bn_add_relu_conv_kernel,
        out_shape=jax.ShapeDtypeStruct((Cout, M), jnp.float32),
        grid=(NC, NK),
        in_specs=[
            pl.BlockSpec((TK, M), lambda j, k: (k, 0)),       # x block
            pl.BlockSpec((TK, M), lambda j, k: (k, 0)),       # residual block
            pl.BlockSpec((TK, 2), lambda j, k: (k, 0)),       # gamma/beta block
            pl.BlockSpec((CO_BLK, TK), lambda j, k: (j, k)),  # weight block
        ],
        out_specs=pl.BlockSpec((CO_BLK, M), lambda j, k: (j, 0)),
        compiler_params=pltpu.CompilerParams(
            dimension_semantics=("parallel", "arbitrary")),
    )(x2, r2, gb, w2)

    if N == 1:
        return out2.reshape(1, Cout, H, W)                    # free reshape
    return jnp.transpose(out2.reshape(Cout, N, H, W), (1, 0, 2, 3))


def reference(x407, x400, bn_gamma, bn_beta, conv_w):
    # Plain-JAX f32 reference (training-mode BN), for correctness check.
    mean = jnp.mean(x407, axis=(0, 2, 3), keepdims=True)
    var = jnp.mean((x407 - mean) ** 2, axis=(0, 2, 3), keepdims=True)
    xn = (x407 - mean) * jax.lax.rsqrt(var + 1e-5)
    xn = xn * bn_gamma.reshape(1, -1, 1, 1) + bn_beta.reshape(1, -1, 1, 1)
    y = jnp.maximum(xn + x400, 0.0)
    return jax.lax.conv_general_dilated(
        y, conv_w, window_strides=(1, 1), padding="VALID",
        dimension_numbers=("NCHW", "OIHW", "NCHW"))


if __name__ == "__main__":
    N, Cin, H, W = 1, 1024, 14, 14
    Cout = 256

    key = jax.random.PRNGKey(0)
    k1, k2, k3 = jax.random.split(key, 3)
    x407 = jax.random.normal(k1, (N, Cin, H, W), dtype=jnp.float32)
    x400 = jax.random.normal(k2, (N, Cin, H, W), dtype=jnp.float32)

    # Deterministic parameter init (PyTorch default BN init; small random conv
    # weight of the right shape).
    bn_gamma = jnp.ones((Cin,), dtype=jnp.float32)
    bn_beta = jnp.zeros((Cin,), dtype=jnp.float32)
    conv_w = jax.random.normal(k3, (Cout, Cin, 1, 1), dtype=jnp.float32) * 0.02

    out = fused_bn_add_relu_conv(x407, x400, bn_gamma, bn_beta, conv_w)
    out = jax.block_until_ready(out)

    ref = jax.block_until_ready(reference(x407, x400, bn_gamma, bn_beta, conv_w))
    assert out.shape == (N, Cout, H, W), out.shape
    # Tolerance accounts for bf16 MXU inputs (f32 accumulation) over K=1024.
    assert jnp.allclose(out, ref, atol=2e-2, rtol=2e-2), float(
        jnp.max(jnp.abs(out - ref)))

    print("KERNEL_OK")
</pallas_src>

<mosaic_0001>
module attributes {stable_mosaic.version = 11 : i64} {
  func.func @bn_add_relu_conv_kernel(%arg0: i32, %arg1: i32, %arg2: memref<256x196xf32, #tpu.memory_space<vmem>>, %arg3: memref<256x196xf32, #tpu.memory_space<vmem>>, %arg4: memref<256x2xf32, #tpu.memory_space<vmem>>, %arg5: memref<256x256xbf16, #tpu.memory_space<vmem>>, %arg6: memref<256x196xf32, #tpu.memory_space<vmem>>) attributes {dimension_semantics = [#tpu.dimension_semantics<parallel>, #tpu.dimension_semantics<arbitrary>], iteration_bounds = array<i64: 1, 4>, scalar_prefetch = 0 : i64, scratch_operands = 0 : i64, tpu.core_type = #tpu.core_type<tc>, window_params = [{transform_indices = @transform_0, window_bounds = array<i64: 256, 196>}, {transform_indices = @transform_1, window_bounds = array<i64: 256, 196>}, {transform_indices = @transform_2, window_bounds = array<i64: 256, 2>}, {transform_indices = @transform_3, window_bounds = array<i64: 256, 256>}, {transform_indices = @transform_4, window_bounds = array<i64: 256, 196>}]} {
    %c0 = arith.constant 0 : index
    %c0_0 = arith.constant 0 : index
    %0 = vector.load %arg2[%c0, %c0_0] : memref<256x196xf32, #tpu.memory_space<vmem>>, vector<256x196xf32>
    %cst = arith.constant 1.000000e+00 : f32
    %1 = vector.broadcast %cst : f32 to vector<196x1xf32>
    %cst_1 = arith.constant dense<0.000000e+00> : vector<256x1xf32>
    %2 = tpu.matmul %0, %1, %cst_1 {dimension_numbers = #tpu.dot_dimension_numbers<[1], [0], [0], [1], [0, 0, 1, 1], [], []>} : vector<256x196xf32>, vector<196x1xf32>, vector<256x1xf32> -> vector<256x1xf32>
    %3 = arith.mulf %0, %0 : vector<256x196xf32>
    %cst_2 = arith.constant dense<0.000000e+00> : vector<256x1xf32>
    %4 = tpu.matmul %3, %1, %cst_2 {dimension_numbers = #tpu.dot_dimension_numbers<[1], [0], [0], [1], [0, 0, 1, 1], [], []>} : vector<256x196xf32>, vector<196x1xf32>, vector<256x1xf32> -> vector<256x1xf32>
    %cst_3 = arith.constant 0.00510204071 : f32
    %5 = vector.broadcast %cst_3 : f32 to vector<256x1xf32>
    %6 = arith.mulf %2, %5 : vector<256x1xf32>
    %cst_4 = arith.constant 0.00510204071 : f32
    %7 = vector.broadcast %cst_4 : f32 to vector<256x1xf32>
    %8 = arith.mulf %4, %7 : vector<256x1xf32>
    %9 = arith.mulf %6, %6 : vector<256x1xf32>
    %10 = arith.subf %8, %9 : vector<256x1xf32>
    %cst_5 = arith.constant 9.99999974E-6 : f32
    %11 = vector.broadcast %cst_5 : f32 to vector<256x1xf32>
    %12 = arith.addf %10, %11 : vector<256x1xf32>
    %13 = math.rsqrt %12 : vector<256x1xf32>
    %c0_6 = arith.constant 0 : index
    %c0_7 = arith.constant 0 : index
    %14 = vector.load %arg4[%c0_6, %c0_7] : memref<256x2xf32, #tpu.memory_space<vmem>>, vector<256x1xf32>
    %15 = arith.mulf %14, %13 : vector<256x1xf32>
    %c0_8 = arith.constant 0 : index
    %c1 = arith.constant 1 : index
    %16 = vector.load %arg4[%c0_8, %c1] : memref<256x2xf32, #tpu.memory_space<vmem>>, vector<256x1xf32>
    %17 = arith.mulf %6, %15 : vector<256x1xf32>
    %18 = arith.subf %16, %17 : vector<256x1xf32>
    %19 = vector.broadcast %15 : vector<256x1xf32> to vector<256x196xf32>
    %20 = arith.mulf %0, %19 : vector<256x196xf32>
    %c0_9 = arith.constant 0 : index
    %c0_10 = arith.constant 0 : index
    %21 = vector.load %arg3[%c0_9, %c0_10] : memref<256x196xf32, #tpu.memory_space<vmem>>, vector<256x196xf32>
    %22 = vector.broadcast %18 : vector<256x1xf32> to vector<256x196xf32>
    %23 = arith.addf %22, %21 : vector<256x196xf32>
    %24 = arith.addf %20, %23 : vector<256x196xf32>
    %cst_11 = arith.constant 0.000000e+00 : f32
    %25 = vector.broadcast %cst_11 : f32 to vector<256x196xf32>
    %26 = arith.maximumf %24, %25 : vector<256x196xf32>
    %c0_12 = arith.constant 0 : index
    %c0_13 = arith.constant 0 : index
    %27 = vector.load %arg5[%c0_12, %c0_13] : memref<256x256xbf16, #tpu.memory_space<vmem>>, vector<256x256xbf16>
    %28 = arith.truncf %26 : vector<256x196xf32> to vector<256x196xbf16>
    %cst_14 = arith.constant dense<0.000000e+00> : vector<256x196xf32>
    %29 = tpu.matmul %27, %28, %cst_14 {dimension_numbers = #tpu.dot_dimension_numbers<[1], [0], [0], [1], [0, 0, 1, 1], [], []>} : vector<256x256xbf16>, vector<256x196xbf16>, vector<256x196xf32> -> vector<256x196xf32>
    %c0_i32 = arith.constant 0 : i32
    %30 = arith.cmpi eq, %arg1, %c0_i32 : i32
    %31 = arith.extui %30 : i1 to i32
    %c0_i32_15 = arith.constant 0 : i32
    %32 = arith.cmpi ne, %31, %c0_i32_15 : i32
    scf.if %32 {
      %c0_18 = arith.constant 0 : index
      %c0_19 = arith.constant 0 : index
      %36 = vector.load %arg6[%c0_18, %c0_19] : memref<256x196xf32, #tpu.memory_space<vmem>>, vector<256x196xf32>
      tpu.vector_store %arg6[%c0_18, %c0_19], %29 {strides = array<i32>} : memref<256x196xf32, #tpu.memory_space<vmem>>, vector<256x196xf32>,
    } else {
    }
    %c0_i32_16 = arith.constant 0 : i32
    %33 = arith.cmpi ne, %arg1, %c0_i32_16 : i32
    %34 = arith.extui %33 : i1 to i32
    %c0_i32_17 = arith.constant 0 : i32
    %35 = arith.cmpi ne, %34, %c0_i32_17 : i32
    scf.if %35 {
      %c0_18 = arith.constant 0 : index
      %c0_19 = arith.constant 0 : index
      %36 = vector.load %arg6[%c0_18, %c0_19] : memref<256x196xf32, #tpu.memory_space<vmem>>, vector<256x196xf32>
      %37 = arith.addf %36, %29 : vector<256x196xf32>
      %c0_20 = arith.constant 0 : index
      %c0_21 = arith.constant 0 : index
      %38 = vector.load %arg6[%c0_20, %c0_21] : memref<256x196xf32, #tpu.memory_space<vmem>>, vector<256x196xf32>
      tpu.vector_store %arg6[%c0_20, %c0_21], %37 {strides = array<i32>} : memref<256x196xf32, #tpu.memory_space<vmem>>, vector<256x196xf32>,
    } else {
    }
    return
  }
  func.func @transform_0(%arg0: i32, %arg1: i32) -> (i32, i32) {
    %c0_i32 = arith.constant 0 : i32
    %c0_i32_0 = arith.constant 0 : i32
    return %arg1, %c0_i32 : i32, i32
  }
  func.func @transform_1(%arg0: i32, %arg1: i32) -> (i32, i32) {
    %c0_i32 = arith.constant 0 : i32
    %c0_i32_0 = arith.constant 0 : i32
    return %arg1, %c0_i32 : i32, i32
  }
  func.func @transform_2(%arg0: i32, %arg1: i32) -> (i32, i32) {
    %c0_i32 = arith.constant 0 : i32
    %c0_i32_0 = arith.constant 0 : i32
    return %arg1, %c0_i32 : i32, i32
  }
  func.func @transform_3(%arg0: i32, %arg1: i32) -> (i32, i32) {
    %c0_i32 = arith.constant 0 : i32
    return %arg0, %arg1 : i32, i32
  }
  func.func @transform_4(%arg0: i32, %arg1: i32) -> (i32, i32) {
    %c0_i32 = arith.constant 0 : i32
    %c0_i32_0 = arith.constant 0 : i32
    return %arg0, %c0_i32 : i32, i32
  }
}

</mosaic_0001>

<llo_original>
// kernel: tpu_custom_call.1
$region0: #{tpu_custom_call.1}
  #allocation0 [shape = 'u32[]', space=smem, size = 0x4, offset = 0x4, fixed_abs, tag = 'smem constant byte address 0x4 - core index']
  #allocation1 [shape = 'u32[72,128]{1,0:T(1,128)}', space=vmem, size = 0x9000, scoped, tag = 'internal scratch']
  %s0 = inlined_call_operand.vmem [shape: f32[1024,196], index: 0, kind: input, shape index: {}]
  %s1 = inlined_call_operand.vmem [shape: f32[1024,196], index: 1, kind: input, shape index: {}]
  %s2 = inlined_call_operand.vmem [shape: f32[1024,2], index: 2, kind: input, shape index: {}]
  %s3 = inlined_call_operand.vmem [shape: bf16[256,1024], index: 3, kind: input, shape index: {}]
  %s4 = inlined_call_operand.vmem [shape: f32[256,196], index: 4, kind: output, shape index: {}]
  %s5 = sld [smem:[#allocation0]]
  $region95: #{tpu_custom_call.1} parent=0
    _
  %s7 = ssub.s32 1, %s5
  %s8 = scalar_select 0, %s7, %s5
  $region1: #{tpu_custom_call.1} parent=0
    #allocation2 [shape = 'u8[262144]{0}', space=vmem, size = 0x40000, scoped, tag = 'input window, operand 3']
    loop: start=0, step=1, limit=6
    $region2: #{tpu_custom_call.1} parent=1 // loop_pre_header
      _
    $region3: #{tpu_custom_call.1} parent=1 // loop_header
      %s10 = sphi 0, %s14
      %p11 = scmp.ge.s32.totalorder %s10, 6
      %s17 = sphi 0, %s29
      %s18 = sphi 0, %s25
      %s19 = sphi 0, %s17
      %s20 = sphi 0, %s18
      %s21 = sphi 0, %s19
      %s22 = sphi 0, %s20
      %s32 = sphi 0, %s34
      %s35 = sphi 0, %s32
      %s36 = sphi 0, %s35
      %s52 = sphi 0, %s36
      %s58 = sphi 0, %s60
      %s61 = sphi 0, %s58
      %s62 = sphi 0, %s61
      %s78 = sphi 0, %s62
      %s84 = sphi 0, %s86
      %s87 = sphi 0, %s84
      %s88 = sphi 0, %s87
      %s104 = sphi 0, %s88
      %s112 = sphi 0, %s114
      %s115 = sphi 0, %s112
      %s116 = sphi 0, %s115
      %s132 = sphi 0, %s116
      %s138 = sphi 0, %s140
      %s141 = sphi 0, %s138
      %s142 = sphi 0, %s141
      %s158 = sphi 0, %s142
    $region4: #{tpu_custom_call.1} parent=1 // loop_header_branch
      %13 = sbr.rel (%p11) target = $region8
    $region5: #{tpu_custom_call.1} parent=1 // loop_body
      %s15 = ssub.s32 %s10, 1
      %s16 = ssub.s32 %s10, 2
      %s23 = sadd.s32 1, %s18
      %p24 = scmp.ge.s32.totalorder %s23, 4
      %s25 = scalar_select %p24, 0, %s23
      %s26 = sadd.s32 1, %s17
      %s27 = scalar_select %p24, %s26, %s17
      %p28 = scmp.ge.s32.totalorder %s27, 1
      %s29 = scalar_select %p28, 0, %s27
      %s30 = ssub.s32 %s18, %s25
      %p31 = scmp.eq.s32.totalorder %s30, 0
      %s33 = sadd.s32 %s32, 1
      %s34 = scalar_select %p31, %s32, %s33
      %p37 = pneg %p31
      %p38 = scmp.eq.s32.totalorder %s10, 3
      %p39 = por %p37, %p38
      %p40 = scmp.ne.s32.totalorder %s32, %s35
      %p41 = scmp.eq.s32.totalorder %s10, 0
      %p42 = por %p40, %p41
      %p43 = scmp.ne.s32.totalorder %s32, %s35
      %p44 = scmp.eq.s32.totalorder %s15, 3
      %p45 = por %p43, %p44
      %p46 = scmp.ne.s32.totalorder %s35, %s36
      %p47 = scmp.eq.s32.totalorder %s15, 0
      %p48 = por %p46, %p47
      %p49 = scmp.ne.s32.totalorder %s35, %s36
      %p50 = scmp.eq.s32.totalorder %s16, 3
      %p51 = por %p49, %p50
      %p53 = scmp.ne.s32.totalorder %s36, %s52
      %p54 = scmp.eq.s32.totalorder %s16, 0
      %p55 = por %p53, %p54
      %s56 = ssub.s32 %s18, %s25
      %p57 = scmp.eq.s32.totalorder %s56, 0
      %s59 = sadd.s32 %s58, 1
      %s60 = scalar_select %p57, %s58, %s59
      %p63 = pneg %p57
      %p64 = scmp.eq.s32.totalorder %s10, 3
      %p65 = por %p63, %p64
      %p66 = scmp.ne.s32.totalorder %s58, %s61
      %p67 = scmp.eq.s32.totalorder %s10, 0
      %p68 = por %p66, %p67
      %p69 = scmp.ne.s32.totalorder %s58, %s61
      %p70 = scmp.eq.s32.totalorder %s15, 3
      %p71 = por %p69, %p70
      %p72 = scmp.ne.s32.totalorder %s61, %s62
      %p73 = scmp.eq.s32.totalorder %s15, 0
      %p74 = por %p72, %p73
      %p75 = scmp.ne.s32.totalorder %s61, %s62
      %p76 = scmp.eq.s32.totalorder %s16, 3
      %p77 = por %p75, %p76
      %p79 = scmp.ne.s32.totalorder %s62, %s78
      %p80 = scmp.eq.s32.totalorder %s16, 0
      %p81 = por %p79, %p80
      %s82 = ssub.s32 %s18, %s25
      %p83 = scmp.eq.s32.totalorder %s82, 0
      %s85 = sadd.s32 %s84, 1
      %s86 = scalar_select %p83, %s84, %s85
      %p89 = pneg %p83
      %p90 = scmp.eq.s32.totalorder %s10, 3
      %p91 = por %p89, %p90
      %p92 = scmp.ne.s32.totalorder %s84, %s87
      %p93 = scmp.eq.s32.totalorder %s10, 0
      %p94 = por %p92, %p93
      %p95 = scmp.ne.s32.totalorder %s84, %s87
      %p96 = scmp.eq.s32.totalorder %s15, 3
      %p97 = por %p95, %p96
      %p98 = scmp.ne.s32.totalorder %s87, %s88
      %p99 = scmp.eq.s32.totalorder %s15, 0
      %p100 = por %p98, %p99
      %p101 = scmp.ne.s32.totalorder %s87, %s88
      %p102 = scmp.eq.s32.totalorder %s16, 3
      %p103 = por %p101, %p102
      %p105 = scmp.ne.s32.totalorder %s88, %s104
      %p106 = scmp.eq.s32.totalorder %s16, 0
      %p107 = por %p105, %p106
      %s108 = ssub.s32 %s17, %s29
      %s109 = ssub.s32 %s18, %s25
      %s110 = sor.u32 %s108, %s109
      %p111 = scmp.eq.s32.totalorder %s110, 0
      %s113 = sadd.s32 %s112, 1
      %s114 = scalar_select %p111, %s112, %s113
      %p117 = pneg %p111
      %p118 = scmp.eq.s32.totalorder %s10, 3
      %p119 = por %p117, %p118
      %p120 = scmp.ne.s32.totalorder %s112, %s115
      %p121 = scmp.eq.s32.totalorder %s10, 0
      %p122 = por %p120, %p121
      %p123 = scmp.ne.s32.totalorder %s112, %s115
      %p124 = scmp.eq.s32.totalorder %s15, 3
      %p125 = por %p123, %p124
      %p126 = scmp.ne.s32.totalorder %s115, %s116
      %p127 = scmp.eq.s32.totalorder %s15, 0
      %p128 = por %p126, %p127
      %p129 = scmp.ne.s32.totalorder %s115, %s116
      %p130 = scmp.eq.s32.totalorder %s16, 3
      %p131 = por %p129, %p130
      %p133 = scmp.ne.s32.totalorder %s116, %s132
      %p134 = scmp.eq.s32.totalorder %s16, 0
      %p135 = por %p133, %p134
      %s136 = ssub.s32 %s17, %s29
      %p137 = scmp.eq.s32.totalorder %s136, 0
      %s139 = sadd.s32 %s138, 1
      %s140 = scalar_select %p137, %s138, %s139
      %p143 = pneg %p137
      %p144 = scmp.eq.s32.totalorder %s10, 3
      %p145 = por %p143, %p144
      %p146 = scmp.ne.s32.totalorder %s138, %s141
      %p147 = scmp.eq.s32.totalorder %s10, 0
      %p148 = por %p146, %p147
      %p149 = scmp.ne.s32.totalorder %s138, %s141
      %p150 = scmp.eq.s32.totalorder %s15, 3
      %p151 = por %p149, %p150
      %p152 = scmp.ne.s32.totalorder %s141, %s142
      %p153 = scmp.eq.s32.totalorder %s15, 0
      %p154 = por %p152, %p153
      %p155 = scmp.ne.s32.totalorder %s141, %s142
      %p156 = scmp.eq.s32.totalorder %s16, 3
      %p157 = por %p155, %p156
      %p159 = scmp.ne.s32.totalorder %s142, %s158
      %p160 = scmp.eq.s32.totalorder %s16, 0
      %p161 = por %p159, %p160
      %p162 = scmp.le.s32.totalorder 1, %s10
      %p163 = scmp.lt.s32.totalorder %s10, 5
      %p164 = pnand %p162, %p163
      %p165 = pneg %p164
      // Predicated region
      $region9: #{tpu_custom_call.1} parent=5 // pred_check
        _
      $region10: #{tpu_custom_call.1} parent=5 // pred_check_branch
        %167 = sbr.rel (%p164) target = $region12
      $region11: #{tpu_custom_call.1} parent=5 // pred_region
        %s168 = ssub.s32 %s10, 1
      $region12: #{tpu_custom_call.1} parent=5 // pred_fallthru
        _
      %p169 = scmp.lt.s32.totalorder %s10, 4
      // Predicated region
      $region13: #{tpu_custom_call.1} parent=5 // pred_check
        %p170 = pneg %p169
      $region14: #{tpu_custom_call.1} parent=5 // pred_check_branch
        %172 = sbr.rel (%p170) target = $region16
      $region15: #{tpu_custom_call.1} parent=5 // pred_region
        // Predicated region
        $region17: #{tpu_custom_call.1} parent=15 // pred_check
          %p173 = pneg %p42
        $region18: #{tpu_custom_call.1} parent=15 // pred_check_branch
          %175 = sbr.rel (%p173) target = $region20
        $region19: #{tpu_custom_call.1} parent=15 // pred_region
          %s176 = smul.u32 32, %s18
          %p177 = scmp.lt.s32.totalorder %s176, 127
          %s178 = scalar_select %p177, %s176, 127
          %s179 = smul.addr %s178, 2
          %s180 = smul.addr %s179, 8
          %s181 = scalar_lea.vmem %s0, %s180
          %s182 = smul.u32 32, %s18
        $region20: #{tpu_custom_call.1} parent=15 // pred_fallthru
          _
        // Predicated region
        $region21: #{tpu_custom_call.1} parent=15 // pred_check
          %p183 = pneg %p68
        $region22: #{tpu_custom_call.1} parent=15 // pred_check_branch
          %185 = sbr.rel (%p183) target = $region24
        $region23: #{tpu_custom_call.1} parent=15 // pred_region
          %s186 = smul.u32 32, %s18
          %p187 = scmp.lt.s32.totalorder %s186, 127
          %s188 = scalar_select %p187, %s186, 127
          %s189 = smul.addr %s188, 2
          %s190 = smul.addr %s189, 8
          %s191 = scalar_lea.vmem %s1, %s190
          %s192 = smul.u32 32, %s18
        $region24: #{tpu_custom_call.1} parent=15 // pred_fallthru
          _
        // Predicated region
        $region25: #{tpu_custom_call.1} parent=15 // pred_check
          %p193 = pneg %p94
        $region26: #{tpu_custom_call.1} parent=15 // pred_check_branch
          %195 = sbr.rel (%p193) target = $region28
        $region27: #{tpu_custom_call.1} parent=15 // pred_region
          %s196 = smul.u32 32, %s18
          %p197 = scmp.lt.s32.totalorder %s196, 127
          %s198 = scalar_select %p197, %s196, 127
          %s199 = smul.addr %s198, 8
          %s200 = scalar_lea.vmem %s2, %s199
          %s201 = smul.u32 32, %s18
        $region28: #{tpu_custom_call.1} parent=15 // pred_fallthru
          _
        // Predicated region
        $region29: #{tpu_custom_call.1} parent=15 // pred_check
          %p202 = pneg %p122
        $region30: #{tpu_custom_call.1} parent=15 // pred_check_branch
          %204 = sbr.rel (%p202) target = $region32
        $region31: #{tpu_custom_call.1} parent=15 // pred_region
          %s205 = sand.u32 %s112, 1
          %s206 = sand.u32 %s112, 1
          %s207 = smul.addr %s206, 256
          %s208 = scalar_lea.vmem [#allocation2], %s207
          %s209 = smul.u32 32, %s17
          %s210 = smul.u32 2, %s18
          %s211 = smul.addr %s209, 8
          %s212 = sadd.s32 %s210, %s211
          %s213 = smul.addr %s212, 4
          %s214 = scalar_lea.vmem %s3, %s213
          // Predicated region
          $region33: #{tpu_custom_call.1} parent=31 // pred_check
            _
          $region34: #{tpu_custom_call.1} parent=31 // pred_check_branch
            %216 = sbr.rel (0) target = $region36
          $region35: #{tpu_custom_call.1} parent=31 // pred_region
            // Predicated region
            $region37: #{tpu_custom_call.1} parent=35 // pred_check
              _
            $region38: #{tpu_custom_call.1} parent=35 // pred_check_branch
              %218 = sbr.rel (0) target = $region40
            $region39: #{tpu_custom_call.1} parent=35 // pred_region
              // Predicated region
              $region52: #{tpu_custom_call.1} parent=39 // pred_check
                _
              $region53: #{tpu_custom_call.1} parent=39 // pred_check_branch
                %296 = sbr.rel (0) target = $region55
              $region54: #{tpu_custom_call.1} parent=39 // pred_region
                loop: start=0, step=1, limit=1
                $region56: #{tpu_custom_call.1} parent=54 // loop_pre_header
                  _
                $region57: #{tpu_custom_call.1} parent=54 // loop_header
                  %s298 = sphi 0, %s302
                  %p299 = scmp.ge.s32.totalorder %s298, 1
                  %s303 = sphi %s214, %s214
                  %s304 = sphi %s208, %s208
                $region58: #{tpu_custom_call.1} parent=54 // loop_header_branch
                  %301 = sbr.rel (%p299) target = $region62
                $region59: #{tpu_custom_call.1} parent=54 // loop_body
                  %v305 = vld [vmem:[%s303] sm:$0xff]
                  %306 = vst [vmem:[%s304] sm:$0xff] %v305
                  %v307 = vld [vmem:[%s303 + $0x20] sm:$0xff]
                  %308 = vst [vmem:[%s304 + $0x8] sm:$0xff] %v307
                  %v309 = vld [vmem:[%s303 + $0x40] sm:$0xff]
                  %310 = vst [vmem:[%s304 + $0x10] sm:$0xff] %v309
                  %v311 = vld [vmem:[%s303 + $0x60] sm:$0xff]
                  %312 = vst [vmem:[%s304 + $0x18] sm:$0xff] %v311
                  %v313 = vld [vmem:[%s303 + $0x80] sm:$0xff]
                  %314 = vst [vmem:[%s304 + $0x20] sm:$0xff] %v313
                  %v315 = vld [vmem:[%s303 + $0xa0] sm:$0xff]
                  %316 = vst [vmem:[%s304 + $0x28] sm:$0xff] %v315
                  %v317 = vld [vmem:[%s303 + $0xc0] sm:$0xff]
                  %318 = vst [vmem:[%s304 + $0x30] sm:$0xff] %v317
                  %v319 = vld [vmem:[%s303 + $0xe0] sm:$0xff]
                  %320 = vst [vmem:[%s304 + $0x38] sm:$0xff] %v319
                  %v321 = vld [vmem:[%s303 + $0x100] sm:$0xff]
                  %322 = vst [vmem:[%s304 + $0x40] sm:$0xff] %v321
                  %v323 = vld [vmem:[%s303 + $0x120] sm:$0xff]
                  %324 = vst [vmem:[%s304 + $0x48] sm:$0xff] %v323
                  %v325 = vld [vmem:[%s303 + $0x140] sm:$0xff]
                  %326 = vst [vmem:[%s304 + $0x50] sm:$0xff] %v325
                  %v327 = vld [vmem:[%s303 + $0x160] sm:$0xff]
                  %328 = vst [vmem:[%s304 + $0x58] sm:$0xff] %v327
                  %v329 = vld [vmem:[%s303 + $0x180] sm:$0xff]
                  %330 = vst [vmem:[%s304 + $0x60] sm:$0xff] %v329
                  %v331 = vld [vmem:[%s303 + $0x1a0] sm:$0xff]
                  %332 = vst [vmem:[%s304 + $0x68] sm:$0xff] %v331
                  %v333 = vld [vmem:[%s303 + $0x1c0] sm:$0xff]
                  %334 = vst [vmem:[%s304 + $0x70] sm:$0xff] %v333
                  %v335 = vld [vmem:[%s303 + $0x1e0] sm:$0xff]
                  %336 = vst [vmem:[%s304 + $0x78] sm:$0xff] %v335
                  %v337 = vld [vmem:[%s303 + $0x200] sm:$0xff]
                  %338 = vst [vmem:[%s304 + $0x80] sm:$0xff] %v337
                  %v339 = vld [vmem:[%s303 + $0x220] sm:$0xff]
                  %340 = vst [vmem:[%s304 + $0x88] sm:$0xff] %v339
                  %v341 = vld [vmem:[%s303 + $0x240] sm:$0xff]
                  %342 = vst [vmem:[%s304 + $0x90] sm:$0xff] %v341
                  %v343 = vld [vmem:[%s303 + $0x260] sm:$0xff]
                  %344 = vst [vmem:[%s304 + $0x98] sm:$0xff] %v343
                  %v345 = vld [vmem:[%s303 + $0x280] sm:$0xff]
                  %346 = vst [vmem:[%s304 + $0xa0] sm:$0xff] %v345
                  %v347 = vld [vmem:[%s303 + $0x2a0] sm:$0xff]
                  %348 = vst [vmem:[%s304 + $0xa8] sm:$0xff] %v347
                  %v349 = vld [vmem:[%s303 + $0x2c0] sm:$0xff]
                  %350 = vst [vmem:[%s304 + $0xb0] sm:$0xff] %v349
                  %v351 = vld [vmem:[%s303 + $0x2e0] sm:$0xff]
                  %352 = vst [vmem:[%s304 + $0xb8] sm:$0xff] %v351
                  %v353 = vld [vmem:[%s303 + $0x300] sm:$0xff]
                  %354 = vst [vmem:[%s304 + $0xc0] sm:$0xff] %v353
                  %v355 = vld [vmem:[%s303 + $0x320] sm:$0xff]
                  %356 = vst [vmem:[%s304 + $0xc8] sm:$0xff] %v355
                  %v357 = vld [vmem:[%s303 + $0x340] sm:$0xff]
                  %358 = vst [vmem:[%s304 + $0xd0] sm:$0xff] %v357
                  %v359 = vld [vmem:[%s303 + $0x360] sm:$0xff]
                  %360 = vst [vmem:[%s304 + $0xd8] sm:$0xff] %v359
                  %v361 = vld [vmem:[%s303 + $0x380] sm:$0xff]
                  %362 = vst [vmem:[%s304 + $0xe0] sm:$0xff] %v361
                  %v363 = vld [vmem:[%s303 + $0x3a0] sm:$0xff]
                  %364 = vst [vmem:[%s304 + $0xe8] sm:$0xff] %v363
                  %v365 = vld [vmem:[%s303 + $0x3c0] sm:$0xff]
                  %366 = vst [vmem:[%s304 + $0xf0] sm:$0xff] %v365
                  %v367 = vld [vmem:[%s303 + $0x3e0] sm:$0xff]
                  %368 = vst [vmem:[%s304 + $0xf8] sm:$0xff] %v367
                $region60: #{tpu_custom_call.1} parent=54 // loop_footer
                  %s302 = sadd.s32 1, %s298
                $region61: #{tpu_custom_call.1} parent=54 // loop_footer_branch
                  %297 = sbr.rel target = $region57
                $region62: #{tpu_custom_call.1} parent=54 // loop_exit
                  _
              $region55: #{tpu_custom_call.1} parent=39 // pred_fallthru
                _
              // Predicated region
              $region63: #{tpu_custom_call.1} parent=39 // pred_check
                _
              $region64: #{tpu_custom_call.1} parent=39 // pred_check_branch
                %370 = sbr.rel target = $region66
              $region65: #{tpu_custom_call.1} parent=39 // pred_region
                _
              $region66: #{tpu_custom_call.1} parent=39 // pred_fallthru
                _
            $region40: #{tpu_custom_call.1} parent=35 // pred_fallthru
              _
            // Predicated region
            $region41: #{tpu_custom_call.1} parent=35 // pred_check
              _
            $region42: #{tpu_custom_call.1} parent=35 // pred_check_branch
              %220 = sbr.rel target = $region44
            $region43: #{tpu_custom_call.1} parent=35 // pred_region
              %s222 = ssub.s32 256, 1
              loop: start=0, step=1, limit=1
              $region45: #{tpu_custom_call.1} parent=43 // loop_pre_header
                _
              $region46: #{tpu_custom_call.1} parent=43 // loop_header
                %s224 = sphi 0, %s228
                %p225 = scmp.ge.s32.totalorder %s224, 1
                %s229 = sphi %s214, %s214
                %s230 = sphi %s208, %s208
              $region47: #{tpu_custom_call.1} parent=43 // loop_header_branch
                %227 = sbr.rel (%p225) target = $region51
              $region48: #{tpu_custom_call.1} parent=43 // loop_body
                %v231 = vld [vmem:[%s229] sm:%s222]
                %232 = vst [vmem:[%s230] sm:%s222] %v231
                %v233 = vld [vmem:[%s229 + $0x20] sm:%s222]
                %234 = vst [vmem:[%s230 + $0x8] sm:%s222] %v233
                %v235 = vld [vmem:[%s229 + $0x40] sm:%s222]
                %236 = vst [vmem:[%s230 + $0x10] sm:%s222] %v235
                %v237 = vld [vmem:[%s229 + $0x60] sm:%s222]
                %238 = vst [vmem:[%s230 + $0x18] sm:%s222] %v237
                %v239 = vld [vmem:[%s229 + $0x80] sm:%s222]
                %240 = vst [vmem:[%s230 + $0x20] sm:%s222] %v239
                %v241 = vld [vmem:[%s229 + $0xa0] sm:%s222]
                %242 = vst [vmem:[%s230 + $0x28] sm:%s222] %v241
                %v243 = vld [vmem:[%s229 + $0xc0] sm:%s222]
                %244 = vst [vmem:[%s230 + $0x30] sm:%s222] %v243
                %v245 = vld [vmem:[%s229 + $0xe0] sm:%s222]
                %246 = vst [vmem:[%s230 + $0x38] sm:%s222] %v245
                %v247 = vld [vmem:[%s229 + $0x100] sm:%s222]
                %248 = vst [vmem:[%s230 + $0x40] sm:%s222] %v247
                %v249 = vld [vmem:[%s229 + $0x120] sm:%s222]
                %250 = vst [vmem:[%s230 + $0x48] sm:%s222] %v249
                %v251 = vld [vmem:[%s229 + $0x140] sm:%s222]
                %252 = vst [vmem:[%s230 + $0x50] sm:%s222] %v251
                %v253 = vld [vmem:[%s229 + $0x160] sm:%s222]
                %254 = vst [vmem:[%s230 + $0x58] sm:%s222] %v253
                %v255 = vld [vmem:[%s229 + $0x180] sm:%s222]
                %256 = vst [vmem:[%s230 + $0x60] sm:%s222] %v255
                %v257 = vld [vmem:[%s229 + $0x1a0] sm:%s222]
                %258 = vst [vmem:[%s230 + $0x68] sm:%s222] %v257
                %v259 = vld [vmem:[%s229 + $0x1c0] sm:%s222]
                %260 = vst [vmem:[%s230 + $0x70] sm:%s222] %v259
                %v261 = vld [vmem:[%s229 + $0x1e0] sm:%s222]
                %262 = vst [vmem:[%s230 + $0x78] sm:%s222] %v261
                %v263 = vld [vmem:[%s229 + $0x200] sm:%s222]
                %264 = vst [vmem:[%s230 + $0x80] sm:%s222] %v263
                %v265 = vld [vmem:[%s229 + $0x220] sm:%s222]
                %266 = vst [vmem:[%s230 + $0x88] sm:%s222] %v265
                %v267 = vld [vmem:[%s229 + $0x240] sm:%s222]
                %268 = vst [vmem:[%s230 + $0x90] sm:%s222] %v267
                %v269 = vld [vmem:[%s229 + $0x260] sm:%s222]
                %270 = vst [vmem:[%s230 + $0x98] sm:%s222] %v269
                %v271 = vld [vmem:[%s229 + $0x280] sm:%s222]
                %272 = vst [vmem:[%s230 + $0xa0] sm:%s222] %v271
                %v273 = vld [vmem:[%s229 + $0x2a0] sm:%s222]
                %274 = vst [vmem:[%s230 + $0xa8] sm:%s222] %v273
                %v275 = vld [vmem:[%s229 + $0x2c0] sm:%s222]
                %276 = vst [vmem:[%s230 + $0xb0] sm:%s222] %v275
                %v277 = vld [vmem:[%s229 + $0x2e0] sm:%s222]
                %278 = vst [vmem:[%s230 + $0xb8] sm:%s222] %v277
                %v279 = vld [vmem:[%s229 + $0x300] sm:%s222]
                %280 = vst [vmem:[%s230 + $0xc0] sm:%s222] %v279
                %v281 = vld [vmem:[%s229 + $0x320] sm:%s222]
                %282 = vst [vmem:[%s230 + $0xc8] sm:%s222] %v281
                %v283 = vld [vmem:[%s229 + $0x340] sm:%s222]
                %284 = vst [vmem:[%s230 + $0xd0] sm:%s222] %v283
                %v285 = vld [vmem:[%s229 + $0x360] sm:%s222]
                %286 = vst [vmem:[%s230 + $0xd8] sm:%s222] %v285
                %v287 = vld [vmem:[%s229 + $0x380] sm:%s222]
                %288 = vst [vmem:[%s230 + $0xe0] sm:%s222] %v287
                %v289 = vld [vmem:[%s229 + $0x3a0] sm:%s222]
                %290 = vst [vmem:[%s230 + $0xe8] sm:%s222] %v289
                %v291 = vld [vmem:[%s229 + $0x3c0] sm:%s222]
                %292 = vst [vmem:[%s230 + $0xf0] sm:%s222] %v291
                %v293 = vld [vmem:[%s229 + $0x3e0] sm:%s222]
                %294 = vst [vmem:[%s230 + $0xf8] sm:%s222] %v293
              $region49: #{tpu_custom_call.1} parent=43 // loop_footer
                %s228 = sadd.s32 1, %s224
              $region50: #{tpu_custom_call.1} parent=43 // loop_footer_branch
                %223 = sbr.rel target = $region46
              $region51: #{tpu_custom_call.1} parent=43 // loop_exit
                _
            $region44: #{tpu_custom_call.1} parent=35 // pred_fallthru
              _
          $region36: #{tpu_custom_call.1} parent=31 // pred_fallthru
            _
          %371 = vnop
        $region32: #{tpu_custom_call.1} parent=15 // pred_fallthru
          _
      $region16: #{tpu_custom_call.1} parent=5 // pred_fallthru
        _
      %p372 = scmp.le.s32.totalorder 1, %s10
      %p373 = scmp.lt.s32.totalorder %s10, 5
      %p374 = pnand %p372, %p373
      %p375 = pneg %p374
      // Predicated region
      $region67: #{tpu_custom_call.1} parent=5 // pred_check
        _
      $region68: #{tpu_custom_call.1} parent=5 // pred_check_branch
        %377 = sbr.rel (%p374) target = $region70
      $region69: #{tpu_custom_call.1} parent=5 // pred_region
        %s378 = ssub.s32 %s10, 1
        %s379 = sand.u32 %s115, 1
        %s380 = sand.u32 %s115, 1
        %s381 = smul.addr %s380, 256
        %s382 = scalar_lea.vmem [#allocation2], %s381
        // Predicated region
        $region71: #{tpu_custom_call.1} parent=69 // pred_check
          %p383 = pneg %p128
        $region72: #{tpu_custom_call.1} parent=69 // pred_check_branch
          %385 = sbr.rel (%p383) target = $region74
        $region73: #{tpu_custom_call.1} parent=69 // pred_region
          _
        $region74: #{tpu_custom_call.1} parent=69 // pred_fallthru
          _
        %s386 = smul.u32 32, %s20
        %p387 = scmp.lt.s32.totalorder %s386, 127
        %s388 = scalar_select %p387, %s386, 127
        %s389 = smul.addr %s388, 2
        %s390 = smul.addr %s389, 8
        %s391 = scalar_lea.vmem %s0, %s390
        %p392 = pneg %p48
        %p393 = pneg %p45
        %s394 = smul.u32 32, %s20
        %p395 = scmp.lt.s32.totalorder %s394, 127
        %s396 = scalar_select %p395, %s394, 127
        %s397 = smul.addr %s396, 2
        %s398 = smul.addr %s397, 8
        %s399 = scalar_lea.vmem %s1, %s398
        %p400 = pneg %p74
        %p401 = pneg %p71
        %s402 = smul.u32 32, %s20
        %p403 = scmp.lt.s32.totalorder %s402, 127
        %s404 = scalar_select %p403, %s402, 127
        %s405 = smul.addr %s404, 8
        %s406 = scalar_lea.vmem %s2, %s405
        %p407 = pneg %p100
        %p408 = pneg %p97
        %s409 = sand.u32 %s115, 1
        %s410 = sand.u32 %s115, 1
        %s411 = smul.addr %s410, 256
        %s412 = scalar_lea.vmem [#allocation2], %s411
        %p413 = pneg %p128
        %p414 = pneg %p125
        %p415 = pneg %p154
        %p416 = pneg %p151
        %s417 = smul.u32 32, %s19
        %p418 = scmp.lt.s32.totalorder %s417, 31
        %s419 = scalar_select %p418, %s417, 31
        %s420 = smul.addr %s419, 2
        %s421 = smul.addr %s420, 8
        %s422 = scalar_lea.vmem %s4, %s421
        %s423 = smul.u32 32, %s20
        %p424 = scmp.lt.s32.totalorder %s423, 127
        %s425 = scalar_select %p424, %s423, 127
        %s426 = smul.addr %s425, 2
        %s427 = smul.addr %s426, 8
        %s428 = scalar_lea.vmem %s0, %s427
        %s429 = smul.u32 32, %s20
        %s430 = smul.u32 32, %s20
        %p431 = scmp.lt.s32.totalorder %s430, 127
        %s432 = scalar_select %p431, %s430, 127
        %s433 = smul.addr %s432, 2
        %s434 = smul.addr %s433, 8
        %s435 = scalar_lea.vmem %s1, %s434
        %s436 = smul.u32 32, %s20
        %s437 = smul.u32 32, %s20
        %p438 = scmp.lt.s32.totalorder %s437, 127
        %s439 = scalar_select %p438, %s437, 127
        %s440 = smul.addr %s439, 8
        %s441 = scalar_lea.vmem %s2, %s440
        %s442 = smul.u32 32, %s20
        %s443 = smul.u32 32, %s19
        %s444 = smul.u32 2, %s20
        %s445 = smul.u32 32, %s19
        %p446 = scmp.lt.s32.totalorder %s445, 31
        %s447 = scalar_select %p446, %s445, 31
        %s448 = smul.addr %s447, 2
        %s449 = smul.addr %s448, 8
        %s450 = scalar_lea.vmem %s4, %s449
        %s451 = smul.u32 32, %s19
        %v452 = vld [vmem:[%s428] sm:$0xff]
        %v453 = vld [vmem:[%s428 + $0x8] sm:$0xff]
        %v454 = vld [vmem:[%s428 + $0x10] sm:$0xff]
        %v455 = vld [vmem:[%s428 + $0x18] sm:$0xff]
        %v456 = vld [vmem:[%s428 + $0x20] sm:$0xff]
        %v457 = vld [vmem:[%s428 + $0x28] sm:$0xff]
        %v458 = vld [vmem:[%s428 + $0x30] sm:$0xff]
        %v459 = vld [vmem:[%s428 + $0x38] sm:$0xff]
        %v460 = vld [vmem:[%s428 + $0x40] sm:$0xff]
        %v461 = vld [vmem:[%s428 + $0x48] sm:$0xff]
        %v462 = vld [vmem:[%s428 + $0x50] sm:$0xff]
        %v463 = vld [vmem:[%s428 + $0x58] sm:$0xff]
        %v464 = vld [vmem:[%s428 + $0x60] sm:$0xff]
        %v465 = vld [vmem:[%s428 + $0x68] sm:$0xff]
        %v466 = vld [vmem:[%s428 + $0x70] sm:$0xff]
        %v467 = vld [vmem:[%s428 + $0x78] sm:$0xff]
        %v468 = vld [vmem:[%s428 + $0x80] sm:$0xff]
        %v469 = vld [vmem:[%s428 + $0x88] sm:$0xff]
        %v470 = vld [vmem:[%s428 + $0x90] sm:$0xff]
        %v471 = vld [vmem:[%s428 + $0x98] sm:$0xff]
        %v472 = vld [vmem:[%s428 + $0xa0] sm:$0xff]
        %v473 = vld [vmem:[%s428 + $0xa8] sm:$0xff]
        %v474 = vld [vmem:[%s428 + $0xb0] sm:$0xff]
        %v475 = vld [vmem:[%s428 + $0xb8] sm:$0xff]
        %v476 = vld [vmem:[%s428 + $0xc0] sm:$0xff]
        %v477 = vld [vmem:[%s428 + $0xc8] sm:$0xff]
        %v478 = vld [vmem:[%s428 + $0xd0] sm:$0xff]
        %v479 = vld [vmem:[%s428 + $0xd8] sm:$0xff]
        %v480 = vld [vmem:[%s428 + $0xe0] sm:$0xff]
        %v481 = vld [vmem:[%s428 + $0xe8] sm:$0xff]
        %v482 = vld [vmem:[%s428 + $0xf0] sm:$0xff]
        %v483 = vld [vmem:[%s428 + $0xf8] sm:$0xff]
        %v484 = vld [vmem:[%s428 + $0x100] sm:$0xff]
        %v485 = vld [vmem:[%s428 + $0x108] sm:$0xff]
        %v486 = vld [vmem:[%s428 + $0x110] sm:$0xff]
        %v487 = vld [vmem:[%s428 + $0x118] sm:$0xff]
        %v488 = vld [vmem:[%s428 + $0x120] sm:$0xff]
        %v489 = vld [vmem:[%s428 + $0x128] sm:$0xff]
        %v490 = vld [vmem:[%s428 + $0x130] sm:$0xff]
        %v491 = vld [vmem:[%s428 + $0x138] sm:$0xff]
        %v492 = vld [vmem:[%s428 + $0x140] sm:$0xff]
        %v493 = vld [vmem:[%s428 + $0x148] sm:$0xff]
        %v494 = vld [vmem:[%s428 + $0x150] sm:$0xff]
        %v495 = vld [vmem:[%s428 + $0x158] sm:$0xff]
        %v496 = vld [vmem:[%s428 + $0x160] sm:$0xff]
        %v497 = vld [vmem:[%s428 + $0x168] sm:$0xff]
        %v498 = vld [vmem:[%s428 + $0x170] sm:$0xff]
        %v499 = vld [vmem:[%s428 + $0x178] sm:$0xff]
        %v500 = vld [vmem:[%s428 + $0x180] sm:$0xff]
        %v501 = vld [vmem:[%s428 + $0x188] sm:$0xff]
        %v502 = vld [vmem:[%s428 + $0x190] sm:$0xff]
        %v503 = vld [vmem:[%s428 + $0x198] sm:$0xff]
        %v504 = vld [vmem:[%s428 + $0x1a0] sm:$0xff]
        %v505 = vld [vmem:[%s428 + $0x1a8] sm:$0xff]
        %v506 = vld [vmem:[%s428 + $0x1b0] sm:$0xff]
        %v507 = vld [vmem:[%s428 + $0x1b8] sm:$0xff]
        %v508 = vld [vmem:[%s428 + $0x1c0] sm:$0xff]
        %v509 = vld [vmem:[%s428 + $0x1c8] sm:$0xff]
        %v510 = vld [vmem:[%s428 + $0x1d0] sm:$0xff]
        %v511 = vld [vmem:[%s428 + $0x1d8] sm:$0xff]
        %v512 = vld [vmem:[%s428 + $0x1e0] sm:$0xff]
        %v513 = vld [vmem:[%s428 + $0x1e8] sm:$0xff]
        %v514 = vld [vmem:[%s428 + $0x1f0] sm:$0xff]
        %v515 = vld [vmem:[%s428 + $0x1f8] sm:$0xff]
        %vm516 = vcmask 556032
        %v518 = vsel %vm516, %v453, 0
        %v521 = vsel %vm516, %v455, 0
        %v524 = vsel %vm516, %v457, 0
        %v527 = vsel %vm516, %v459, 0
        %v530 = vsel %vm516, %v461, 0
        %v533 = vsel %vm516, %v463, 0
        %v536 = vsel %vm516, %v465, 0
        %v539 = vsel %vm516, %v467, 0
        %v542 = vsel %vm516, %v469, 0
        %v545 = vsel %vm516, %v471, 0
        %v548 = vsel %vm516, %v473, 0
        %v551 = vsel %vm516, %v475, 0
        %v554 = vsel %vm516, %v477, 0
        %v557 = vsel %vm516, %v479, 0
        %v560 = vsel %vm516, %v481, 0
        %v563 = vsel %vm516, %v483, 0
        %v566 = vsel %vm516, %v485, 0
        %v569 = vsel %vm516, %v487, 0
        %v572 = vsel %vm516, %v489, 0
        %v575 = vsel %vm516, %v491, 0
        %v578 = vsel %vm516, %v493, 0
        %v581 = vsel %vm516, %v495, 0
        %v584 = vsel %vm516, %v497, 0
        %v587 = vsel %vm516, %v499, 0
        %v590 = vsel %vm516, %v501, 0
        %v593 = vsel %vm516, %v503, 0
        %v596 = vsel %vm516, %v505, 0
        %v599 = vsel %vm516, %v507, 0
        %v602 = vsel %vm516, %v509, 0
        %v605 = vsel %vm516, %v511, 0
        %v608 = vsel %vm516, %v513, 0
        %v611 = vsel %vm516, %v515, 0
        %vm613 = vcmask 1043456
        %v615 = vsel %vm613, 1.0, 0
        %617 = vmatpush.msra.mxu0 1.0
        %618 = vmatpush.msra.mxu0 1.0
        %619 = vmatpush.msra.mxu0 1.0
        %620 = vmatpush.msra.mxu0 1.0
        %621 = vmatpush.msra.mxu0 1.0
        %622 = vmatpush.msra.mxu0 1.0
        %623 = vmatpush.msra.mxu0 1.0
        %624 = vmatpush.msra.mxu0 1.0
        %625 = vmatpush.msra.mxu0 1.0
        %626 = vmatpush.msra.mxu0 1.0
        %627 = vmatpush.msra.mxu0 1.0
        %628 = vmatpush.msra.mxu0 1.0
        %629 = vmatpush.msra.mxu0 1.0
        %630 = vmatpush.msra.mxu0 1.0
        %631 = vmatpush.msra.mxu0 1.0
        %632 = vmatpush.msra.mxu0 1.0
        %633 = vmatmul.f32.gmra.mxu0 %v452
        %v634 = vpop.f32.mrf.mxu0
        %v635 = vadd.f32 0.0, %v634
        %636 = vmatmul.f32.gmra.mxu0 %v454
        %v637 = vpop.f32.mrf.mxu0
        %v638 = vadd.f32 0.0, %v637
        %639 = vmatmul.f32.gmra.mxu0 %v456
        %v640 = vpop.f32.mrf.mxu0
        %v641 = vadd.f32 0.0, %v640
        %642 = vmatmul.f32.gmra.mxu0 %v458
        %v643 = vpop.f32.mrf.mxu0
        %v644 = vadd.f32 0.0, %v643
        %645 = vmatmul.f32.gmra.mxu0 %v460
        %v646 = vpop.f32.mrf.mxu0
        %v647 = vadd.f32 0.0, %v646
        %648 = vmatmul.f32.gmra.mxu0 %v462
        %v649 = vpop.f32.mrf.mxu0
        %v650 = vadd.f32 0.0, %v649
        %651 = vmatmul.f32.gmra.mxu0 %v464
        %v652 = vpop.f32.mrf.mxu0
        %v653 = vadd.f32 0.0, %v652
        %654 = vmatmul.f32.gmra.mxu0 %v466
        %v655 = vpop.f32.mrf.mxu0
        %v656 = vadd.f32 0.0, %v655
        %657 = vmatmul.f32.gmra.mxu0 %v468
        %v658 = vpop.f32.mrf.mxu0
        %v659 = vadd.f32 0.0, %v658
        %660 = vmatmul.f32.gmra.mxu0 %v470
        %v661 = vpop.f32.mrf.mxu0
        %v662 = vadd.f32 0.0, %v661
        %663 = vmatmul.f32.gmra.mxu0 %v472
        %v664 = vpop.f32.mrf.mxu0
        %v665 = vadd.f32 0.0, %v664
        %666 = vmatmul.f32.gmra.mxu0 %v474
        %v667 = vpop.f32.mrf.mxu0
        %v668 = vadd.f32 0.0, %v667
        %669 = vmatmul.f32.gmra.mxu0 %v476
        %v670 = vpop.f32.mrf.mxu0
        %v671 = vadd.f32 0.0, %v670
        %672 = vmatmul.f32.gmra.mxu0 %v478
        %v673 = vpop.f32.mrf.mxu0
        %v674 = vadd.f32 0.0, %v673
        %675 = vmatmul.f32.gmra.mxu0 %v480
        %v676 = vpop.f32.mrf.mxu0
        %v677 = vadd.f32 0.0, %v676
        %678 = vmatmul.f32.gmra.mxu0 %v482
        %v679 = vpop.f32.mrf.mxu0
        %v680 = vadd.f32 0.0, %v679
        %681 = vmatmul.f32.gmra.mxu0 %v484
        %v682 = vpop.f32.mrf.mxu0
        %v683 = vadd.f32 0.0, %v682
        %684 = vmatmul.f32.gmra.mxu0 %v486
        %v685 = vpop.f32.mrf.mxu0
        %v686 = vadd.f32 0.0, %v685
        %687 = vmatmul.f32.gmra.mxu0 %v488
        %v688 = vpop.f32.mrf.mxu0
        %v689 = vadd.f32 0.0, %v688
        %690 = vmatmul.f32.gmra.mxu0 %v490
        %v691 = vpop.f32.mrf.mxu0
        %v692 = vadd.f32 0.0, %v691
        %693 = vmatmul.f32.gmra.mxu0 %v492
        %v694 = vpop.f32.mrf.mxu0
        %v695 = vadd.f32 0.0, %v694
        %696 = vmatmul.f32.gmra.mxu0 %v494
        %v697 = vpop.f32.mrf.mxu0
        %v698 = vadd.f32 0.0, %v697
        %699 = vmatmul.f32.gmra.mxu0 %v496
        %v700 = vpop.f32.mrf.mxu0
        %v701 = vadd.f32 0.0, %v700
        %702 = vmatmul.f32.gmra.mxu0 %v498
        %v703 = vpop.f32.mrf.mxu0
        %v704 = vadd.f32 0.0, %v703
        %705 = vmatmul.f32.gmra.mxu0 %v500
        %v706 = vpop.f32.mrf.mxu0
        %v707 = vadd.f32 0.0, %v706
        %708 = vmatmul.f32.gmra.mxu0 %v502
        %v709 = vpop.f32.mrf.mxu0
        %v710 = vadd.f32 0.0, %v709
        %711 = vmatmul.f32.gmra.mxu0 %v504
        %v712 = vpop.f32.mrf.mxu0
        %v713 = vadd.f32 0.0, %v712
        %714 = vmatmul.f32.gmra.mxu0 %v506
        %v715 = vpop.f32.mrf.mxu0
        %v716 = vadd.f32 0.0, %v715
        %717 = vmatmul.f32.gmra.mxu0 %v508
        %v718 = vpop.f32.mrf.mxu0
        %v719 = vadd.f32 0.0, %v718
        %720 = vmatmul.f32.gmra.mxu0 %v510
        %v721 = vpop.f32.mrf.mxu0
        %v722 = vadd.f32 0.0, %v721
        %723 = vmatmul.f32.gmra.mxu0 %v512
        %v724 = vpop.f32.mrf.mxu0
        %v725 = vadd.f32 0.0, %v724
        %726 = vmatmul.f32.gmra.mxu0 %v514
        %v727 = vpop.f32.mrf.mxu0
        %v728 = vadd.f32 0.0, %v727
        %729 = vdwg.mxu0
        %730 = vmatpush.msra.mxu0 0.0
        %731 = vmatpush.msra.mxu0 0.0
        %732 = vmatpush.msra.mxu0 0.0
        %733 = vmatpush.msra.mxu0 0.0
        %734 = vmatpush.msra.mxu0 0.0
        %735 = vmatpush.msra.mxu0 0.0
        %736 = vmatpush.msra.mxu0 0.0
        %737 = vmatpush.msra.mxu0 %v615
        %738 = vmatpush.msra.mxu0 1.0
        %739 = vmatpush.msra.mxu0 1.0
        %740 = vmatpush.msra.mxu0 1.0
        %741 = vmatpush.msra.mxu0 1.0
        %742 = vmatpush.msra.mxu0 1.0
        %743 = vmatpush.msra.mxu0 1.0
        %744 = vmatpush.msra.mxu0 1.0
        %745 = vmatpush.msra.mxu0 1.0
        %746 = vmatmul.f32.gmra.mxu0 %v518
        %v747 = vpop.f32.mrf.mxu0
        %v748 = vadd.f32 %v635, %v747
        %749 = vmatmul.f32.gmra.mxu0 %v521
        %v750 = vpop.f32.mrf.mxu0
        %v751 = vadd.f32 %v638, %v750
        %752 = vmatmul.f32.gmra.mxu0 %v524
        %v753 = vpop.f32.mrf.mxu0
        %v754 = vadd.f32 %v641, %v753
        %755 = vmatmul.f32.gmra.mxu0 %v527
        %v756 = vpop.f32.mrf.mxu0
        %v757 = vadd.f32 %v644, %v756
        %758 = vmatmul.f32.gmra.mxu0 %v530
        %v759 = vpop.f32.mrf.mxu0
        %v760 = vadd.f32 %v647, %v759
        %761 = vmatmul.f32.gmra.mxu0 %v533
        %v762 = vpop.f32.mrf.mxu0
        %v763 = vadd.f32 %v650, %v762
        %764 = vmatmul.f32.gmra.mxu0 %v536
        %v765 = vpop.f32.mrf.mxu0
        %v766 = vadd.f32 %v653, %v765
        %767 = vmatmul.f32.gmra.mxu0 %v539
        %v768 = vpop.f32.mrf.mxu0
        %v769 = vadd.f32 %v656, %v768
        %770 = vmatmul.f32.gmra.mxu0 %v542
        %v771 = vpop.f32.mrf.mxu0
        %v772 = vadd.f32 %v659, %v771
        %773 = vmatmul.f32.gmra.mxu0 %v545
        %v774 = vpop.f32.mrf.mxu0
        %v775 = vadd.f32 %v662, %v774
        %776 = vmatmul.f32.gmra.mxu0 %v548
        %v777 = vpop.f32.mrf.mxu0
        %v778 = vadd.f32 %v665, %v777
        %779 = vmatmul.f32.gmra.mxu0 %v551
        %v780 = vpop.f32.mrf.mxu0
        %v781 = vadd.f32 %v668, %v780
        %782 = vmatmul.f32.gmra.mxu0 %v554
        %v783 = vpop.f32.mrf.mxu0
        %v784 = vadd.f32 %v671, %v783
        %785 = vmatmul.f32.gmra.mxu0 %v557
        %v786 = vpop.f32.mrf.mxu0
        %v787 = vadd.f32 %v674, %v786
        %788 = vmatmul.f32.gmra.mxu0 %v560
        %v789 = vpop.f32.mrf.mxu0
        %v790 = vadd.f32 %v677, %v789
        %791 = vmatmul.f32.gmra.mxu0 %v563
        %v792 = vpop.f32.mrf.mxu0
        %v793 = vadd.f32 %v680, %v792
        %794 = vmatmul.f32.gmra.mxu0 %v566
        %v795 = vpop.f32.mrf.mxu0
        %v796 = vadd.f32 %v683, %v795
        %797 = vmatmul.f32.gmra.mxu0 %v569
        %v798 = vpop.f32.mrf.mxu0
        %v799 = vadd.f32 %v686, %v798
        %800 = vmatmul.f32.gmra.mxu0 %v572
        %v801 = vpop.f32.mrf.mxu0
        %v802 = vadd.f32 %v689, %v801
        %803 = vmatmul.f32.gmra.mxu0 %v575
        %v804 = vpop.f32.mrf.mxu0
        %v805 = vadd.f32 %v692, %v804
        %806 = vmatmul.f32.gmra.mxu0 %v578
        %v807 = vpop.f32.mrf.mxu0
        %v808 = vadd.f32 %v695, %v807
        %809 = vmatmul.f32.gmra.mxu0 %v581
        %v810 = vpop.f32.mrf.mxu0
        %v811 = vadd.f32 %v698, %v810
        %812 = vmatmul.f32.gmra.mxu0 %v584
        %v813 = vpop.f32.mrf.mxu0
        %v814 = vadd.f32 %v701, %v813
        %815 = vmatmul.f32.gmra.mxu0 %v587
        %v816 = vpop.f32.mrf.mxu0
        %v817 = vadd.f32 %v704, %v816
        %818 = vmatmul.f32.gmra.mxu0 %v590
        %v819 = vpop.f32.mrf.mxu0
        %v820 = vadd.f32 %v707, %v819
        %821 = vmatmul.f32.gmra.mxu0 %v593
        %v822 = vpop.f32.mrf.mxu0
        %v823 = vadd.f32 %v710, %v822
        %824 = vmatmul.f32.gmra.mxu0 %v596
        %v825 = vpop.f32.mrf.mxu0
        %v826 = vadd.f32 %v713, %v825
        %827 = vmatmul.f32.gmra.mxu0 %v599
        %v828 = vpop.f32.mrf.mxu0
        %v829 = vadd.f32 %v716, %v828
        %830 = vmatmul.f32.gmra.mxu0 %v602
        %v831 = vpop.f32.mrf.mxu0
        %v832 = vadd.f32 %v719, %v831
        %833 = vmatmul.f32.gmra.mxu0 %v605
        %v834 = vpop.f32.mrf.mxu0
        %v835 = vadd.f32 %v722, %v834
        %836 = vmatmul.f32.gmra.mxu0 %v608
        %v837 = vpop.f32.mrf.mxu0
        %v838 = vadd.f32 %v725, %v837
        %839 = vmatmul.f32.gmra.mxu0 %v611
        %v840 = vpop.f32.mrf.mxu0
        %v841 = vadd.f32 %v728, %v840
        %842 = vdwg.mxu0
        %v843 = vmul.f32 %v452, %v452
        %v844 = vmul.f32 %v453, %v453
        %v845 = vmul.f32 %v454, %v454
        %v846 = vmul.f32 %v455, %v455
        %v847 = vmul.f32 %v456, %v456
        %v848 = vmul.f32 %v457, %v457
        %v849 = vmul.f32 %v458, %v458
        %v850 = vmul.f32 %v459, %v459
        %v851 = vmul.f32 %v460, %v460
        %v852 = vmul.f32 %v461, %v461
        %v853 = vmul.f32 %v462, %v462
        %v854 = vmul.f32 %v463, %v463
        %v855 = vmul.f32 %v464, %v464
        %v856 = vmul.f32 %v465, %v465
        %v857 = vmul.f32 %v466, %v466
        %v858 = vmul.f32 %v467, %v467
        %v859 = vmul.f32 %v468, %v468
        %v860 = vmul.f32 %v469, %v469
        %v861 = vmul.f32 %v470, %v470
        %v862 = vmul.f32 %v471, %v471
        %v863 = vmul.f32 %v472, %v472
        %v864 = vmul.f32 %v473, %v473
        %v865 = vmul.f32 %v474, %v474
        %v866 = vmul.f32 %v475, %v475
        %v867 = vmul.f32 %v476, %v476
        %v868 = vmul.f32 %v477, %v477
        %v869 = vmul.f32 %v478, %v478
        %v870 = vmul.f32 %v479, %v479
        %v871 = vmul.f32 %v480, %v480
        %v872 = vmul.f32 %v481, %v481
        %v873 = vmul.f32 %v482, %v482
        %v874 = vmul.f32 %v483, %v483
        %v875 = vmul.f32 %v484, %v484
        %v876 = vmul.f32 %v485, %v485
        %v877 = vmul.f32 %v486, %v486
        %v878 = vmul.f32 %v487, %v487
        %v879 = vmul.f32 %v488, %v488
        %v880 = vmul.f32 %v489, %v489
        %v881 = vmul.f32 %v490, %v490
        %v882 = vmul.f32 %v491, %v491
        %v883 = vmul.f32 %v492, %v492
        %v884 = vmul.f32 %v493, %v493
        %v885 = vmul.f32 %v494, %v494
        %v886 = vmul.f32 %v495, %v495
        %v887 = vmul.f32 %v496, %v496
        %v888 = vmul.f32 %v497, %v497
        %v889 = vmul.f32 %v498, %v498
        %v890 = vmul.f32 %v499, %v499
        %v891 = vmul.f32 %v500, %v500
        %v892 = vmul.f32 %v501, %v501
        %v893 = vmul.f32 %v502, %v502
        %v894 = vmul.f32 %v503, %v503
        %v895 = vmul.f32 %v504, %v504
        %v896 = vmul.f32 %v505, %v505
        %v897 = vmul.f32 %v506, %v506
        %v898 = vmul.f32 %v507, %v507
        %v899 = vmul.f32 %v508, %v508
        %v900 = vmul.f32 %v509, %v509
        %v901 = vmul.f32 %v510, %v510
        %v902 = vmul.f32 %v511, %v511
        %v903 = vmul.f32 %v512, %v512
        %v904 = vmul.f32 %v513, %v513
        %v905 = vmul.f32 %v514, %v514
        %v906 = vmul.f32 %v515, %v515
        %v908 = vsel %vm516, %v844, 0
        %v911 = vsel %vm516, %v846, 0
        %v914 = vsel %vm516, %v848, 0
        %v917 = vsel %vm516, %v850, 0
        %v920 = vsel %vm516, %v852, 0
        %v923 = vsel %vm516, %v854, 0
        %v926 = vsel %vm516, %v856, 0
        %v929 = vsel %vm516, %v858, 0
        %v932 = vsel %vm516, %v860, 0
        %v935 = vsel %vm516, %v862, 0
        %v938 = vsel %vm516, %v864, 0
        %v941 = vsel %vm516, %v866, 0
        %v944 = vsel %vm516, %v868, 0
        %v947 = vsel %vm516, %v870, 0
        %v950 = vsel %vm516, %v872, 0
        %v953 = vsel %vm516, %v874, 0
        %v956 = vsel %vm516, %v876, 0
        %v959 = vsel %vm516, %v878, 0
        %v962 = vsel %vm516, %v880, 0
        %v965 = vsel %vm516, %v882, 0
        %v968 = vsel %vm516, %v884, 0
        %v971 = vsel %vm516, %v886, 0
        %v974 = vsel %vm516, %v888, 0
        %v977 = vsel %vm516, %v890, 0
        %v980 = vsel %vm516, %v892, 0
        %v983 = vsel %vm516, %v894, 0
        %v986 = vsel %vm516, %v896, 0
        %v989 = vsel %vm516, %v898, 0
        %v992 = vsel %vm516, %v900, 0
        %v995 = vsel %vm516, %v902, 0
        %v998 = vsel %vm516, %v904, 0
        %v1001 = vsel %vm516, %v906, 0
        %1003 = vmatpush.msra.mxu0 1.0
        %1004 = vmatpush.msra.mxu0 1.0
        %1005 = vmatpush.msra.mxu0 1.0
        %1006 = vmatpush.msra.mxu0 1.0
        %1007 = vmatpush.msra.mxu0 1.0
        %1008 = vmatpush.msra.mxu0 1.0
        %1009 = vmatpush.msra.mxu0 1.0
        %1010 = vmatpush.msra.mxu0 1.0
        %1011 = vmatpush.msra.mxu0 1.0
        %1012 = vmatpush.msra.mxu0 1.0
        %1013 = vmatpush.msra.mxu0 1.0
        %1014 = vmatpush.msra.mxu0 1.0
        %1015 = vmatpush.msra.mxu0 1.0
        %1016 = vmatpush.msra.mxu0 1.0
        %1017 = vmatpush.msra.mxu0 1.0
        %1018 = vmatpush.msra.mxu0 1.0
        %1019 = vmatmul.f32.gmra.mxu0 %v843
        %v1020 = vpop.f32.mrf.mxu0
        %v1021 = vadd.f32 0.0, %v1020
        %1022 = vmatmul.f32.gmra.mxu0 %v845
        %v1023 = vpop.f32.mrf.mxu0
        %v1024 = vadd.f32 0.0, %v1023
        %1025 = vmatmul.f32.gmra.mxu0 %v847
        %v1026 = vpop.f32.mrf.mxu0
        %v1027 = vadd.f32 0.0, %v1026
        %1028 = vmatmul.f32.gmra.mxu0 %v849
        %v1029 = vpop.f32.mrf.mxu0
        %v1030 = vadd.f32 0.0, %v1029
        %1031 = vmatmul.f32.gmra.mxu0 %v851
        %v1032 = vpop.f32.mrf.mxu0
        %v1033 = vadd.f32 0.0, %v1032
        %1034 = vmatmul.f32.gmra.mxu0 %v853
        %v1035 = vpop.f32.mrf.mxu0
        %v1036 = vadd.f32 0.0, %v1035
        %1037 = vmatmul.f32.gmra.mxu0 %v855
        %v1038 = vpop.f32.mrf.mxu0
        %v1039 = vadd.f32 0.0, %v1038
        %1040 = vmatmul.f32.gmra.mxu0 %v857
        %v1041 = vpop.f32.mrf.mxu0
        %v1042 = vadd.f32 0.0, %v1041
        %1043 = vmatmul.f32.gmra.mxu0 %v859
        %v1044 = vpop.f32.mrf.mxu0
        %v1045 = vadd.f32 0.0, %v1044
        %1046 = vmatmul.f32.gmra.mxu0 %v861
        %v1047 = vpop.f32.mrf.mxu0
        %v1048 = vadd.f32 0.0, %v1047
        %1049 = vmatmul.f32.gmra.mxu0 %v863
        %v1050 = vpop.f32.mrf.mxu0
        %v1051 = vadd.f32 0.0, %v1050
        %1052 = vmatmul.f32.gmra.mxu0 %v865
        %v1053 = vpop.f32.mrf.mxu0
        %v1054 = vadd.f32 0.0, %v1053
        %1055 = vmatmul.f32.gmra.mxu0 %v867
        %v1056 = vpop.f32.mrf.mxu0
        %v1057 = vadd.f32 0.0, %v1056
        %1058 = vmatmul.f32.gmra.mxu0 %v869
        %v1059 = vpop.f32.mrf.mxu0
        %v1060 = vadd.f32 0.0, %v1059
        %1061 = vmatmul.f32.gmra.mxu0 %v871
        %v1062 = vpop.f32.mrf.mxu0
        %v1063 = vadd.f32 0.0, %v1062
        %1064 = vmatmul.f32.gmra.mxu0 %v873
        %v1065 = vpop.f32.mrf.mxu0
        %v1066 = vadd.f32 0.0, %v1065
        %1067 = vmatmul.f32.gmra.mxu0 %v875
        %v1068 = vpop.f32.mrf.mxu0
        %v1069 = vadd.f32 0.0, %v1068
        %1070 = vmatmul.f32.gmra.mxu0 %v877
        %v1071 = vpop.f32.mrf.mxu0
        %v1072 = vadd.f32 0.0, %v1071
        %1073 = vmatmul.f32.gmra.mxu0 %v879
        %v1074 = vpop.f32.mrf.mxu0
        %v1075 = vadd.f32 0.0, %v1074
        %1076 = vmatmul.f32.gmra.mxu0 %v881
        %v1077 = vpop.f32.mrf.mxu0
        %v1078 = vadd.f32 0.0, %v1077
        %1079 = vmatmul.f32.gmra.mxu0 %v883
        %v1080 = vpop.f32.mrf.mxu0
        %v1081 = vadd.f32 0.0, %v1080
        %1082 = vmatmul.f32.gmra.mxu0 %v885
        %v1083 = vpop.f32.mrf.mxu0
        %v1084 = vadd.f32 0.0, %v1083
        %1085 = vmatmul.f32.gmra.mxu0 %v887
        %v1086 = vpop.f32.mrf.mxu0
        %v1087 = vadd.f32 0.0, %v1086
        %1088 = vmatmul.f32.gmra.mxu0 %v889
        %v1089 = vpop.f32.mrf.mxu0
        %v1090 = vadd.f32 0.0, %v1089
        %1091 = vmatmul.f32.gmra.mxu0 %v891
        %v1092 = vpop.f32.mrf.mxu0
        %v1093 = vadd.f32 0.0, %v1092
        %1094 = vmatmul.f32.gmra.mxu0 %v893
        %v1095 = vpop.f32.mrf.mxu0
        %v1096 = vadd.f32 0.0, %v1095
        %1097 = vmatmul.f32.gmra.mxu0 %v895
        %v1098 = vpop.f32.mrf.mxu0
        %v1099 = vadd.f32 0.0, %v1098
        %1100 = vmatmul.f32.gmra.mxu0 %v897
        %v1101 = vpop.f32.mrf.mxu0
        %v1102 = vadd.f32 0.0, %v1101
        %1103 = vmatmul.f32.gmra.mxu0 %v899
        %v1104 = vpop.f32.mrf.mxu0
        %v1105 = vadd.f32 0.0, %v1104
        %1106 = vmatmul.f32.gmra.mxu0 %v901
        %v1107 = vpop.f32.mrf.mxu0
        %v1108 = vadd.f32 0.0, %v1107
        %1109 = vmatmul.f32.gmra.mxu0 %v903
        %v1110 = vpop.f32.mrf.mxu0
        %v1111 = vadd.f32 0.0, %v1110
        %1112 = vmatmul.f32.gmra.mxu0 %v905
        %v1113 = vpop.f32.mrf.mxu0
        %v1114 = vadd.f32 0.0, %v1113
        %1115 = vdwg.mxu0
        %1116 = vmatpush.msra.mxu0 0.0
        %1117 = vmatpush.msra.mxu0 0.0
        %1118 = vmatpush.msra.mxu0 0.0
        %1119 = vmatpush.msra.mxu0 0.0
        %1120 = vmatpush.msra.mxu0 0.0
        %1121 = vmatpush.msra.mxu0 0.0
        %1122 = vmatpush.msra.mxu0 0.0
        %1123 = vmatpush.msra.mxu0 %v615
        %1124 = vmatpush.msra.mxu0 1.0
        %1125 = vmatpush.msra.mxu0 1.0
        %1126 = vmatpush.msra.mxu0 1.0
        %1127 = vmatpush.msra.mxu0 1.0
        %1128 = vmatpush.msra.mxu0 1.0
        %1129 = vmatpush.msra.mxu0 1.0
        %1130 = vmatpush.msra.mxu0 1.0
        %1131 = vmatpush.msra.mxu0 1.0
        %1132 = vmatmul.f32.gmra.mxu0 %v908
        %v1133 = vpop.f32.mrf.mxu0
        %v1134 = vadd.f32 %v1021, %v1133
        %1135 = vmatmul.f32.gmra.mxu0 %v911
        %v1136 = vpop.f32.mrf.mxu0
        %v1137 = vadd.f32 %v1024, %v1136
        %1138 = vmatmul.f32.gmra.mxu0 %v914
        %v1139 = vpop.f32.mrf.mxu0
        %v1140 = vadd.f32 %v1027, %v1139
        %1141 = vmatmul.f32.gmra.mxu0 %v917
        %v1142 = vpop.f32.mrf.mxu0
        %v1143 = vadd.f32 %v1030, %v1142
        %1144 = vmatmul.f32.gmra.mxu0 %v920
        %v1145 = vpop.f32.mrf.mxu0
        %v1146 = vadd.f32 %v1033, %v1145
        %1147 = vmatmul.f32.gmra.mxu0 %v923
        %v1148 = vpop.f32.mrf.mxu0
        %v1149 = vadd.f32 %v1036, %v1148
        %1150 = vmatmul.f32.gmra.mxu0 %v926
        %v1151 = vpop.f32.mrf.mxu0
        %v1152 = vadd.f32 %v1039, %v1151
        %1153 = vmatmul.f32.gmra.mxu0 %v929
        %v1154 = vpop.f32.mrf.mxu0
        %v1155 = vadd.f32 %v1042, %v1154
        %1156 = vmatmul.f32.gmra.mxu0 %v932
        %v1157 = vpop.f32.mrf.mxu0
        %v1158 = vadd.f32 %v1045, %v1157
        %1159 = vmatmul.f32.gmra.mxu0 %v935
        %v1160 = vpop.f32.mrf.mxu0
        %v1161 = vadd.f32 %v1048, %v1160
        %1162 = vmatmul.f32.gmra.mxu0 %v938
        %v1163 = vpop.f32.mrf.mxu0
        %v1164 = vadd.f32 %v1051, %v1163
        %1165 = vmatmul.f32.gmra.mxu0 %v941
        %v1166 = vpop.f32.mrf.mxu0
        %v1167 = vadd.f32 %v1054, %v1166
        %1168 = vmatmul.f32.gmra.mxu0 %v944
        %v1169 = vpop.f32.mrf.mxu0
        %v1170 = vadd.f32 %v1057, %v1169
        %1171 = vmatmul.f32.gmra.mxu0 %v947
        %v1172 = vpop.f32.mrf.mxu0
        %v1173 = vadd.f32 %v1060, %v1172
        %1174 = vmatmul.f32.gmra.mxu0 %v950
        %v1175 = vpop.f32.mrf.mxu0
        %v1176 = vadd.f32 %v1063, %v1175
        %1177 = vmatmul.f32.gmra.mxu0 %v953
        %v1178 = vpop.f32.mrf.mxu0
        %v1179 = vadd.f32 %v1066, %v1178
        %1180 = vmatmul.f32.gmra.mxu0 %v956
        %v1181 = vpop.f32.mrf.mxu0
        %v1182 = vadd.f32 %v1069, %v1181
        %1183 = vmatmul.f32.gmra.mxu0 %v959
        %v1184 = vpop.f32.mrf.mxu0
        %v1185 = vadd.f32 %v1072, %v1184
        %1186 = vmatmul.f32.gmra.mxu0 %v962
        %v1187 = vpop.f32.mrf.mxu0
        %v1188 = vadd.f32 %v1075, %v1187
        %1189 = vmatmul.f32.gmra.mxu0 %v965
        %v1190 = vpop.f32.mrf.mxu0
        %v1191 = vadd.f32 %v1078, %v1190
        %1192 = vmatmul.f32.gmra.mxu0 %v968
        %v1193 = vpop.f32.mrf.mxu0
        %v1194 = vadd.f32 %v1081, %v1193
        %1195 = vmatmul.f32.gmra.mxu0 %v971
        %v1196 = vpop.f32.mrf.mxu0
        %v1197 = vadd.f32 %v1084, %v1196
        %1198 = vmatmul.f32.gmra.mxu0 %v974
        %v1199 = vpop.f32.mrf.mxu0
        %v1200 = vadd.f32 %v1087, %v1199
        %1201 = vmatmul.f32.gmra.mxu0 %v977
        %v1202 = vpop.f32.mrf.mxu0
        %v1203 = vadd.f32 %v1090, %v1202
        %1204 = vmatmul.f32.gmra.mxu0 %v980
        %v1205 = vpop.f32.mrf.mxu0
        %v1206 = vadd.f32 %v1093, %v1205
        %1207 = vmatmul.f32.gmra.mxu0 %v983
        %v1208 = vpop.f32.mrf.mxu0
        %v1209 = vadd.f32 %v1096, %v1208
        %1210 = vmatmul.f32.gmra.mxu0 %v986
        %v1211 = vpop.f32.mrf.mxu0
        %v1212 = vadd.f32 %v1099, %v1211
        %1213 = vmatmul.f32.gmra.mxu0 %v989
        %v1214 = vpop.f32.mrf.mxu0
        %v1215 = vadd.f32 %v1102, %v1214
        %1216 = vmatmul.f32.gmra.mxu0 %v992
        %v1217 = vpop.f32.mrf.mxu0
        %v1218 = vadd.f32 %v1105, %v1217
        %1219 = vmatmul.f32.gmra.mxu0 %v995
        %v1220 = vpop.f32.mrf.mxu0
        %v1221 = vadd.f32 %v1108, %v1220
        %1222 = vmatmul.f32.gmra.mxu0 %v998
        %v1223 = vpop.f32.mrf.mxu0
        %v1224 = vadd.f32 %v1111, %v1223
        %1225 = vmatmul.f32.gmra.mxu0 %v1001
        %v1226 = vpop.f32.mrf.mxu0
        %v1227 = vadd.f32 %v1114, %v1226
        %1228 = vdwg.mxu0
        %v1229 = vmul.f32 %v748, 0.0051020407
        %v1230 = vmul.f32 %v751, 0.0051020407
        %v1231 = vmul.f32 %v754, 0.0051020407
        %v1232 = vmul.f32 %v757, 0.0051020407
        %v1233 = vmul.f32 %v760, 0.0051020407
        %v1234 = vmul.f32 %v763, 0.0051020407
        %v1235 = vmul.f32 %v766, 0.0051020407
        %v1236 = vmul.f32 %v769, 0.0051020407
        %v1237 = vmul.f32 %v772, 0.0051020407
        %v1238 = vmul.f32 %v775, 0.0051020407
        %v1239 = vmul.f32 %v778, 0.0051020407
        %v1240 = vmul.f32 %v781, 0.0051020407
        %v1241 = vmul.f32 %v784, 0.0051020407
        %v1242 = vmul.f32 %v787, 0.0051020407
        %v1243 = vmul.f32 %v790, 0.0051020407
        %v1244 = vmul.f32 %v793, 0.0051020407
        %v1245 = vmul.f32 %v796, 0.0051020407
        %v1246 = vmul.f32 %v799, 0.0051020407
        %v1247 = vmul.f32 %v802, 0.0051020407
        %v1248 = vmul.f32 %v805, 0.0051020407
        %v1249 = vmul.f32 %v808, 0.0051020407
        %v1250 = vmul.f32 %v811, 0.0051020407
        %v1251 = vmul.f32 %v814, 0.0051020407
        %v1252 = vmul.f32 %v817, 0.0051020407
        %v1253 = vmul.f32 %v820, 0.0051020407
        %v1254 = vmul.f32 %v823, 0.0051020407
        %v1255 = vmul.f32 %v826, 0.0051020407
        %v1256 = vmul.f32 %v829, 0.0051020407
        %v1257 = vmul.f32 %v832, 0.0051020407
        %v1258 = vmul.f32 %v835, 0.0051020407
        %v1259 = vmul.f32 %v838, 0.0051020407
        %v1260 = vmul.f32 %v841, 0.0051020407
        %v1261 = vmul.f32 %v1134, 0.0051020407
        %v1262 = vmul.f32 %v1137, 0.0051020407
        %v1263 = vmul.f32 %v1140, 0.0051020407
        %v1264 = vmul.f32 %v1143, 0.0051020407
        %v1265 = vmul.f32 %v1146, 0.0051020407
        %v1266 = vmul.f32 %v1149, 0.0051020407
        %v1267 = vmul.f32 %v1152, 0.0051020407
        %v1268 = vmul.f32 %v1155, 0.0051020407
        %v1269 = vmul.f32 %v1158, 0.0051020407
        %v1270 = vmul.f32 %v1161, 0.0051020407
        %v1271 = vmul.f32 %v1164, 0.0051020407
        %v1272 = vmul.f32 %v1167, 0.0051020407
        %v1273 = vmul.f32 %v1170, 0.0051020407
        %v1274 = vmul.f32 %v1173, 0.0051020407
        %v1275 = vmul.f32 %v1176, 0.0051020407
        %v1276 = vmul.f32 %v1179, 0.0051020407
        %v1277 = vmul.f32 %v1182, 0.0051020407
        %v1278 = vmul.f32 %v1185, 0.0051020407
        %v1279 = vmul.f32 %v1188, 0.0051020407
        %v1280 = vmul.f32 %v1191, 0.0051020407
        %v1281 = vmul.f32 %v1194, 0.0051020407
        %v1282 = vmul.f32 %v1197, 0.0051020407
        %v1283 = vmul.f32 %v1200, 0.0051020407
        %v1284 = vmul.f32 %v1203, 0.0051020407
        %v1285 = vmul.f32 %v1206, 0.0051020407
        %v1286 = vmul.f32 %v1209, 0.0051020407
        %v1287 = vmul.f32 %v1212, 0.0051020407
        %v1288 = vmul.f32 %v1215, 0.0051020407
        %v1289 = vmul.f32 %v1218, 0.0051020407
        %v1290 = vmul.f32 %v1221, 0.0051020407
        %v1291 = vmul.f32 %v1224, 0.0051020407
        %v1292 = vmul.f32 %v1227, 0.0051020407
        %v1293 = vmul.f32 %v1229, %v1229
        %v1294 = vmul.f32 %v1230, %v1230
        %v1295 = vmul.f32 %v1231, %v1231
        %v1296 = vmul.f32 %v1232, %v1232
        %v1297 = vmul.f32 %v1233, %v1233
        %v1298 = vmul.f32 %v1234, %v1234
        %v1299 = vmul.f32 %v1235, %v1235
        %v1300 = vmul.f32 %v1236, %v1236
        %v1301 = vmul.f32 %v1237, %v1237
        %v1302 = vmul.f32 %v1238, %v1238
        %v1303 = vmul.f32 %v1239, %v1239
        %v1304 = vmul.f32 %v1240, %v1240
        %v1305 = vmul.f32 %v1241, %v1241
        %v1306 = vmul.f32 %v1242, %v1242
        %v1307 = vmul.f32 %v1243, %v1243
        %v1308 = vmul.f32 %v1244, %v1244
        %v1309 = vmul.f32 %v1245, %v1245
        %v1310 = vmul.f32 %v1246, %v1246
        %v1311 = vmul.f32 %v1247, %v1247
        %v1312 = vmul.f32 %v1248, %v1248
        %v1313 = vmul.f32 %v1249, %v1249
        %v1314 = vmul.f32 %v1250, %v1250
        %v1315 = vmul.f32 %v1251, %v1251
        %v1316 = vmul.f32 %v1252, %v1252
        %v1317 = vmul.f32 %v1253, %v1253
        %v1318 = vmul.f32 %v1254, %v1254
        %v1319 = vmul.f32 %v1255, %v1255
        %v1320 = vmul.f32 %v1256, %v1256
        %v1321 = vmul.f32 %v1257, %v1257
        %v1322 = vmul.f32 %v1258, %v1258
        %v1323 = vmul.f32 %v1259, %v1259
        %v1324 = vmul.f32 %v1260, %v1260
        %v1325 = vsub.f32 %v1261, %v1293
        %v1326 = vsub.f32 %v1262, %v1294
        %v1327 = vsub.f32 %v1263, %v1295
        %v1328 = vsub.f32 %v1264, %v1296
        %v1329 = vsub.f32 %v1265, %v1297
        %v1330 = vsub.f32 %v1266, %v1298
        %v1331 = vsub.f32 %v1267, %v1299
        %v1332 = vsub.f32 %v1268, %v1300
        %v1333 = vsub.f32 %v1269, %v1301
        %v1334 = vsub.f32 %v1270, %v1302
        %v1335 = vsub.f32 %v1271, %v1303
        %v1336 = vsub.f32 %v1272, %v1304
        %v1337 = vsub.f32 %v1273, %v1305
        %v1338 = vsub.f32 %v1274, %v1306
        %v1339 = vsub.f32 %v1275, %v1307
        %v1340 = vsub.f32 %v1276, %v1308
        %v1341 = vsub.f32 %v1277, %v1309
        %v1342 = vsub.f32 %v1278, %v1310
        %v1343 = vsub.f32 %v1279, %v1311
        %v1344 = vsub.f32 %v1280, %v1312
        %v1345 = vsub.f32 %v1281, %v1313
        %v1346 = vsub.f32 %v1282, %v1314
        %v1347 = vsub.f32 %v1283, %v1315
        %v1348 = vsub.f32 %v1284, %v1316
        %v1349 = vsub.f32 %v1285, %v1317
        %v1350 = vsub.f32 %v1286, %v1318
        %v1351 = vsub.f32 %v1287, %v1319
        %v1352 = vsub.f32 %v1288, %v1320
        %v1353 = vsub.f32 %v1289, %v1321
        %v1354 = vsub.f32 %v1290, %v1322
        %v1355 = vsub.f32 %v1291, %v1323
        %v1356 = vsub.f32 %v1292, %v1324
        %v1357 = vadd.f32 %v1325, 1e-05
        %v1358 = vadd.f32 %v1326, 1e-05
        %v1359 = vadd.f32 %v1327, 1e-05
        %v1360 = vadd.f32 %v1328, 1e-05
        %v1361 = vadd.f32 %v1329, 1e-05
        %v1362 = vadd.f32 %v1330, 1e-05
        %v1363 = vadd.f32 %v1331, 1e-05
        %v1364 = vadd.f32 %v1332, 1e-05
        %v1365 = vadd.f32 %v1333, 1e-05
        %v1366 = vadd.f32 %v1334, 1e-05
        %v1367 = vadd.f32 %v1335, 1e-05
        %v1368 = vadd.f32 %v1336, 1e-05
        %v1369 = vadd.f32 %v1337, 1e-05
        %v1370 = vadd.f32 %v1338, 1e-05
        %v1371 = vadd.f32 %v1339, 1e-05
        %v1372 = vadd.f32 %v1340, 1e-05
        %v1373 = vadd.f32 %v1341, 1e-05
        %v1374 = vadd.f32 %v1342, 1e-05
        %v1375 = vadd.f32 %v1343, 1e-05
        %v1376 = vadd.f32 %v1344, 1e-05
        %v1377 = vadd.f32 %v1345, 1e-05
        %v1378 = vadd.f32 %v1346, 1e-05
        %v1379 = vadd.f32 %v1347, 1e-05
        %v1380 = vadd.f32 %v1348, 1e-05
        %v1381 = vadd.f32 %v1349, 1e-05
        %v1382 = vadd.f32 %v1350, 1e-05
        %v1383 = vadd.f32 %v1351, 1e-05
        %v1384 = vadd.f32 %v1352, 1e-05
        %v1385 = vadd.f32 %v1353, 1e-05
        %v1386 = vadd.f32 %v1354, 1e-05
        %v1387 = vadd.f32 %v1355, 1e-05
        %v1388 = vadd.f32 %v1356, 1e-05
        %v1389 = vrsqrt.pop %v1357
        %v1390 = vmul.f32 %v1389, %v1357
        %v1391 = vmul.f32 %v1390, %v1389
        %v1392 = vmul.f32 0.5, %v1391
        %v1393 = vsub.f32 1.5, %v1392
        %v1394 = vmul.f32 %v1389, %v1393
        %vm1395 = vweird.f32 %v1357
        %vm1396 = vweird.f32 %v1389
        %vm1397 = vmor %vm1395, %vm1396
        %v1398 = vsel %vm1397, %v1389, %v1394
        %v1399 = vrsqrt.pop %v1358
        %v1400 = vmul.f32 %v1399, %v1358
        %v1401 = vmul.f32 %v1400, %v1399
        %v1402 = vmul.f32 0.5, %v1401
        %v1403 = vsub.f32 1.5, %v1402
        %v1404 = vmul.f32 %v1399, %v1403
        %vm1405 = vweird.f32 %v1358
        %vm1406 = vweird.f32 %v1399
        %vm1407 = vmor %vm1405, %vm1406
        %v1408 = vsel %vm1407, %v1399, %v1404
        %v1409 = vrsqrt.pop %v1359
        %v1410 = vmul.f32 %v1409, %v1359
        %v1411 = vmul.f32 %v1410, %v1409
        %v1412 = vmul.f32 0.5, %v1411
        %v1413 = vsub.f32 1.5, %v1412
        %v1414 = vmul.f32 %v1409, %v1413
        %vm1415 = vweird.f32 %v1359
        %vm1416 = vweird.f32 %v1409
        %vm1417 = vmor %vm1415, %vm1416
        %v1418 = vsel %vm1417, %v1409, %v1414
        %v1419 = vrsqrt.pop %v1360
        %v1420 = vmul.f32 %v1419, %v1360
        %v1421 = vmul.f32 %v1420, %v1419
        %v1422 = vmul.f32 0.5, %v1421
        %v1423 = vsub.f32 1.5, %v1422
        %v1424 = vmul.f32 %v1419, %v1423
        %vm1425 = vweird.f32 %v1360
        %vm1426 = vweird.f32 %v1419
        %vm1427 = vmor %vm1425, %vm1426
        %v1428 = vsel %vm1427, %v1419, %v1424
        %v1429 = vrsqrt.pop %v1361
        %v1430 = vmul.f32 %v1429, %v1361
        %v1431 = vmul.f32 %v1430, %v1429
        %v1432 = vmul.f32 0.5, %v1431
        %v1433 = vsub.f32 1.5, %v1432
        %v1434 = vmul.f32 %v1429, %v1433
        %vm1435 = vweird.f32 %v1361
        %vm1436 = vweird.f32 %v1429
        %vm1437 = vmor %vm1435, %vm1436
        %v1438 = vsel %vm1437, %v1429, %v1434
        %v1439 = vrsqrt.pop %v1362
        %v1440 = vmul.f32 %v1439, %v1362
        %v1441 = vmul.f32 %v1440, %v1439
        %v1442 = vmul.f32 0.5, %v1441
        %v1443 = vsub.f32 1.5, %v1442
        %v1444 = vmul.f32 %v1439, %v1443
        %vm1445 = vweird.f32 %v1362
        %vm1446 = vweird.f32 %v1439
        %vm1447 = vmor %vm1445, %vm1446
        %v1448 = vsel %vm1447, %v1439, %v1444
        %v1449 = vrsqrt.pop %v1363
        %v1450 = vmul.f32 %v1449, %v1363
        %v1451 = vmul.f32 %v1450, %v1449
        %v1452 = vmul.f32 0.5, %v1451
        %v1453 = vsub.f32 1.5, %v1452
        %v1454 = vmul.f32 %v1449, %v1453
        %vm1455 = vweird.f32 %v1363
        %vm1456 = vweird.f32 %v1449
        %vm1457 = vmor %vm1455, %vm1456
        %v1458 = vsel %vm1457, %v1449, %v1454
        %v1459 = vrsqrt.pop %v1364
        %v1460 = vmul.f32 %v1459, %v1364
        %v1461 = vmul.f32 %v1460, %v1459
        %v1462 = vmul.f32 0.5, %v1461
        %v1463 = vsub.f32 1.5, %v1462
        %v1464 = vmul.f32 %v1459, %v1463
        %vm1465 = vweird.f32 %v1364
        %vm1466 = vweird.f32 %v1459
        %vm1467 = vmor %vm1465, %vm1466
        %v1468 = vsel %vm1467, %v1459, %v1464
        %v1469 = vrsqrt.pop %v1365
        %v1470 = vmul.f32 %v1469, %v1365
        %v1471 = vmul.f32 %v1470, %v1469
        %v1472 = vmul.f32 0.5, %v1471
        %v1473 = vsub.f32 1.5, %v1472
        %v1474 = vmul.f32 %v1469, %v1473
        %vm1475 = vweird.f32 %v1365
        %vm1476 = vweird.f32 %v1469
        %vm1477 = vmor %vm1475, %vm1476
        %v1478 = vsel %vm1477, %v1469, %v1474
        %v1479 = vrsqrt.pop %v1366
        %v1480 = vmul.f32 %v1479, %v1366
        %v1481 = vmul.f32 %v1480, %v1479
        %v1482 = vmul.f32 0.5, %v1481
        %v1483 = vsub.f32 1.5, %v1482
        %v1484 = vmul.f32 %v1479, %v1483
        %vm1485 = vweird.f32 %v1366
        %vm1486 = vweird.f32 %v1479
        %vm1487 = vmor %vm1485, %vm1486
        %v1488 = vsel %vm1487, %v1479, %v1484
        %v1489 = vrsqrt.pop %v1367
        %v1490 = vmul.f32 %v1489, %v1367
        %v1491 = vmul.f32 %v1490, %v1489
        %v1492 = vmul.f32 0.5, %v1491
        %v1493 = vsub.f32 1.5, %v1492
        %v1494 = vmul.f32 %v1489, %v1493
        %vm1495 = vweird.f32 %v1367
        %vm1496 = vweird.f32 %v1489
        %vm1497 = vmor %vm1495, %vm1496
        %v1498 = vsel %vm1497, %v1489, %v1494
        %v1499 = vrsqrt.pop %v1368
        %v1500 = vmul.f32 %v1499, %v1368
        %v1501 = vmul.f32 %v1500, %v1499
        %v1502 = vmul.f32 0.5, %v1501
        %v1503 = vsub.f32 1.5, %v1502
        %v1504 = vmul.f32 %v1499, %v1503
        %vm1505 = vweird.f32 %v1368
        %vm1506 = vweird.f32 %v1499
        %vm1507 = vmor %vm1505, %vm1506
        %v1508 = vsel %vm1507, %v1499, %v1504
        %v1509 = vrsqrt.pop %v1369
        %v1510 = vmul.f32 %v1509, %v1369
        %v1511 = vmul.f32 %v1510, %v1509
        %v1512 = vmul.f32 0.5, %v1511
        %v1513 = vsub.f32 1.5, %v1512
        %v1514 = vmul.f32 %v1509, %v1513
        %vm1515 = vweird.f32 %v1369
        %vm1516 = vweird.f32 %v1509
        %vm1517 = vmor %vm1515, %vm1516
        %v1518 = vsel %vm1517, %v1509, %v1514
        %v1519 = vrsqrt.pop %v1370
        %v1520 = vmul.f32 %v1519, %v1370
        %v1521 = vmul.f32 %v1520, %v1519
        %v1522 = vmul.f32 0.5, %v1521
        %v1523 = vsub.f32 1.5, %v1522
        %v1524 = vmul.f32 %v1519, %v1523
        %vm1525 = vweird.f32 %v1370
        %vm1526 = vweird.f32 %v1519
        %vm1527 = vmor %vm1525, %vm1526
        %v1528 = vsel %vm1527, %v1519, %v1524
        %v1529 = vrsqrt.pop %v1371
        %v1530 = vmul.f32 %v1529, %v1371
        %v1531 = vmul.f32 %v1530, %v1529
        %v1532 = vmul.f32 0.5, %v1531
        %v1533 = vsub.f32 1.5, %v1532
        %v1534 = vmul.f32 %v1529, %v1533
        %vm1535 = vweird.f32 %v1371
        %vm1536 = vweird.f32 %v1529
        %vm1537 = vmor %vm1535, %vm1536
        %v1538 = vsel %vm1537, %v1529, %v1534
        %v1539 = vrsqrt.pop %v1372
        %v1540 = vmul.f32 %v1539, %v1372
        %v1541 = vmul.f32 %v1540, %v1539
        %v1542 = vmul.f32 0.5, %v1541
        %v1543 = vsub.f32 1.5, %v1542
        %v1544 = vmul.f32 %v1539, %v1543
        %vm1545 = vweird.f32 %v1372
        %vm1546 = vweird.f32 %v1539
        %vm1547 = vmor %vm1545, %vm1546
        %v1548 = vsel %vm1547, %v1539, %v1544
        %v1549 = vrsqrt.pop %v1373
        %v1550 = vmul.f32 %v1549, %v1373
        %v1551 = vmul.f32 %v1550, %v1549
        %v1552 = vmul.f32 0.5, %v1551
        %v1553 = vsub.f32 1.5, %v1552
        %v1554 = vmul.f32 %v1549, %v1553
        %vm1555 = vweird.f32 %v1373
        %vm1556 = vweird.f32 %v1549
        %vm1557 = vmor %vm1555, %vm1556
        %v1558 = vsel %vm1557, %v1549, %v1554
        %v1559 = vrsqrt.pop %v1374
        %v1560 = vmul.f32 %v1559, %v1374
        %v1561 = vmul.f32 %v1560, %v1559
        %v1562 = vmul.f32 0.5, %v1561
        %v1563 = vsub.f32 1.5, %v1562
        %v1564 = vmul.f32 %v1559, %v1563
        %vm1565 = vweird.f32 %v1374
        %vm1566 = vweird.f32 %v1559
        %vm1567 = vmor %vm1565, %vm1566
        %v1568 = vsel %vm1567, %v1559, %v1564
        %v1569 = vrsqrt.pop %v1375
        %v1570 = vmul.f32 %v1569, %v1375
        %v1571 = vmul.f32 %v1570, %v1569
        %v1572 = vmul.f32 0.5, %v1571
        %v1573 = vsub.f32 1.5, %v1572
        %v1574 = vmul.f32 %v1569, %v1573
        %vm1575 = vweird.f32 %v1375
        %vm1576 = vweird.f32 %v1569
        %vm1577 = vmor %vm1575, %vm1576
        %v1578 = vsel %vm1577, %v1569, %v1574
        %v1579 = vrsqrt.pop %v1376
        %v1580 = vmul.f32 %v1579, %v1376
        %v1581 = vmul.f32 %v1580, %v1579
        %v1582 = vmul.f32 0.5, %v1581
        %v1583 = vsub.f32 1.5, %v1582
        %v1584 = vmul.f32 %v1579, %v1583
        %vm1585 = vweird.f32 %v1376
        %vm1586 = vweird.f32 %v1579
        %vm1587 = vmor %vm1585, %vm1586
        %v1588 = vsel %vm1587, %v1579, %v1584
        %v1589 = vrsqrt.pop %v1377
        %v1590 = vmul.f32 %v1589, %v1377
        %v1591 = vmul.f32 %v1590, %v1589
        %v1592 = vmul.f32 0.5, %v1591
        %v1593 = vsub.f32 1.5, %v1592
        %v1594 = vmul.f32 %v1589, %v1593
        %vm1595 = vweird.f32 %v1377
        %vm1596 = vweird.f32 %v1589
        %vm1597 = vmor %vm1595, %vm1596
        %v1598 = vsel %vm1597, %v1589, %v1594
        %v1599 = vrsqrt.pop %v1378
        %v1600 = vmul.f32 %v1599, %v1378
        %v1601 = vmul.f32 %v1600, %v1599
        %v1602 = vmul.f32 0.5, %v1601
        %v1603 = vsub.f32 1.5, %v1602
        %v1604 = vmul.f32 %v1599, %v1603
        %vm1605 = vweird.f32 %v1378
        %vm1606 = vweird.f32 %v1599
        %vm1607 = vmor %vm1605, %vm1606
        %v1608 = vsel %vm1607, %v1599, %v1604
        %v1609 = vrsqrt.pop %v1379
        %v1610 = vmul.f32 %v1609, %v1379
        %v1611 = vmul.f32 %v1610, %v1609
        %v1612 = vmul.f32 0.5, %v1611
        %v1613 = vsub.f32 1.5, %v1612
        %v1614 = vmul.f32 %v1609, %v1613
        %vm1615 = vweird.f32 %v1379
        %vm1616 = vweird.f32 %v1609
        %vm1617 = vmor %vm1615, %vm1616
        %v1618 = vsel %vm1617, %v1609, %v1614
        %v1619 = vrsqrt.pop %v1380
        %v1620 = vmul.f32 %v1619, %v1380
        %v1621 = vmul.f32 %v1620, %v1619
        %v1622 = vmul.f32 0.5, %v1621
        %v1623 = vsub.f32 1.5, %v1622
        %v1624 = vmul.f32 %v1619, %v1623
        %vm1625 = vweird.f32 %v1380
        %vm1626 = vweird.f32 %v1619
        %vm1627 = vmor %vm1625, %vm1626
        %v1628 = vsel %vm1627, %v1619, %v1624
        %v1629 = vrsqrt.pop %v1381
        %v1630 = vmul.f32 %v1629, %v1381
        %v1631 = vmul.f32 %v1630, %v1629
        %v1632 = vmul.f32 0.5, %v1631
        %v1633 = vsub.f32 1.5, %v1632
        %v1634 = vmul.f32 %v1629, %v1633
        %vm1635 = vweird.f32 %v1381
        %vm1636 = vweird.f32 %v1629
        %vm1637 = vmor %vm1635, %vm1636
        %v1638 = vsel %vm1637, %v1629, %v1634
        %v1639 = vrsqrt.pop %v1382
        %v1640 = vmul.f32 %v1639, %v1382
        %v1641 = vmul.f32 %v1640, %v1639
        %v1642 = vmul.f32 0.5, %v1641
        %v1643 = vsub.f32 1.5, %v1642
        %v1644 = vmul.f32 %v1639, %v1643
        %vm1645 = vweird.f32 %v1382
        %vm1646 = vweird.f32 %v1639
        %vm1647 = vmor %vm1645, %vm1646
        %v1648 = vsel %vm1647, %v1639, %v1644
        %v1649 = vrsqrt.pop %v1383
        %v1650 = vmul.f32 %v1649, %v1383
        %v1651 = vmul.f32 %v1650, %v1649
        %v1652 = vmul.f32 0.5, %v1651
        %v1653 = vsub.f32 1.5, %v1652
        %v1654 = vmul.f32 %v1649, %v1653
        %vm1655 = vweird.f32 %v1383
        %vm1656 = vweird.f32 %v1649
        %vm1657 = vmor %vm1655, %vm1656
        %v1658 = vsel %vm1657, %v1649, %v1654
        %v1659 = vrsqrt.pop %v1384
        %v1660 = vmul.f32 %v1659, %v1384
        %v1661 = vmul.f32 %v1660, %v1659
        %v1662 = vmul.f32 0.5, %v1661
        %v1663 = vsub.f32 1.5, %v1662
        %v1664 = vmul.f32 %v1659, %v1663
        %vm1665 = vweird.f32 %v1384
        %vm1666 = vweird.f32 %v1659
        %vm1667 = vmor %vm1665, %vm1666
        %v1668 = vsel %vm1667, %v1659, %v1664
        %v1669 = vrsqrt.pop %v1385
        %v1670 = vmul.f32 %v1669, %v1385
        %v1671 = vmul.f32 %v1670, %v1669
        %v1672 = vmul.f32 0.5, %v1671
        %v1673 = vsub.f32 1.5, %v1672
        %v1674 = vmul.f32 %v1669, %v1673
        %vm1675 = vweird.f32 %v1385
        %vm1676 = vweird.f32 %v1669
        %vm1677 = vmor %vm1675, %vm1676
        %v1678 = vsel %vm1677, %v1669, %v1674
        %v1679 = vrsqrt.pop %v1386
        %v1680 = vmul.f32 %v1679, %v1386
        %v1681 = vmul.f32 %v1680, %v1679
        %v1682 = vmul.f32 0.5, %v1681
        %v1683 = vsub.f32 1.5, %v1682
        %v1684 = vmul.f32 %v1679, %v1683
        %vm1685 = vweird.f32 %v1386
        %vm1686 = vweird.f32 %v1679
        %vm1687 = vmor %vm1685, %vm1686
        %v1688 = vsel %vm1687, %v1679, %v1684
        %v1689 = vrsqrt.pop %v1387
        %v1690 = vmul.f32 %v1689, %v1387
        %v1691 = vmul.f32 %v1690, %v1689
        %v1692 = vmul.f32 0.5, %v1691
        %v1693 = vsub.f32 1.5, %v1692
        %v1694 = vmul.f32 %v1689, %v1693
        %vm1695 = vweird.f32 %v1387
        %vm1696 = vweird.f32 %v1689
        %vm1697 = vmor %vm1695, %vm1696
        %v1698 = vsel %vm1697, %v1689, %v1694
        %v1699 = vrsqrt.pop %v1388
        %v1700 = vmul.f32 %v1699, %v1388
        %v1701 = vmul.f32 %v1700, %v1699
        %v1702 = vmul.f32 0.5, %v1701
        %v1703 = vsub.f32 1.5, %v1702
        %v1704 = vmul.f32 %v1699, %v1703
        %vm1705 = vweird.f32 %v1388
        %vm1706 = vweird.f32 %v1699
        %vm1707 = vmor %vm1705, %vm1706
        %v1708 = vsel %vm1707, %v1699, %v1704
        %v1709 = vld [vmem:[%s441] sm:$0xff]
        %v1710 = vld [vmem:[%s441 + $0x8] sm:$0xff]
        %v1711 = vld [vmem:[%s441 + $0x10] sm:$0xff]
        %v1712 = vld [vmem:[%s441 + $0x18] sm:$0xff]
        %v1713 = vld [vmem:[%s441 + $0x20] sm:$0xff]
        %v1714 = vld [vmem:[%s441 + $0x28] sm:$0xff]
        %v1715 = vld [vmem:[%s441 + $0x30] sm:$0xff]
        %v1716 = vld [vmem:[%s441 + $0x38] sm:$0xff]
        %v1717 = vld [vmem:[%s441 + $0x40] sm:$0xff]
        %v1718 = vld [vmem:[%s441 + $0x48] sm:$0xff]
        %v1719 = vld [vmem:[%s441 + $0x50] sm:$0xff]
        %v1720 = vld [vmem:[%s441 + $0x58] sm:$0xff]
        %v1721 = vld [vmem:[%s441 + $0x60] sm:$0xff]
        %v1722 = vld [vmem:[%s441 + $0x68] sm:$0xff]
        %v1723 = vld [vmem:[%s441 + $0x70] sm:$0xff]
        %v1724 = vld [vmem:[%s441 + $0x78] sm:$0xff]
        %v1725 = vld [vmem:[%s441 + $0x80] sm:$0xff]
        %v1726 = vld [vmem:[%s441 + $0x88] sm:$0xff]
        %v1727 = vld [vmem:[%s441 + $0x90] sm:$0xff]
        %v1728 = vld [vmem:[%s441 + $0x98] sm:$0xff]
        %v1729 = vld [vmem:[%s441 + $0xa0] sm:$0xff]
        %v1730 = vld [vmem:[%s441 + $0xa8] sm:$0xff]
        %v1731 = vld [vmem:[%s441 + $0xb0] sm:$0xff]
        %v1732 = vld [vmem:[%s441 + $0xb8] sm:$0xff]
        %v1733 = vld [vmem:[%s441 + $0xc0] sm:$0xff]
        %v1734 = vld [vmem:[%s441 + $0xc8] sm:$0xff]
        %v1735 = vld [vmem:[%s441 + $0xd0] sm:$0xff]
        %v1736 = vld [vmem:[%s441 + $0xd8] sm:$0xff]
        %v1737 = vld [vmem:[%s441 + $0xe0] sm:$0xff]
        %v1738 = vld [vmem:[%s441 + $0xe8] sm:$0xff]
        %v1739 = vld [vmem:[%s441 + $0xf0] sm:$0xff]
        %v1740 = vld [vmem:[%s441 + $0xf8] sm:$0xff]
        %v1741 = vmul.f32 %v1709, %v1398
        %v1742 = vmul.f32 %v1710, %v1408
        %v1743 = vmul.f32 %v1711, %v1418
        %v1744 = vmul.f32 %v1712, %v1428
        %v1745 = vmul.f32 %v1713, %v1438
        %v1746 = vmul.f32 %v1714, %v1448
        %v1747 = vmul.f32 %v1715, %v1458
        %v1748 = vmul.f32 %v1716, %v1468
        %v1749 = vmul.f32 %v1717, %v1478
        %v1750 = vmul.f32 %v1718, %v1488
        %v1751 = vmul.f32 %v1719, %v1498
        %v1752 = vmul.f32 %v1720, %v1508
        %v1753 = vmul.f32 %v1721, %v1518
        %v1754 = vmul.f32 %v1722, %v1528
        %v1755 = vmul.f32 %v1723, %v1538
        %v1756 = vmul.f32 %v1724, %v1548
        %v1757 = vmul.f32 %v1725, %v1558
        %v1758 = vmul.f32 %v1726, %v1568
        %v1759 = vmul.f32 %v1727, %v1578
        %v1760 = vmul.f32 %v1728, %v1588
        %v1761 = vmul.f32 %v1729, %v1598
        %v1762 = vmul.f32 %v1730, %v1608
        %v1763 = vmul.f32 %v1731, %v1618
        %v1764 = vmul.f32 %v1732, %v1628
        %v1765 = vmul.f32 %v1733, %v1638
        %v1766 = vmul.f32 %v1734, %v1648
        %v1767 = vmul.f32 %v1735, %v1658
        %v1768 = vmul.f32 %v1736, %v1668
        %v1769 = vmul.f32 %v1737, %v1678
        %v1770 = vmul.f32 %v1738, %v1688
        %v1771 = vmul.f32 %v1739, %v1698
        %v1772 = vmul.f32 %v1740, %v1708
        %v1773 = vmul.f32 %v1229, %v1741
        %v1774 = vmul.f32 %v1230, %v1742
        %v1775 = vmul.f32 %v1231, %v1743
        %v1776 = vmul.f32 %v1232, %v1744
        %v1777 = vmul.f32 %v1233, %v1745
        %v1778 = vmul.f32 %v1234, %v1746
        %v1779 = vmul.f32 %v1235, %v1747
        %v1780 = vmul.f32 %v1236, %v1748
        %v1781 = vmul.f32 %v1237, %v1749
        %v1782 = vmul.f32 %v1238, %v1750
        %v1783 = vmul.f32 %v1239, %v1751
        %v1784 = vmul.f32 %v1240, %v1752
        %v1785 = vmul.f32 %v1241, %v1753
        %v1786 = vmul.f32 %v1242, %v1754
        %v1787 = vmul.f32 %v1243, %v1755
        %v1788 = vmul.f32 %v1244, %v1756
        %v1789 = vmul.f32 %v1245, %v1757
        %v1790 = vmul.f32 %v1246, %v1758
        %v1791 = vmul.f32 %v1247, %v1759
        %v1792 = vmul.f32 %v1248, %v1760
        %v1793 = vmul.f32 %v1249, %v1761
        %v1794 = vmul.f32 %v1250, %v1762
        %v1795 = vmul.f32 %v1251, %v1763
        %v1796 = vmul.f32 %v1252, %v1764
        %v1797 = vmul.f32 %v1253, %v1765
        %v1798 = vmul.f32 %v1254, %v1766
        %v1799 = vmul.f32 %v1255, %v1767
        %v1800 = vmul.f32 %v1256, %v1768
        %v1801 = vmul.f32 %v1257, %v1769
        %v1802 = vmul.f32 %v1258, %v1770
        %v1803 = vmul.f32 %v1259, %v1771
        %v1804 = vmul.f32 %v1260, %v1772
        %1837 = vrot.lane.b32.xlu0 %v1773, 1
        %v1838 = vpop.permute.xlu0 %1837
        %1839 = vrot.lane.b32.xlu0 %v1774, 1
        %v1840 = vpop.permute.xlu0 %1839
        %1841 = vrot.lane.b32.xlu0 %v1775, 1
        %v1842 = vpop.permute.xlu0 %1841
        %1843 = vrot.lane.b32.xlu0 %v1776, 1
        %v1844 = vpop.permute.xlu0 %1843
        %1845 = vrot.lane.b32.xlu0 %v1777, 1
        %v1846 = vpop.permute.xlu0 %1845
        %1847 = vrot.lane.b32.xlu0 %v1778, 1
        %v1848 = vpop.permute.xlu0 %1847
        %1849 = vrot.lane.b32.xlu0 %v1779, 1
        %v1850 = vpop.permute.xlu0 %1849
        %1851 = vrot.lane.b32.xlu0 %v1780, 1
        %v1852 = vpop.permute.xlu0 %1851
        %1853 = vrot.lane.b32.xlu0 %v1781, 1
        %v1854 = vpop.permute.xlu0 %1853
        %1855 = vrot.lane.b32.xlu0 %v1782, 1
        %v1856 = vpop.permute.xlu0 %1855
        %1857 = vrot.lane.b32.xlu0 %v1783, 1
        %v1858 = vpop.permute.xlu0 %1857
        %1859 = vrot.lane.b32.xlu0 %v1784, 1
        %v1860 = vpop.permute.xlu0 %1859
        %1861 = vrot.lane.b32.xlu0 %v1785, 1
        %v1862 = vpop.permute.xlu0 %1861
        %1863 = vrot.lane.b32.xlu0 %v1786, 1
        %v1864 = vpop.permute.xlu0 %1863
        %1865 = vrot.lane.b32.xlu0 %v1787, 1
        %v1866 = vpop.permute.xlu0 %1865
        %1867 = vrot.lane.b32.xlu0 %v1788, 1
        %v1868 = vpop.permute.xlu0 %1867
        %1869 = vrot.lane.b32.xlu0 %v1789, 1
        %v1870 = vpop.permute.xlu0 %1869
        %1871 = vrot.lane.b32.xlu0 %v1790, 1
        %v1872 = vpop.permute.xlu0 %1871
        %1873 = vrot.lane.b32.xlu0 %v1791, 1
        %v1874 = vpop.permute.xlu0 %1873
        %1875 = vrot.lane.b32.xlu0 %v1792, 1
        %v1876 = vpop.permute.xlu0 %1875
        %1877 = vrot.lane.b32.xlu0 %v1793, 1
        %v1878 = vpop.permute.xlu0 %1877
        %1879 = vrot.lane.b32.xlu0 %v1794, 1
        %v1880 = vpop.permute.xlu0 %1879
        %1881 = vrot.lane.b32.xlu0 %v1795, 1
        %v1882 = vpop.permute.xlu0 %1881
        %1883 = vrot.lane.b32.xlu0 %v1796, 1
        %v1884 = vpop.permute.xlu0 %1883
        %1885 = vrot.lane.b32.xlu0 %v1797, 1
        %v1886 = vpop.permute.xlu0 %1885
        %1887 = vrot.lane.b32.xlu0 %v1798, 1
        %v1888 = vpop.permute.xlu0 %1887
        %1889 = vrot.lane.b32.xlu0 %v1799, 1
        %v1890 = vpop.permute.xlu0 %1889
        %1891 = vrot.lane.b32.xlu0 %v1800, 1
        %v1892 = vpop.permute.xlu0 %1891
        %1893 = vrot.lane.b32.xlu0 %v1801, 1
        %v1894 = vpop.permute.xlu0 %1893
        %1895 = vrot.lane.b32.xlu0 %v1802, 1
        %v1896 = vpop.permute.xlu0 %1895
        %1897 = vrot.lane.b32.xlu0 %v1803, 1
        %v1898 = vpop.permute.xlu0 %1897
        %1899 = vrot.lane.b32.xlu0 %v1804, 1
        %v1900 = vpop.permute.xlu0 %1899
        %v1933 = vsub.f32 %v1709, %v1838
        %v1934 = vsub.f32 %v1710, %v1840
        %v1935 = vsub.f32 %v1711, %v1842
        %v1936 = vsub.f32 %v1712, %v1844
        %v1937 = vsub.f32 %v1713, %v1846
        %v1938 = vsub.f32 %v1714, %v1848
        %v1939 = vsub.f32 %v1715, %v1850
        %v1940 = vsub.f32 %v1716, %v1852
        %v1941 = vsub.f32 %v1717, %v1854
        %v1942 = vsub.f32 %v1718, %v1856
        %v1943 = vsub.f32 %v1719, %v1858
        %v1944 = vsub.f32 %v1720, %v1860
        %v1945 = vsub.f32 %v1721, %v1862
        %v1946 = vsub.f32 %v1722, %v1864
        %v1947 = vsub.f32 %v1723, %v1866
        %v1948 = vsub.f32 %v1724, %v1868
        %v1949 = vsub.f32 %v1725, %v1870
        %v1950 = vsub.f32 %v1726, %v1872
        %v1951 = vsub.f32 %v1727, %v1874
        %v1952 = vsub.f32 %v1728, %v1876
        %v1953 = vsub.f32 %v1729, %v1878
        %v1954 = vsub.f32 %v1730, %v1880
        %v1955 = vsub.f32 %v1731, %v1882
        %v1956 = vsub.f32 %v1732, %v1884
        %v1957 = vsub.f32 %v1733, %v1886
        %v1958 = vsub.f32 %v1734, %v1888
        %v1959 = vsub.f32 %v1735, %v1890
        %v1960 = vsub.f32 %v1736, %v1892
        %v1961 = vsub.f32 %v1737, %v1894
        %v1962 = vsub.f32 %v1738, %v1896
        %v1963 = vsub.f32 %v1739, %v1898
        %v1964 = vsub.f32 %v1740, %v1900
        %1966 = vset.pattern.permute.xlu0 0
        %1967 = vperm.xlu0 %1966, %v1741
        %v1968 = vpop.permute.xlu0 %1967
        %1971 = vset.pattern.permute.xlu0 0
        %1972 = vperm.xlu0 %1971, %v1742
        %v1973 = vpop.permute.xlu0 %1972
        %1976 = vset.pattern.permute.xlu0 0
        %1977 = vperm.xlu0 %1976, %v1743
        %v1978 = vpop.permute.xlu0 %1977
        %1981 = vset.pattern.permute.xlu0 0
        %1982 = vperm.xlu0 %1981, %v1744
        %v1983 = vpop.permute.xlu0 %1982
        %1986 = vset.pattern.permute.xlu0 0
        %1987 = vperm.xlu0 %1986, %v1745
        %v1988 = vpop.permute.xlu0 %1987
        %1991 = vset.pattern.permute.xlu0 0
        %1992 = vperm.xlu0 %1991, %v1746
        %v1993 = vpop.permute.xlu0 %1992
        %1996 = vset.pattern.permute.xlu0 0
        %1997 = vperm.xlu0 %1996, %v1747
        %v1998 = vpop.permute.xlu0 %1997
        %2001 = vset.pattern.permute.xlu0 0
        %2002 = vperm.xlu0 %2001, %v1748
        %v2003 = vpop.permute.xlu0 %2002
        %2006 = vset.pattern.permute.xlu0 0
        %2007 = vperm.xlu0 %2006, %v1749
        %v2008 = vpop.permute.xlu0 %2007
        %2011 = vset.pattern.permute.xlu0 0
        %2012 = vperm.xlu0 %2011, %v1750
        %v2013 = vpop.permute.xlu0 %2012
        %2016 = vset.pattern.permute.xlu0 0
        %2017 = vperm.xlu0 %2016, %v1751
        %v2018 = vpop.permute.xlu0 %2017
        %2021 = vset.pattern.permute.xlu0 0
        %2022 = vperm.xlu0 %2021, %v1752
        %v2023 = vpop.permute.xlu0 %2022
        %2026 = vset.pattern.permute.xlu0 0
        %2027 = vperm.xlu0 %2026, %v1753
        %v2028 = vpop.permute.xlu0 %2027
        %2031 = vset.pattern.permute.xlu0 0
        %2032 = vperm.xlu0 %2031, %v1754
        %v2033 = vpop.permute.xlu0 %2032
        %2036 = vset.pattern.permute.xlu0 0
        %2037 = vperm.xlu0 %2036, %v1755
        %v2038 = vpop.permute.xlu0 %2037
        %2041 = vset.pattern.permute.xlu0 0
        %2042 = vperm.xlu0 %2041, %v1756
        %v2043 = vpop.permute.xlu0 %2042
        %2046 = vset.pattern.permute.xlu0 0
        %2047 = vperm.xlu0 %2046, %v1757
        %v2048 = vpop.permute.xlu0 %2047
        %2051 = vset.pattern.permute.xlu0 0
        %2052 = vperm.xlu0 %2051, %v1758
        %v2053 = vpop.permute.xlu0 %2052
        %2056 = vset.pattern.permute.xlu0 0
        %2057 = vperm.xlu0 %2056, %v1759
        %v2058 = vpop.permute.xlu0 %2057
        %2061 = vset.pattern.permute.xlu0 0
        %2062 = vperm.xlu0 %2061, %v1760
        %v2063 = vpop.permute.xlu0 %2062
        %2066 = vset.pattern.permute.xlu0 0
        %2067 = vperm.xlu0 %2066, %v1761
        %v2068 = vpop.permute.xlu0 %2067
        %2071 = vset.pattern.permute.xlu0 0
        %2072 = vperm.xlu0 %2071, %v1762
        %v2073 = vpop.permute.xlu0 %2072
        %2076 = vset.pattern.permute.xlu0 0
        %2077 = vperm.xlu0 %2076, %v1763
        %v2078 = vpop.permute.xlu0 %2077
        %2081 = vset.pattern.permute.xlu0 0
        %2082 = vperm.xlu0 %2081, %v1764
        %v2083 = vpop.permute.xlu0 %2082
        %2086 = vset.pattern.permute.xlu0 0
        %2087 = vperm.xlu0 %2086, %v1765
        %v2088 = vpop.permute.xlu0 %2087
        %2091 = vset.pattern.permute.xlu0 0
        %2092 = vperm.xlu0 %2091, %v1766
        %v2093 = vpop.permute.xlu0 %2092
        %2096 = vset.pattern.permute.xlu0 0
        %2097 = vperm.xlu0 %2096, %v1767
        %v2098 = vpop.permute.xlu0 %2097
        %2101 = vset.pattern.permute.xlu0 0
        %2102 = vperm.xlu0 %2101, %v1768
        %v2103 = vpop.permute.xlu0 %2102
        %2106 = vset.pattern.permute.xlu0 0
        %2107 = vperm.xlu0 %2106, %v1769
        %v2108 = vpop.permute.xlu0 %2107
        %2111 = vset.pattern.permute.xlu0 0
        %2112 = vperm.xlu0 %2111, %v1770
        %v2113 = vpop.permute.xlu0 %2112
        %2116 = vset.pattern.permute.xlu0 0
        %2117 = vperm.xlu0 %2116, %v1771
        %v2118 = vpop.permute.xlu0 %2117
        %2121 = vset.pattern.permute.xlu0 0
        %2122 = vperm.xlu0 %2121, %v1772
        %v2123 = vpop.permute.xlu0 %2122
        %v2125 = vmul.f32 %v452, %v1968
        %v2126 = vmul.f32 %v453, %v1968
        %v2127 = vmul.f32 %v454, %v1973
        %v2128 = vmul.f32 %v455, %v1973
        %v2129 = vmul.f32 %v456, %v1978
        %v2130 = vmul.f32 %v457, %v1978
        %v2131 = vmul.f32 %v458, %v1983
        %v2132 = vmul.f32 %v459, %v1983
        %v2133 = vmul.f32 %v460, %v1988
        %v2134 = vmul.f32 %v461, %v1988
        %v2135 = vmul.f32 %v462, %v1993
        %v2136 = vmul.f32 %v463, %v1993
        %v2137 = vmul.f32 %v464, %v1998
        %v2138 = vmul.f32 %v465, %v1998
        %v2139 = vmul.f32 %v466, %v2003
        %v2140 = vmul.f32 %v467, %v2003
        %v2141 = vmul.f32 %v468, %v2008
        %v2142 = vmul.f32 %v469, %v2008
        %v2143 = vmul.f32 %v470, %v2013
        %v2144 = vmul.f32 %v471, %v2013
        %v2145 = vmul.f32 %v472, %v2018
        %v2146 = vmul.f32 %v473, %v2018
        %v2147 = vmul.f32 %v474, %v2023
        %v2148 = vmul.f32 %v475, %v2023
        %v2149 = vmul.f32 %v476, %v2028
        %v2150 = vmul.f32 %v477, %v2028
        %v2151 = vmul.f32 %v478, %v2033
        %v2152 = vmul.f32 %v479, %v2033
        %v2153 = vmul.f32 %v480, %v2038
        %v2154 = vmul.f32 %v481, %v2038
        %v2155 = vmul.f32 %v482, %v2043
        %v2156 = vmul.f32 %v483, %v2043
        %v2157 = vmul.f32 %v484, %v2048
        %v2158 = vmul.f32 %v485, %v2048
        %v2159 = vmul.f32 %v486, %v2053
        %v2160 = vmul.f32 %v487, %v2053
        %v2161 = vmul.f32 %v488, %v2058
        %v2162 = vmul.f32 %v489, %v2058
        %v2163 = vmul.f32 %v490, %v2063
        %v2164 = vmul.f32 %v491, %v2063
        %v2165 = vmul.f32 %v492, %v2068
        %v2166 = vmul.f32 %v493, %v2068
        %v2167 = vmul.f32 %v494, %v2073
        %v2168 = vmul.f32 %v495, %v2073
        %v2169 = vmul.f32 %v496, %v2078
        %v2170 = vmul.f32 %v497, %v2078
        %v2171 = vmul.f32 %v498, %v2083
        %v2172 = vmul.f32 %v499, %v2083
        %v2173 = vmul.f32 %v500, %v2088
        %v2174 = vmul.f32 %v501, %v2088
        %v2175 = vmul.f32 %v502, %v2093
        %v2176 = vmul.f32 %v503, %v2093
        %v2177 = vmul.f32 %v504, %v2098
        %v2178 = vmul.f32 %v505, %v2098
        %v2179 = vmul.f32 %v506, %v2103
        %v2180 = vmul.f32 %v507, %v2103
        %v2181 = vmul.f32 %v508, %v2108
        %v2182 = vmul.f32 %v509, %v2108
        %v2183 = vmul.f32 %v510, %v2113
        %v2184 = vmul.f32 %v511, %v2113
        %v2185 = vmul.f32 %v512, %v2118
        %v2186 = vmul.f32 %v513, %v2118
        %v2187 = vmul.f32 %v514, %v2123
        %v2188 = vmul.f32 %v515, %v2123
        %v2189 = vld [vmem:[%s435] sm:$0xff]
        %v2190 = vld [vmem:[%s435 + $0x8] sm:$0xff]
        %v2191 = vld [vmem:[%s435 + $0x10] sm:$0xff]
        %v2192 = vld [vmem:[%s435 + $0x18] sm:$0xff]
        %v2193 = vld [vmem:[%s435 + $0x20] sm:$0xff]
        %v2194 = vld [vmem:[%s435 + $0x28] sm:$0xff]
        %v2195 = vld [vmem:[%s435 + $0x30] sm:$0xff]
        %v2196 = vld [vmem:[%s435 + $0x38] sm:$0xff]
        %v2197 = vld [vmem:[%s435 + $0x40] sm:$0xff]
        %v2198 = vld [vmem:[%s435 + $0x48] sm:$0xff]
        %v2199 = vld [vmem:[%s435 + $0x50] sm:$0xff]
        %v2200 = vld [vmem:[%s435 + $0x58] sm:$0xff]
        %v2201 = vld [vmem:[%s435 + $0x60] sm:$0xff]
        %v2202 = vld [vmem:[%s435 + $0x68] sm:$0xff]
        %v2203 = vld [vmem:[%s435 + $0x70] sm:$0xff]
        %v2204 = vld [vmem:[%s435 + $0x78] sm:$0xff]
        %v2205 = vld [vmem:[%s435 + $0x80] sm:$0xff]
        %v2206 = vld [vmem:[%s435 + $0x88] sm:$0xff]
        %v2207 = vld [vmem:[%s435 + $0x90] sm:$0xff]
        %v2208 = vld [vmem:[%s435 + $0x98] sm:$0xff]
        %v2209 = vld [vmem:[%s435 + $0xa0] sm:$0xff]
        %v2210 = vld [vmem:[%s435 + $0xa8] sm:$0xff]
        %v2211 = vld [vmem:[%s435 + $0xb0] sm:$0xff]
        %v2212 = vld [vmem:[%s435 + $0xb8] sm:$0xff]
        %v2213 = vld [vmem:[%s435 + $0xc0] sm:$0xff]
        %v2214 = vld [vmem:[%s435 + $0xc8] sm:$0xff]
        %v2215 = vld [vmem:[%s435 + $0xd0] sm:$0xff]
        %v2216 = vld [vmem:[%s435 + $0xd8] sm:$0xff]
        %v2217 = vld [vmem:[%s435 + $0xe0] sm:$0xff]
        %v2218 = vld [vmem:[%s435 + $0xe8] sm:$0xff]
        %v2219 = vld [vmem:[%s435 + $0xf0] sm:$0xff]
        %v2220 = vld [vmem:[%s435 + $0xf8] sm:$0xff]
        %v2221 = vld [vmem:[%s435 + $0x100] sm:$0xff]
        %v2222 = vld [vmem:[%s435 + $0x108] sm:$0xff]
        %v2223 = vld [vmem:[%s435 + $0x110] sm:$0xff]
        %v2224 = vld [vmem:[%s435 + $0x118] sm:$0xff]
        %v2225 = vld [vmem:[%s435 + $0x120] sm:$0xff]
        %v2226 = vld [vmem:[%s435 + $0x128] sm:$0xff]
        %v2227 = vld [vmem:[%s435 + $0x130] sm:$0xff]
        %v2228 = vld [vmem:[%s435 + $0x138] sm:$0xff]
        %v2229 = vld [vmem:[%s435 + $0x140] sm:$0xff]
        %v2230 = vld [vmem:[%s435 + $0x148] sm:$0xff]
        %v2231 = vld [vmem:[%s435 + $0x150] sm:$0xff]
        %v2232 = vld [vmem:[%s435 + $0x158] sm:$0xff]
        %v2233 = vld [vmem:[%s435 + $0x160] sm:$0xff]
        %v2234 = vld [vmem:[%s435 + $0x168] sm:$0xff]
        %v2235 = vld [vmem:[%s435 + $0x170] sm:$0xff]
        %v2236 = vld [vmem:[%s435 + $0x178] sm:$0xff]
        %v2237 = vld [vmem:[%s435 + $0x180] sm:$0xff]
        %v2238 = vld [vmem:[%s435 + $0x188] sm:$0xff]
        %v2239 = vld [vmem:[%s435 + $0x190] sm:$0xff]
        %v2240 = vld [vmem:[%s435 + $0x198] sm:$0xff]
        %v2241 = vld [vmem:[%s435 + $0x1a0] sm:$0xff]
        %v2242 = vld [vmem:[%s435 + $0x1a8] sm:$0xff]
        %v2243 = vld [vmem:[%s435 + $0x1b0] sm:$0xff]
        %v2244 = vld [vmem:[%s435 + $0x1b8] sm:$0xff]
        %v2245 = vld [vmem:[%s435 + $0x1c0] sm:$0xff]
        %v2246 = vld [vmem:[%s435 + $0x1c8] sm:$0xff]
        %v2247 = vld [vmem:[%s435 + $0x1d0] sm:$0xff]
        %v2248 = vld [vmem:[%s435 + $0x1d8] sm:$0xff]
        %v2249 = vld [vmem:[%s435 + $0x1e0] sm:$0xff]
        %v2250 = vld [vmem:[%s435 + $0x1e8] sm:$0xff]
        %v2251 = vld [vmem:[%s435 + $0x1f0] sm:$0xff]
        %v2252 = vld [vmem:[%s435 + $0x1f8] sm:$0xff]
        %2254 = vset.pattern.permute.xlu0 1
        %2255 = vperm.xlu0 %2254, %v1933
        %v2256 = vpop.permute.xlu0 %2255
        %2259 = vset.pattern.permute.xlu0 1
        %2260 = vperm.xlu0 %2259, %v1934
        %v2261 = vpop.permute.xlu0 %2260
        %2264 = vset.pattern.permute.xlu0 1
        %2265 = vperm.xlu0 %2264, %v1935
        %v2266 = vpop.permute.xlu0 %2265
        %2269 = vset.pattern.permute.xlu0 1
        %2270 = vperm.xlu0 %2269, %v1936
        %v2271 = vpop.permute.xlu0 %2270
        %2274 = vset.pattern.permute.xlu0 1
        %2275 = vperm.xlu0 %2274, %v1937
        %v2276 = vpop.permute.xlu0 %2275
        %2279 = vset.pattern.permute.xlu0 1
        %2280 = vperm.xlu0 %2279, %v1938
        %v2281 = vpop.permute.xlu0 %2280
        %2284 = vset.pattern.permute.xlu0 1
        %2285 = vperm.xlu0 %2284, %v1939
        %v2286 = vpop.permute.xlu0 %2285
        %2289 = vset.pattern.permute.xlu0 1
        %2290 = vperm.xlu0 %2289, %v1940
        %v2291 = vpop.permute.xlu0 %2290
        %2294 = vset.pattern.permute.xlu0 1
        %2295 = vperm.xlu0 %2294, %v1941
        %v2296 = vpop.permute.xlu0 %2295
        %2299 = vset.pattern.permute.xlu0 1
        %2300 = vperm.xlu0 %2299, %v1942
        %v2301 = vpop.permute.xlu0 %2300
        %2304 = vset.pattern.permute.xlu0 1
        %2305 = vperm.xlu0 %2304, %v1943
        %v2306 = vpop.permute.xlu0 %2305
        %2309 = vset.pattern.permute.xlu0 1
        %2310 = vperm.xlu0 %2309, %v1944
        %v2311 = vpop.permute.xlu0 %2310
        %2314 = vset.pattern.permute.xlu0 1
        %2315 = vperm.xlu0 %2314, %v1945
        %v2316 = vpop.permute.xlu0 %2315
        %2319 = vset.pattern.permute.xlu0 1
        %2320 = vperm.xlu0 %2319, %v1946
        %v2321 = vpop.permute.xlu0 %2320
        %2324 = vset.pattern.permute.xlu0 1
        %2325 = vperm.xlu0 %2324, %v1947
        %v2326 = vpop.permute.xlu0 %2325
        %2329 = vset.pattern.permute.xlu0 1
        %2330 = vperm.xlu0 %2329, %v1948
        %v2331 = vpop.permute.xlu0 %2330
        %2334 = vset.pattern.permute.xlu0 1
        %2335 = vperm.xlu0 %2334, %v1949
        %v2336 = vpop.permute.xlu0 %2335
        %2339 = vset.pattern.permute.xlu0 1
        %2340 = vperm.xlu0 %2339, %v1950
        %v2341 = vpop.permute.xlu0 %2340
        %2344 = vset.pattern.permute.xlu0 1
        %2345 = vperm.xlu0 %2344, %v1951
        %v2346 = vpop.permute.xlu0 %2345
        %2349 = vset.pattern.permute.xlu0 1
        %2350 = vperm.xlu0 %2349, %v1952
        %v2351 = vpop.permute.xlu0 %2350
        %2354 = vset.pattern.permute.xlu0 1
        %2355 = vperm.xlu0 %2354, %v1953
        %v2356 = vpop.permute.xlu0 %2355
        %2359 = vset.pattern.permute.xlu0 1
        %2360 = vperm.xlu0 %2359, %v1954
        %v2361 = vpop.permute.xlu0 %2360
        %2364 = vset.pattern.permute.xlu0 1
        %2365 = vperm.xlu0 %2364, %v1955
        %v2366 = vpop.permute.xlu0 %2365
        %2369 = vset.pattern.permute.xlu0 1
        %2370 = vperm.xlu0 %2369, %v1956
        %v2371 = vpop.permute.xlu0 %2370
        %2374 = vset.pattern.permute.xlu0 1
        %2375 = vperm.xlu0 %2374, %v1957
        %v2376 = vpop.permute.xlu0 %2375
        %2379 = vset.pattern.permute.xlu0 1
        %2380 = vperm.xlu0 %2379, %v1958
        %v2381 = vpop.permute.xlu0 %2380
        %2384 = vset.pattern.permute.xlu0 1
        %2385 = vperm.xlu0 %2384, %v1959
        %v2386 = vpop.permute.xlu0 %2385
        %2389 = vset.pattern.permute.xlu0 1
        %2390 = vperm.xlu0 %2389, %v1960
        %v2391 = vpop.permute.xlu0 %2390
        %2394 = vset.pattern.permute.xlu0 1
        %2395 = vperm.xlu0 %2394, %v1961
        %v2396 = vpop.permute.xlu0 %2395
        %2399 = vset.pattern.permute.xlu0 1
        %2400 = vperm.xlu0 %2399, %v1962
        %v2401 = vpop.permute.xlu0 %2400
        %2404 = vset.pattern.permute.xlu0 1
        %2405 = vperm.xlu0 %2404, %v1963
        %v2406 = vpop.permute.xlu0 %2405
        %2409 = vset.pattern.permute.xlu0 1
        %2410 = vperm.xlu0 %2409, %v1964
        %v2411 = vpop.permute.xlu0 %2410
        %v2413 = vadd.f32 %v2256, %v2189
        %v2414 = vadd.f32 %v2256, %v2190
        %v2415 = vadd.f32 %v2261, %v2191
        %v2416 = vadd.f32 %v2261, %v2192
        %v2417 = vadd.f32 %v2266, %v2193
        %v2418 = vadd.f32 %v2266, %v2194
        %v2419 = vadd.f32 %v2271, %v2195
        %v2420 = vadd.f32 %v2271, %v2196
        %v2421 = vadd.f32 %v2276, %v2197
        %v2422 = vadd.f32 %v2276, %v2198
        %v2423 = vadd.f32 %v2281, %v2199
        %v2424 = vadd.f32 %v2281, %v2200
        %v2425 = vadd.f32 %v2286, %v2201
        %v2426 = vadd.f32 %v2286, %v2202
        %v2427 = vadd.f32 %v2291, %v2203
        %v2428 = vadd.f32 %v2291, %v2204
        %v2429 = vadd.f32 %v2296, %v2205
        %v2430 = vadd.f32 %v2296, %v2206
        %v2431 = vadd.f32 %v2301, %v2207
        %v2432 = vadd.f32 %v2301, %v2208
        %v2433 = vadd.f32 %v2306, %v2209
        %v2434 = vadd.f32 %v2306, %v2210
        %v2435 = vadd.f32 %v2311, %v2211
        %v2436 = vadd.f32 %v2311, %v2212
        %v2437 = vadd.f32 %v2316, %v2213
        %v2438 = vadd.f32 %v2316, %v2214
        %v2439 = vadd.f32 %v2321, %v2215
        %v2440 = vadd.f32 %v2321, %v2216
        %v2441 = vadd.f32 %v2326, %v2217
        %v2442 = vadd.f32 %v2326, %v2218
        %v2443 = vadd.f32 %v2331, %v2219
        %v2444 = vadd.f32 %v2331, %v2220
        %v2445 = vadd.f32 %v2336, %v2221
        %v2446 = vadd.f32 %v2336, %v2222
        %v2447 = vadd.f32 %v2341, %v2223
        %v2448 = vadd.f32 %v2341, %v2224
        %v2449 = vadd.f32 %v2346, %v2225
        %v2450 = vadd.f32 %v2346, %v2226
        %v2451 = vadd.f32 %v2351, %v2227
        %v2452 = vadd.f32 %v2351, %v2228
        %v2453 = vadd.f32 %v2356, %v2229
        %v2454 = vadd.f32 %v2356, %v2230
        %v2455 = vadd.f32 %v2361, %v2231
        %v2456 = vadd.f32 %v2361, %v2232
        %v2457 = vadd.f32 %v2366, %v2233
        %v2458 = vadd.f32 %v2366, %v2234
        %v2459 = vadd.f32 %v2371, %v2235
        %v2460 = vadd.f32 %v2371, %v2236
        %v2461 = vadd.f32 %v2376, %v2237
        %v2462 = vadd.f32 %v2376, %v2238
        %v2463 = vadd.f32 %v2381, %v2239
        %v2464 = vadd.f32 %v2381, %v2240
        %v2465 = vadd.f32 %v2386, %v2241
        %v2466 = vadd.f32 %v2386, %v2242
        %v2467 = vadd.f32 %v2391, %v2243
        %v2468 = vadd.f32 %v2391, %v2244
        %v2469 = vadd.f32 %v2396, %v2245
        %v2470 = vadd.f32 %v2396, %v2246
        %v2471 = vadd.f32 %v2401, %v2247
        %v2472 = vadd.f32 %v2401, %v2248
        %v2473 = vadd.f32 %v2406, %v2249
        %v2474 = vadd.f32 %v2406, %v2250
        %v2475 = vadd.f32 %v2411, %v2251
        %v2476 = vadd.f32 %v2411, %v2252
        %v2477 = vadd.f32 %v2125, %v2413
        %v2478 = vadd.f32 %v2126, %v2414
        %v2479 = vadd.f32 %v2127, %v2415
        %v2480 = vadd.f32 %v2128, %v2416
        %v2481 = vadd.f32 %v2129, %v2417
        %v2482 = vadd.f32 %v2130, %v2418
        %v2483 = vadd.f32 %v2131, %v2419
        %v2484 = vadd.f32 %v2132, %v2420
        %v2485 = vadd.f32 %v2133, %v2421
        %v2486 = vadd.f32 %v2134, %v2422
        %v2487 = vadd.f32 %v2135, %v2423
        %v2488 = vadd.f32 %v2136, %v2424
        %v2489 = vadd.f32 %v2137, %v2425
        %v2490 = vadd.f32 %v2138, %v2426
        %v2491 = vadd.f32 %v2139, %v2427
        %v2492 = vadd.f32 %v2140, %v2428
        %v2493 = vadd.f32 %v2141, %v2429
        %v2494 = vadd.f32 %v2142, %v2430
        %v2495 = vadd.f32 %v2143, %v2431
        %v2496 = vadd.f32 %v2144, %v2432
        %v2497 = vadd.f32 %v2145, %v2433
        %v2498 = vadd.f32 %v2146, %v2434
        %v2499 = vadd.f32 %v2147, %v2435
        %v2500 = vadd.f32 %v2148, %v2436
        %v2501 = vadd.f32 %v2149, %v2437
        %v2502 = vadd.f32 %v2150, %v2438
        %v2503 = vadd.f32 %v2151, %v2439
        %v2504 = vadd.f32 %v2152, %v2440
        %v2505 = vadd.f32 %v2153, %v2441
        %v2506 = vadd.f32 %v2154, %v2442
        %v2507 = vadd.f32 %v2155, %v2443
        %v2508 = vadd.f32 %v2156, %v2444
        %v2509 = vadd.f32 %v2157, %v2445
        %v2510 = vadd.f32 %v2158, %v2446
        %v2511 = vadd.f32 %v2159, %v2447
        %v2512 = vadd.f32 %v2160, %v2448
        %v2513 = vadd.f32 %v2161, %v2449
        %v2514 = vadd.f32 %v2162, %v2450
        %v2515 = vadd.f32 %v2163, %v2451
        %v2516 = vadd.f32 %v2164, %v2452
        %v2517 = vadd.f32 %v2165, %v2453
        %v2518 = vadd.f32 %v2166, %v2454
        %v2519 = vadd.f32 %v2167, %v2455
        %v2520 = vadd.f32 %v2168, %v2456
        %v2521 = vadd.f32 %v2169, %v2457
        %v2522 = vadd.f32 %v2170, %v2458
        %v2523 = vadd.f32 %v2171, %v2459
        %v2524 = vadd.f32 %v2172, %v2460
        %v2525 = vadd.f32 %v2173, %v2461
        %v2526 = vadd.f32 %v2174, %v2462
        %v2527 = vadd.f32 %v2175, %v2463
        %v2528 = vadd.f32 %v2176, %v2464
        %v2529 = vadd.f32 %v2177, %v2465
        %v2530 = vadd.f32 %v2178, %v2466
        %v2531 = vadd.f32 %v2179, %v2467
        %v2532 = vadd.f32 %v2180, %v2468
        %v2533 = vadd.f32 %v2181, %v2469
        %v2534 = vadd.f32 %v2182, %v2470
        %v2535 = vadd.f32 %v2183, %v2471
        %v2536 = vadd.f32 %v2184, %v2472
        %v2537 = vadd.f32 %v2185, %v2473
        %v2538 = vadd.f32 %v2186, %v2474
        %v2539 = vadd.f32 %v2187, %v2475
        %v2540 = vadd.f32 %v2188, %v2476
        %v2541 = vmax.f32 %v2477, 0.0
        %v2542 = vmax.f32 %v2478, 0.0
        %v2543 = vmax.f32 %v2479, 0.0
        %v2544 = vmax.f32 %v2480, 0.0
        %v2545 = vmax.f32 %v2481, 0.0
        %v2546 = vmax.f32 %v2482, 0.0
        %v2547 = vmax.f32 %v2483, 0.0
        %v2548 = vmax.f32 %v2484, 0.0
        %v2549 = vmax.f32 %v2485, 0.0
        %v2550 = vmax.f32 %v2486, 0.0
        %v2551 = vmax.f32 %v2487, 0.0
        %v2552 = vmax.f32 %v2488, 0.0
        %v2553 = vmax.f32 %v2489, 0.0
        %v2554 = vmax.f32 %v2490, 0.0
        %v2555 = vmax.f32 %v2491, 0.0
        %v2556 = vmax.f32 %v2492, 0.0
        %v2557 = vmax.f32 %v2493, 0.0
        %v2558 = vmax.f32 %v2494, 0.0
        %v2559 = vmax.f32 %v2495, 0.0
        %v2560 = vmax.f32 %v2496, 0.0
        %v2561 = vmax.f32 %v2497, 0.0
        %v2562 = vmax.f32 %v2498, 0.0
        %v2563 = vmax.f32 %v2499, 0.0
        %v2564 = vmax.f32 %v2500, 0.0
        %v2565 = vmax.f32 %v2501, 0.0
        %v2566 = vmax.f32 %v2502, 0.0
        %v2567 = vmax.f32 %v2503, 0.0
        %v2568 = vmax.f32 %v2504, 0.0
        %v2569 = vmax.f32 %v2505, 0.0
        %v2570 = vmax.f32 %v2506, 0.0
        %v2571 = vmax.f32 %v2507, 0.0
        %v2572 = vmax.f32 %v2508, 0.0
        %v2573 = vmax.f32 %v2509, 0.0
        %v2574 = vmax.f32 %v2510, 0.0
        %v2575 = vmax.f32 %v2511, 0.0
        %v2576 = vmax.f32 %v2512, 0.0
        %v2577 = vmax.f32 %v2513, 0.0
        %v2578 = vmax.f32 %v2514, 0.0
        %v2579 = vmax.f32 %v2515, 0.0
        %v2580 = vmax.f32 %v2516, 0.0
        %v2581 = vmax.f32 %v2517, 0.0
        %v2582 = vmax.f32 %v2518, 0.0
        %v2583 = vmax.f32 %v2519, 0.0
        %v2584 = vmax.f32 %v2520, 0.0
        %v2585 = vmax.f32 %v2521, 0.0
        %v2586 = vmax.f32 %v2522, 0.0
        %v2587 = vmax.f32 %v2523, 0.0
        %v2588 = vmax.f32 %v2524, 0.0
        %v2589 = vmax.f32 %v2525, 0.0
        %v2590 = vmax.f32 %v2526, 0.0
        %v2591 = vmax.f32 %v2527, 0.0
        %v2592 = vmax.f32 %v2528, 0.0
        %v2593 = vmax.f32 %v2529, 0.0
        %v2594 = vmax.f32 %v2530, 0.0
        %v2595 = vmax.f32 %v2531, 0.0
        %v2596 = vmax.f32 %v2532, 0.0
        %v2597 = vmax.f32 %v2533, 0.0
        %v2598 = vmax.f32 %v2534, 0.0
        %v2599 = vmax.f32 %v2535, 0.0
        %v2600 = vmax.f32 %v2536, 0.0
        %v2601 = vmax.f32 %v2537, 0.0
        %v2602 = vmax.f32 %v2538, 0.0
        %v2603 = vmax.f32 %v2539, 0.0
        %v2604 = vmax.f32 %v2540, 0.0
        %v2605 = vld [vmem:[%s382] sm:$0xff]
        %v2606 = vld [vmem:[%s382 + $0x8] sm:$0xff]
        %v2607 = vld [vmem:[%s382 + $0x10] sm:$0xff]
        %v2608 = vld [vmem:[%s382 + $0x18] sm:$0xff]
        %v2609 = vld [vmem:[%s382 + $0x20] sm:$0xff]
        %v2610 = vld [vmem:[%s382 + $0x28] sm:$0xff]
        %v2611 = vld [vmem:[%s382 + $0x30] sm:$0xff]
        %v2612 = vld [vmem:[%s382 + $0x38] sm:$0xff]
        %v2613 = vld [vmem:[%s382 + $0x40] sm:$0xff]
        %v2614 = vld [vmem:[%s382 + $0x48] sm:$0xff]
        %v2615 = vld [vmem:[%s382 + $0x50] sm:$0xff]
        %v2616 = vld [vmem:[%s382 + $0x58] sm:$0xff]
        %v2617 = vld [vmem:[%s382 + $0x60] sm:$0xff]
        %v2618 = vld [vmem:[%s382 + $0x68] sm:$0xff]
        %v2619 = vld [vmem:[%s382 + $0x70] sm:$0xff]
        %v2620 = vld [vmem:[%s382 + $0x78] sm:$0xff]
        %v2621 = vld [vmem:[%s382 + $0x80] sm:$0xff]
        %v2622 = vld [vmem:[%s382 + $0x88] sm:$0xff]
        %v2623 = vld [vmem:[%s382 + $0x90] sm:$0xff]
        %v2624 = vld [vmem:[%s382 + $0x98] sm:$0xff]
        %v2625 = vld [vmem:[%s382 + $0xa0] sm:$0xff]
        %v2626 = vld [vmem:[%s382 + $0xa8] sm:$0xff]
        %v2627 = vld [vmem:[%s382 + $0xb0] sm:$0xff]
        %v2628 = vld [vmem:[%s382 + $0xb8] sm:$0xff]
        %v2629 = vld [vmem:[%s382 + $0xc0] sm:$0xff]
        %v2630 = vld [vmem:[%s382 + $0xc8] sm:$0xff]
        %v2631 = vld [vmem:[%s382 + $0xd0] sm:$0xff]
        %v2632 = vld [vmem:[%s382 + $0xd8] sm:$0xff]
        %v2633 = vld [vmem:[%s382 + $0xe0] sm:$0xff]
        %v2634 = vld [vmem:[%s382 + $0xe8] sm:$0xff]
        %v2635 = vld [vmem:[%s382 + $0xf0] sm:$0xff]
        %v2636 = vld [vmem:[%s382 + $0xf8] sm:$0xff]
        %v2637 = vpack.c.bf16 %v2543, %v2541
        %v2638 = vpack.c.bf16 %v2544, %v2542
        %v2639 = vpack.c.bf16 %v2547, %v2545
        %v2640 = vpack.c.bf16 %v2548, %v2546
        %v2641 = vpack.c.bf16 %v2551, %v2549
        %v2642 = vpack.c.bf16 %v2552, %v2550
        %v2643 = vpack.c.bf16 %v2555, %v2553
        %v2644 = vpack.c.bf16 %v2556, %v2554
        %v2645 = vpack.c.bf16 %v2559, %v2557
        %v2646 = vpack.c.bf16 %v2560, %v2558
        %v2647 = vpack.c.bf16 %v2563, %v2561
        %v2648 = vpack.c.bf16 %v2564, %v2562
        %v2649 = vpack.c.bf16 %v2567, %v2565
        %v2650 = vpack.c.bf16 %v2568, %v2566
        %v2651 = vpack.c.bf16 %v2571, %v2569
        %v2652 = vpack.c.bf16 %v2572, %v2570
        %v2653 = vpack.c.bf16 %v2575, %v2573
        %v2654 = vpack.c.bf16 %v2576, %v2574
        %v2655 = vpack.c.bf16 %v2579, %v2577
        %v2656 = vpack.c.bf16 %v2580, %v2578
        %v2657 = vpack.c.bf16 %v2583, %v2581
        %v2658 = vpack.c.bf16 %v2584, %v2582
        %v2659 = vpack.c.bf16 %v2587, %v2585
        %v2660 = vpack.c.bf16 %v2588, %v2586
        %v2661 = vpack.c.bf16 %v2591, %v2589
        %v2662 = vpack.c.bf16 %v2592, %v2590
        %v2663 = vpack.c.bf16 %v2595, %v2593
        %v2664 = vpack.c.bf16 %v2596, %v2594
        %v2665 = vpack.c.bf16 %v2599, %v2597
        %v2666 = vpack.c.bf16 %v2600, %v2598
        %v2667 = vpack.c.bf16 %v2603, %v2601
        %v2668 = vpack.c.bf16 %v2604, %v2602
        %v2701 = vunpack.c.l.b16 %v2605
        %v2702 = vunpack.c.h.b16 %v2605
        %v2703 = vunpack.c.l.b16 %v2606
        %v2704 = vunpack.c.h.b16 %v2606
        %v2705 = vunpack.c.l.b16 %v2607
        %v2706 = vunpack.c.h.b16 %v2607
        %v2707 = vunpack.c.l.b16 %v2608
        %v2708 = vunpack.c.h.b16 %v2608
        %v2709 = vunpack.c.l.b16 %v2609
        %v2710 = vunpack.c.h.b16 %v2609
        %v2711 = vunpack.c.l.b16 %v2610
        %v2712 = vunpack.c.h.b16 %v2610
        %v2713 = vunpack.c.l.b16 %v2611
        %v2714 = vunpack.c.h.b16 %v2611
        %v2715 = vunpack.c.l.b16 %v2612
        %v2716 = vunpack.c.h.b16 %v2612
        %v2717 = vunpack.c.l.b16 %v2613
        %v2718 = vunpack.c.h.b16 %v2613
        %v2719 = vunpack.c.l.b16 %v2614
        %v2720 = vunpack.c.h.b16 %v2614
        %v2721 = vunpack.c.l.b16 %v2615
        %v2722 = vunpack.c.h.b16 %v2615
        %v2723 = vunpack.c.l.b16 %v2616
        %v2724 = vunpack.c.h.b16 %v2616
        %v2725 = vunpack.c.l.b16 %v2617
        %v2726 = vunpack.c.h.b16 %v2617
        %v2727 = vunpack.c.l.b16 %v2618
        %v2728 = vunpack.c.h.b16 %v2618
        %v2729 = vunpack.c.l.b16 %v2619
        %v2730 = vunpack.c.h.b16 %v2619
        %v2731 = vunpack.c.l.b16 %v2620
        %v2732 = vunpack.c.h.b16 %v2620
        %v2733 = vunpack.c.l.b16 %v2621
        %v2734 = vunpack.c.h.b16 %v2621
        %v2735 = vunpack.c.l.b16 %v2622
        %v2736 = vunpack.c.h.b16 %v2622
        %v2737 = vunpack.c.l.b16 %v2623
        %v2738 = vunpack.c.h.b16 %v2623
        %v2739 = vunpack.c.l.b16 %v2624
        %v2740 = vunpack.c.h.b16 %v2624
        %v2741 = vunpack.c.l.b16 %v2625
        %v2742 = vunpack.c.h.b16 %v2625
        %v2743 = vunpack.c.l.b16 %v2626
        %v2744 = vunpack.c.h.b16 %v2626
        %v2745 = vunpack.c.l.b16 %v2627
        %v2746 = vunpack.c.h.b16 %v2627
        %v2747 = vunpack.c.l.b16 %v2628
        %v2748 = vunpack.c.h.b16 %v2628
        %v2749 = vunpack.c.l.b16 %v2629
        %v2750 = vunpack.c.h.b16 %v2629
        %v2751 = vunpack.c.l.b16 %v2630
        %v2752 = vunpack.c.h.b16 %v2630
        %v2753 = vunpack.c.l.b16 %v2631
        %v2754 = vunpack.c.h.b16 %v2631
        %v2755 = vunpack.c.l.b16 %v2632
        %v2756 = vunpack.c.h.b16 %v2632
        %v2757 = vunpack.c.l.b16 %v2633
        %v2758 = vunpack.c.h.b16 %v2633
        %v2759 = vunpack.c.l.b16 %v2634
        %v2760 = vunpack.c.h.b16 %v2634
        %v2761 = vunpack.c.l.b16 %v2635
        %v2762 = vunpack.c.h.b16 %v2635
        %v2763 = vunpack.c.l.b16 %v2636
        %v2764 = vunpack.c.h.b16 %v2636
        %v2765 = vpack.c.b16 %v2703, %v2701
        %v2766 = vpack.c.b16 %v2704, %v2702
        %v2767 = vpack.c.b16 %v2707, %v2705
        %v2768 = vpack.c.b16 %v2708, %v2706
        %v2769 = vpack.c.b16 %v2711, %v2709
        %v2770 = vpack.c.b16 %v2712, %v2710
        %v2771 = vpack.c.b16 %v2715, %v2713
        %v2772 = vpack.c.b16 %v2716, %v2714
        %v2773 = vpack.c.b16 %v2719, %v2717
        %v2774 = vpack.c.b16 %v2720, %v2718
        %v2775 = vpack.c.b16 %v2723, %v2721
        %v2776 = vpack.c.b16 %v2724, %v2722
        %v2777 = vpack.c.b16 %v2727, %v2725
        %v2778 = vpack.c.b16 %v2728, %v2726
        %v2779 = vpack.c.b16 %v2731, %v2729
        %v2780 = vpack.c.b16 %v2732, %v2730
        %v2781 = vpack.c.b16 %v2735, %v2733
        %v2782 = vpack.c.b16 %v2736, %v2734
        %v2783 = vpack.c.b16 %v2739, %v2737
        %v2784 = vpack.c.b16 %v2740, %v2738
        %v2785 = vpack.c.b16 %v2743, %v2741
        %v2786 = vpack.c.b16 %v2744, %v2742
        %v2787 = vpack.c.b16 %v2747, %v2745
        %v2788 = vpack.c.b16 %v2748, %v2746
        %v2789 = vpack.c.b16 %v2751, %v2749
        %v2790 = vpack.c.b16 %v2752, %v2750
        %v2791 = vpack.c.b16 %v2755, %v2753
        %v2792 = vpack.c.b16 %v2756, %v2754
        %v2793 = vpack.c.b16 %v2759, %v2757
        %v2794 = vpack.c.b16 %v2760, %v2758
        %v2795 = vpack.c.b16 %v2763, %v2761
        %v2796 = vpack.c.b16 %v2764, %v2762
        %2829 = vmatpush.bf16.msra.mxu0 %v2651
        %2830 = vmatpush.bf16.msra.mxu0 %v2649
        %2831 = vmatpush.bf16.msra.mxu0 %v2647
        %2832 = vmatpush.bf16.msra.mxu0 %v2645
        %2833 = vmatpush.bf16.msra.mxu0 %v2643
        %2834 = vmatpush.bf16.msra.mxu0 %v2641
        %2835 = vmatpush.bf16.msra.mxu0 %v2639
        %2836 = vmatpush.bf16.msra.mxu0 %v2637
        %2837 = vmatmul.bf16.gmra.mxu0 %v2765
        %v2838 = vpop.f32.mrf.mxu0
        %v2839 = vadd.f32 0.0, %v2838
        %v2840 = vpop.f32.mrf.mxu0
        %v2841 = vadd.f32 0.0, %v2840
        %2842 = vmatmul.bf16.gmra.mxu0 %v2767
        %v2843 = vpop.f32.mrf.mxu0
        %v2844 = vadd.f32 0.0, %v2843
        %v2845 = vpop.f32.mrf.mxu0
        %v2846 = vadd.f32 0.0, %v2845
        %2847 = vmatmul.bf16.gmra.mxu0 %v2769
        %v2848 = vpop.f32.mrf.mxu0
        %v2849 = vadd.f32 0.0, %v2848
        %v2850 = vpop.f32.mrf.mxu0
        %v2851 = vadd.f32 0.0, %v2850
        %2852 = vmatmul.bf16.gmra.mxu0 %v2771
        %v2853 = vpop.f32.mrf.mxu0
        %v2854 = vadd.f32 0.0, %v2853
        %v2855 = vpop.f32.mrf.mxu0
        %v2856 = vadd.f32 0.0, %v2855
        %2857 = vmatmul.bf16.gmra.mxu0 %v2773
        %v2858 = vpop.f32.mrf.mxu0
        %v2859 = vadd.f32 0.0, %v2858
        %v2860 = vpop.f32.mrf.mxu0
        %v2861 = vadd.f32 0.0, %v2860
        %2862 = vmatmul.bf16.gmra.mxu0 %v2775
        %v2863 = vpop.f32.mrf.mxu0
        %v2864 = vadd.f32 0.0, %v2863
        %v2865 = vpop.f32.mrf.mxu0
        %v2866 = vadd.f32 0.0, %v2865
        %2867 = vmatmul.bf16.gmra.mxu0 %v2777
        %v2868 = vpop.f32.mrf.mxu0
        %v2869 = vadd.f32 0.0, %v2868
        %v2870 = vpop.f32.mrf.mxu0
        %v2871 = vadd.f32 0.0, %v2870
        %2872 = vmatmul.bf16.gmra.mxu0 %v2779
        %v2873 = vpop.f32.mrf.mxu0
        %v2874 = vadd.f32 0.0, %v2873
        %v2875 = vpop.f32.mrf.mxu0
        %v2876 = vadd.f32 0.0, %v2875
        %2877 = vmatmul.bf16.gmra.mxu0 %v2781
        %v2878 = vpop.f32.mrf.mxu0
        %v2879 = vadd.f32 0.0, %v2878
        %v2880 = vpop.f32.mrf.mxu0
        %v2881 = vadd.f32 0.0, %v2880
        %2882 = vmatmul.bf16.gmra.mxu0 %v2783
        %v2883 = vpop.f32.mrf.mxu0
        %v2884 = vadd.f32 0.0, %v2883
        %v2885 = vpop.f32.mrf.mxu0
        %v2886 = vadd.f32 0.0, %v2885
        %2887 = vmatmul.bf16.gmra.mxu0 %v2785
        %v2888 = vpop.f32.mrf.mxu0
        %v2889 = vadd.f32 0.0, %v2888
        %v2890 = vpop.f32.mrf.mxu0
        %v2891 = vadd.f32 0.0, %v2890
        %2892 = vmatmul.bf16.gmra.mxu0 %v2787
        %v2893 = vpop.f32.mrf.mxu0
        %v2894 = vadd.f32 0.0, %v2893
        %v2895 = vpop.f32.mrf.mxu0
        %v2896 = vadd.f32 0.0, %v2895
        %2897 = vmatmul.bf16.gmra.mxu0 %v2789
        %v2898 = vpop.f32.mrf.mxu0
        %v2899 = vadd.f32 0.0, %v2898
        %v2900 = vpop.f32.mrf.mxu0
        %v2901 = vadd.f32 0.0, %v2900
        %2902 = vmatmul.bf16.gmra.mxu0 %v2791
        %v2903 = vpop.f32.mrf.mxu0
        %v2904 = vadd.f32 0.0, %v2903
        %v2905 = vpop.f32.mrf.mxu0
        %v2906 = vadd.f32 0.0, %v2905
        %2907 = vmatmul.bf16.gmra.mxu0 %v2793
        %v2908 = vpop.f32.mrf.mxu0
        %v2909 = vadd.f32 0.0, %v2908
        %v2910 = vpop.f32.mrf.mxu0
        %v2911 = vadd.f32 0.0, %v2910
        %2912 = vmatmul.bf16.gmra.mxu0 %v2795
        %v2913 = vpop.f32.mrf.mxu0
        %v2914 = vadd.f32 0.0, %v2913
        %v2915 = vpop.f32.mrf.mxu0
        %v2916 = vadd.f32 0.0, %v2915
        %2917 = vdwg.mxu0
        %2918 = vmatpush.bf16.msra.mxu0 %v2667
        %2919 = vmatpush.bf16.msra.mxu0 %v2665
        %2920 = vmatpush.bf16.msra.mxu0 %v2663
        %2921 = vmatpush.bf16.msra.mxu0 %v2661
        %2922 = vmatpush.bf16.msra.mxu0 %v2659
        %2923 = vmatpush.bf16.msra.mxu0 %v2657
        %2924 = vmatpush.bf16.msra.mxu0 %v2655
        %2925 = vmatpush.bf16.msra.mxu0 %v2653
        %2926 = vmatmul.bf16.gmra.mxu0 %v2766
        %v2927 = vpop.f32.mrf.mxu0
        %v2928 = vadd.f32 %v2839, %v2927
        %v2929 = vpop.f32.mrf.mxu0
        %v2930 = vadd.f32 %v2841, %v2929
        %2931 = vmatmul.bf16.gmra.mxu0 %v2768
        %v2932 = vpop.f32.mrf.mxu0
        %v2933 = vadd.f32 %v2844, %v2932
        %v2934 = vpop.f32.mrf.mxu0
        %v2935 = vadd.f32 %v2846, %v2934
        %2936 = vmatmul.bf16.gmra.mxu0 %v2770
        %v2937 = vpop.f32.mrf.mxu0
        %v2938 = vadd.f32 %v2849, %v2937
        %v2939 = vpop.f32.mrf.mxu0
        %v2940 = vadd.f32 %v2851, %v2939
        %2941 = vmatmul.bf16.gmra.mxu0 %v2772
        %v2942 = vpop.f32.mrf.mxu0
        %v2943 = vadd.f32 %v2854, %v2942
        %v2944 = vpop.f32.mrf.mxu0
        %v2945 = vadd.f32 %v2856, %v2944
        %2946 = vmatmul.bf16.gmra.mxu0 %v2774
        %v2947 = vpop.f32.mrf.mxu0
        %v2948 = vadd.f32 %v2859, %v2947
        %v2949 = vpop.f32.mrf.mxu0
        %v2950 = vadd.f32 %v2861, %v2949
        %2951 = vmatmul.bf16.gmra.mxu0 %v2776
        %v2952 = vpop.f32.mrf.mxu0
        %v2953 = vadd.f32 %v2864, %v2952
        %v2954 = vpop.f32.mrf.mxu0
        %v2955 = vadd.f32 %v2866, %v2954
        %2956 = vmatmul.bf16.gmra.mxu0 %v2778
        %v2957 = vpop.f32.mrf.mxu0
        %v2958 = vadd.f32 %v2869, %v2957
        %v2959 = vpop.f32.mrf.mxu0
        %v2960 = vadd.f32 %v2871, %v2959
        %2961 = vmatmul.bf16.gmra.mxu0 %v2780
        %v2962 = vpop.f32.mrf.mxu0
        %v2963 = vadd.f32 %v2874, %v2962
        %v2964 = vpop.f32.mrf.mxu0
        %v2965 = vadd.f32 %v2876, %v2964
        %2966 = vmatmul.bf16.gmra.mxu0 %v2782
        %v2967 = vpop.f32.mrf.mxu0
        %v2968 = vadd.f32 %v2879, %v2967
        %v2969 = vpop.f32.mrf.mxu0
        %v2970 = vadd.f32 %v2881, %v2969
        %2971 = vmatmul.bf16.gmra.mxu0 %v2784
        %v2972 = vpop.f32.mrf.mxu0
        %v2973 = vadd.f32 %v2884, %v2972
        %v2974 = vpop.f32.mrf.mxu0
        %v2975 = vadd.f32 %v2886, %v2974
        %2976 = vmatmul.bf16.gmra.mxu0 %v2786
        %v2977 = vpop.f32.mrf.mxu0
        %v2978 = vadd.f32 %v2889, %v2977
        %v2979 = vpop.f32.mrf.mxu0
        %v2980 = vadd.f32 %v2891, %v2979
        %2981 = vmatmul.bf16.gmra.mxu0 %v2788
        %v2982 = vpop.f32.mrf.mxu0
        %v2983 = vadd.f32 %v2894, %v2982
        %v2984 = vpop.f32.mrf.mxu0
        %v2985 = vadd.f32 %v2896, %v2984
        %2986 = vmatmul.bf16.gmra.mxu0 %v2790
        %v2987 = vpop.f32.mrf.mxu0
        %v2988 = vadd.f32 %v2899, %v2987
        %v2989 = vpop.f32.mrf.mxu0
        %v2990 = vadd.f32 %v2901, %v2989
        %2991 = vmatmul.bf16.gmra.mxu0 %v2792
        %v2992 = vpop.f32.mrf.mxu0
        %v2993 = vadd.f32 %v2904, %v2992
        %v2994 = vpop.f32.mrf.mxu0
        %v2995 = vadd.f32 %v2906, %v2994
        %2996 = vmatmul.bf16.gmra.mxu0 %v2794
        %v2997 = vpop.f32.mrf.mxu0
        %v2998 = vadd.f32 %v2909, %v2997
        %v2999 = vpop.f32.mrf.mxu0
        %v3000 = vadd.f32 %v2911, %v2999
        %3001 = vmatmul.bf16.gmra.mxu0 %v2796
        %v3002 = vpop.f32.mrf.mxu0
        %v3003 = vadd.f32 %v2914, %v3002
        %v3004 = vpop.f32.mrf.mxu0
        %v3005 = vadd.f32 %v2916, %v3004
        %3006 = vdwg.mxu0
        %3007 = vmatpush.bf16.msra.mxu0 %v2652
        %3008 = vmatpush.bf16.msra.mxu0 %v2650
        %3009 = vmatpush.bf16.msra.mxu0 %v2648
        %3010 = vmatpush.bf16.msra.mxu0 %v2646
        %3011 = vmatpush.bf16.msra.mxu0 %v2644
        %3012 = vmatpush.bf16.msra.mxu0 %v2642
        %3013 = vmatpush.bf16.msra.mxu0 %v2640
        %3014 = vmatpush.bf16.msra.mxu0 %v2638
        %3015 = vmatmul.bf16.gmra.mxu0 %v2765
        %v3016 = vpop.f32.mrf.mxu0
        %v3017 = vadd.f32 0.0, %v3016
        %v3018 = vpop.f32.mrf.mxu0
        %v3019 = vadd.f32 0.0, %v3018
        %3020 = vmatmul.bf16.gmra.mxu0 %v2767
        %v3021 = vpop.f32.mrf.mxu0
        %v3022 = vadd.f32 0.0, %v3021
        %v3023 = vpop.f32.mrf.mxu0
        %v3024 = vadd.f32 0.0, %v3023
        %3025 = vmatmul.bf16.gmra.mxu0 %v2769
        %v3026 = vpop.f32.mrf.mxu0
        %v3027 = vadd.f32 0.0, %v3026
        %v3028 = vpop.f32.mrf.mxu0
        %v3029 = vadd.f32 0.0, %v3028
        %3030 = vmatmul.bf16.gmra.mxu0 %v2771
        %v3031 = vpop.f32.mrf.mxu0
        %v3032 = vadd.f32 0.0, %v3031
        %v3033 = vpop.f32.mrf.mxu0
        %v3034 = vadd.f32 0.0, %v3033
        %3035 = vmatmul.bf16.gmra.mxu0 %v2773
        %v3036 = vpop.f32.mrf.mxu0
        %v3037 = vadd.f32 0.0, %v3036
        %v3038 = vpop.f32.mrf.mxu0
        %v3039 = vadd.f32 0.0, %v3038
        %3040 = vmatmul.bf16.gmra.mxu0 %v2775
        %v3041 = vpop.f32.mrf.mxu0
        %v3042 = vadd.f32 0.0, %v3041
        %v3043 = vpop.f32.mrf.mxu0
        %v3044 = vadd.f32 0.0, %v3043
        %3045 = vmatmul.bf16.gmra.mxu0 %v2777
        %v3046 = vpop.f32.mrf.mxu0
        %v3047 = vadd.f32 0.0, %v3046
        %v3048 = vpop.f32.mrf.mxu0
        %v3049 = vadd.f32 0.0, %v3048
        %3050 = vmatmul.bf16.gmra.mxu0 %v2779
        %v3051 = vpop.f32.mrf.mxu0
        %v3052 = vadd.f32 0.0, %v3051
        %v3053 = vpop.f32.mrf.mxu0
        %v3054 = vadd.f32 0.0, %v3053
        %3055 = vmatmul.bf16.gmra.mxu0 %v2781
        %v3056 = vpop.f32.mrf.mxu0
        %v3057 = vadd.f32 0.0, %v3056
        %v3058 = vpop.f32.mrf.mxu0
        %v3059 = vadd.f32 0.0, %v3058
        %3060 = vmatmul.bf16.gmra.mxu0 %v2783
        %v3061 = vpop.f32.mrf.mxu0
        %v3062 = vadd.f32 0.0, %v3061
        %v3063 = vpop.f32.mrf.mxu0
        %v3064 = vadd.f32 0.0, %v3063
        %3065 = vmatmul.bf16.gmra.mxu0 %v2785
        %v3066 = vpop.f32.mrf.mxu0
        %v3067 = vadd.f32 0.0, %v3066
        %v3068 = vpop.f32.mrf.mxu0
        %v3069 = vadd.f32 0.0, %v3068
        %3070 = vmatmul.bf16.gmra.mxu0 %v2787
        %v3071 = vpop.f32.mrf.mxu0
        %v3072 = vadd.f32 0.0, %v3071
        %v3073 = vpop.f32.mrf.mxu0
        %v3074 = vadd.f32 0.0, %v3073
        %3075 = vmatmul.bf16.gmra.mxu0 %v2789
        %v3076 = vpop.f32.mrf.mxu0
        %v3077 = vadd.f32 0.0, %v3076
        %v3078 = vpop.f32.mrf.mxu0
        %v3079 = vadd.f32 0.0, %v3078
        %3080 = vmatmul.bf16.gmra.mxu0 %v2791
        %v3081 = vpop.f32.mrf.mxu0
        %v3082 = vadd.f32 0.0, %v3081
        %v3083 = vpop.f32.mrf.mxu0
        %v3084 = vadd.f32 0.0, %v3083
        %3085 = vmatmul.bf16.gmra.mxu0 %v2793
        %v3086 = vpop.f32.mrf.mxu0
        %v3087 = vadd.f32 0.0, %v3086
        %v3088 = vpop.f32.mrf.mxu0
        %v3089 = vadd.f32 0.0, %v3088
        %3090 = vmatmul.bf16.gmra.mxu0 %v2795
        %v3091 = vpop.f32.mrf.mxu0
        %v3092 = vadd.f32 0.0, %v3091
        %v3093 = vpop.f32.mrf.mxu0
        %v3094 = vadd.f32 0.0, %v3093
        %3095 = vdwg.mxu0
        %3096 = vmatpush.bf16.msra.mxu0 %v2668
        %3097 = vmatpush.bf16.msra.mxu0 %v2666
        %3098 = vmatpush.bf16.msra.mxu0 %v2664
        %3099 = vmatpush.bf16.msra.mxu0 %v2662
        %3100 = vmatpush.bf16.msra.mxu0 %v2660
        %3101 = vmatpush.bf16.msra.mxu0 %v2658
        %3102 = vmatpush.bf16.msra.mxu0 %v2656
        %3103 = vmatpush.bf16.msra.mxu0 %v2654
        %3104 = vmatmul.bf16.gmra.mxu0 %v2766
        %v3105 = vpop.f32.mrf.mxu0
        %v3106 = vadd.f32 %v3017, %v3105
        %v3107 = vpop.f32.mrf.mxu0
        %v3108 = vadd.f32 %v3019, %v3107
        %3109 = vmatmul.bf16.gmra.mxu0 %v2768
        %v3110 = vpop.f32.mrf.mxu0
        %v3111 = vadd.f32 %v3022, %v3110
        %v3112 = vpop.f32.mrf.mxu0
        %v3113 = vadd.f32 %v3024, %v3112
        %3114 = vmatmul.bf16.gmra.mxu0 %v2770
        %v3115 = vpop.f32.mrf.mxu0
        %v3116 = vadd.f32 %v3027, %v3115
        %v3117 = vpop.f32.mrf.mxu0
        %v3118 = vadd.f32 %v3029, %v3117
        %3119 = vmatmul.bf16.gmra.mxu0 %v2772
        %v3120 = vpop.f32.mrf.mxu0
        %v3121 = vadd.f32 %v3032, %v3120
        %v3122 = vpop.f32.mrf.mxu0
        %v3123 = vadd.f32 %v3034, %v3122
        %3124 = vmatmul.bf16.gmra.mxu0 %v2774
        %v3125 = vpop.f32.mrf.mxu0
        %v3126 = vadd.f32 %v3037, %v3125
        %v3127 = vpop.f32.mrf.mxu0
        %v3128 = vadd.f32 %v3039, %v3127
        %3129 = vmatmul.bf16.gmra.mxu0 %v2776
        %v3130 = vpop.f32.mrf.mxu0
        %v3131 = vadd.f32 %v3042, %v3130
        %v3132 = vpop.f32.mrf.mxu0
        %v3133 = vadd.f32 %v3044, %v3132
        %3134 = vmatmul.bf16.gmra.mxu0 %v2778
        %v3135 = vpop.f32.mrf.mxu0
        %v3136 = vadd.f32 %v3047, %v3135
        %v3137 = vpop.f32.mrf.mxu0
        %v3138 = vadd.f32 %v3049, %v3137
        %3139 = vmatmul.bf16.gmra.mxu0 %v2780
        %v3140 = vpop.f32.mrf.mxu0
        %v3141 = vadd.f32 %v3052, %v3140
        %v3142 = vpop.f32.mrf.mxu0
        %v3143 = vadd.f32 %v3054, %v3142
        %3144 = vmatmul.bf16.gmra.mxu0 %v2782
        %v3145 = vpop.f32.mrf.mxu0
        %v3146 = vadd.f32 %v3057, %v3145
        %v3147 = vpop.f32.mrf.mxu0
        %v3148 = vadd.f32 %v3059, %v3147
        %3149 = vmatmul.bf16.gmra.mxu0 %v2784
        %v3150 = vpop.f32.mrf.mxu0
        %v3151 = vadd.f32 %v3062, %v3150
        %v3152 = vpop.f32.mrf.mxu0
        %v3153 = vadd.f32 %v3064, %v3152
        %3154 = vmatmul.bf16.gmra.mxu0 %v2786
        %v3155 = vpop.f32.mrf.mxu0
        %v3156 = vadd.f32 %v3067, %v3155
        %v3157 = vpop.f32.mrf.mxu0
        %v3158 = vadd.f32 %v3069, %v3157
        %3159 = vmatmul.bf16.gmra.mxu0 %v2788
        %v3160 = vpop.f32.mrf.mxu0
        %v3161 = vadd.f32 %v3072, %v3160
        %v3162 = vpop.f32.mrf.mxu0
        %v3163 = vadd.f32 %v3074, %v3162
        %3164 = vmatmul.bf16.gmra.mxu0 %v2790
        %v3165 = vpop.f32.mrf.mxu0
        %v3166 = vadd.f32 %v3077, %v3165
        %v3167 = vpop.f32.mrf.mxu0
        %v3168 = vadd.f32 %v3079, %v3167
        %3169 = vmatmul.bf16.gmra.mxu0 %v2792
        %v3170 = vpop.f32.mrf.mxu0
        %v3171 = vadd.f32 %v3082, %v3170
        %v3172 = vpop.f32.mrf.mxu0
        %v3173 = vadd.f32 %v3084, %v3172
        %3174 = vmatmul.bf16.gmra.mxu0 %v2794
        %v3175 = vpop.f32.mrf.mxu0
        %v3176 = vadd.f32 %v3087, %v3175
        %v3177 = vpop.f32.mrf.mxu0
        %v3178 = vadd.f32 %v3089, %v3177
        %3179 = vmatmul.bf16.gmra.mxu0 %v2796
        %v3180 = vpop.f32.mrf.mxu0
        %v3181 = vadd.f32 %v3092, %v3180
        %v3182 = vpop.f32.mrf.mxu0
        %v3183 = vadd.f32 %v3094, %v3182
        %3184 = vdwg.mxu0
        %p3185 = scmp.eq.s32.totalorder %s20, 0
        // Predicated region
        $region75: #{tpu_custom_call.1} parent=69 // pred_check
          %p3186 = pneg %p3185
        $region76: #{tpu_custom_call.1} parent=69 // pred_check_branch
          %3188 = sbr.rel (%p3186) target = $region78
        $region77: #{tpu_custom_call.1} parent=69 // pred_region
          %3189 = vst [vmem:[%s450] sm:$0xff] %v2928
          %3190 = vst.msk [vmem:[%s450 + $0x8] sm:$0xff] %vm516, %v3106
          %3191 = vst [vmem:[%s450 + $0x10] sm:$0xff] %v2930
          %3192 = vst.msk [vmem:[%s450 + $0x18] sm:$0xff] %vm516, %v3108
          %3193 = vst [vmem:[%s450 + $0x20] sm:$0xff] %v2933
          %3194 = vst.msk [vmem:[%s450 + $0x28] sm:$0xff] %vm516, %v3111
          %3195 = vst [vmem:[%s450 + $0x30] sm:$0xff] %v2935
          %3196 = vst.msk [vmem:[%s450 + $0x38] sm:$0xff] %vm516, %v3113
          %3197 = vst [vmem:[%s450 + $0x40] sm:$0xff] %v2938
          %3198 = vst.msk [vmem:[%s450 + $0x48] sm:$0xff] %vm516, %v3116
          %3199 = vst [vmem:[%s450 + $0x50] sm:$0xff] %v2940
          %3200 = vst.msk [vmem:[%s450 + $0x58] sm:$0xff] %vm516, %v3118
          %3201 = vst [vmem:[%s450 + $0x60] sm:$0xff] %v2943
          %3202 = vst.msk [vmem:[%s450 + $0x68] sm:$0xff] %vm516, %v3121
          %3203 = vst [vmem:[%s450 + $0x70] sm:$0xff] %v2945
          %3204 = vst.msk [vmem:[%s450 + $0x78] sm:$0xff] %vm516, %v3123
          %3205 = vst [vmem:[%s450 + $0x80] sm:$0xff] %v2948
          %3206 = vst.msk [vmem:[%s450 + $0x88] sm:$0xff] %vm516, %v3126
          %3207 = vst [vmem:[%s450 + $0x90] sm:$0xff] %v2950
          %3208 = vst.msk [vmem:[%s450 + $0x98] sm:$0xff] %vm516, %v3128
          %3209 = vst [vmem:[%s450 + $0xa0] sm:$0xff] %v2953
          %3210 = vst.msk [vmem:[%s450 + $0xa8] sm:$0xff] %vm516, %v3131
          %3211 = vst [vmem:[%s450 + $0xb0] sm:$0xff] %v2955
          %3212 = vst.msk [vmem:[%s450 + $0xb8] sm:$0xff] %vm516, %v3133
          %3213 = vst [vmem:[%s450 + $0xc0] sm:$0xff] %v2958
          %3214 = vst.msk [vmem:[%s450 + $0xc8] sm:$0xff] %vm516, %v3136
          %3215 = vst [vmem:[%s450 + $0xd0] sm:$0xff] %v2960
          %3216 = vst.msk [vmem:[%s450 + $0xd8] sm:$0xff] %vm516, %v3138
          %3217 = vst [vmem:[%s450 + $0xe0] sm:$0xff] %v2963
          %3218 = vst.msk [vmem:[%s450 + $0xe8] sm:$0xff] %vm516, %v3141
          %3219 = vst [vmem:[%s450 + $0xf0] sm:$0xff] %v2965
          %3220 = vst.msk [vmem:[%s450 + $0xf8] sm:$0xff] %vm516, %v3143
          %3221 = vst [vmem:[%s450 + $0x100] sm:$0xff] %v2968
          %3222 = vst.msk [vmem:[%s450 + $0x108] sm:$0xff] %vm516, %v3146
          %3223 = vst [vmem:[%s450 + $0x110] sm:$0xff] %v2970
          %3224 = vst.msk [vmem:[%s450 + $0x118] sm:$0xff] %vm516, %v3148
          %3225 = vst [vmem:[%s450 + $0x120] sm:$0xff] %v2973
          %3226 = vst.msk [vmem:[%s450 + $0x128] sm:$0xff] %vm516, %v3151
          %3227 = vst [vmem:[%s450 + $0x130] sm:$0xff] %v2975
          %3228 = vst.msk [vmem:[%s450 + $0x138] sm:$0xff] %vm516, %v3153
          %3229 = vst [vmem:[%s450 + $0x140] sm:$0xff] %v2978
          %3230 = vst.msk [vmem:[%s450 + $0x148] sm:$0xff] %vm516, %v3156
          %3231 = vst [vmem:[%s450 + $0x150] sm:$0xff] %v2980
          %3232 = vst.msk [vmem:[%s450 + $0x158] sm:$0xff] %vm516, %v3158
          %3233 = vst [vmem:[%s450 + $0x160] sm:$0xff] %v2983
          %3234 = vst.msk [vmem:[%s450 + $0x168] sm:$0xff] %vm516, %v3161
          %3235 = vst [vmem:[%s450 + $0x170] sm:$0xff] %v2985
          %3236 = vst.msk [vmem:[%s450 + $0x178] sm:$0xff] %vm516, %v3163
          %3237 = vst [vmem:[%s450 + $0x180] sm:$0xff] %v2988
          %3238 = vst.msk [vmem:[%s450 + $0x188] sm:$0xff] %vm516, %v3166
          %3239 = vst [vmem:[%s450 + $0x190] sm:$0xff] %v2990
          %3240 = vst.msk [vmem:[%s450 + $0x198] sm:$0xff] %vm516, %v3168
          %3241 = vst [vmem:[%s450 + $0x1a0] sm:$0xff] %v2993
          %3242 = vst.msk [vmem:[%s450 + $0x1a8] sm:$0xff] %vm516, %v3171
          %3243 = vst [vmem:[%s450 + $0x1b0] sm:$0xff] %v2995
          %3244 = vst.msk [vmem:[%s450 + $0x1b8] sm:$0xff] %vm516, %v3173
          %3245 = vst [vmem:[%s450 + $0x1c0] sm:$0xff] %v2998
          %3246 = vst.msk [vmem:[%s450 + $0x1c8] sm:$0xff] %vm516, %v3176
          %3247 = vst [vmem:[%s450 + $0x1d0] sm:$0xff] %v3000
          %3248 = vst.msk [vmem:[%s450 + $0x1d8] sm:$0xff] %vm516, %v3178
          %3249 = vst [vmem:[%s450 + $0x1e0] sm:$0xff] %v3003
          %3250 = vst.msk [vmem:[%s450 + $0x1e8] sm:$0xff] %vm516, %v3181
          %3251 = vst [vmem:[%s450 + $0x1f0] sm:$0xff] %v3005
          %3252 = vst.msk [vmem:[%s450 + $0x1f8] sm:$0xff] %vm516, %v3183
        $region78: #{tpu_custom_call.1} parent=69 // pred_fallthru
          _
        %p3253 = scmp.ne.s32.totalorder %s20, 0
        // Predicated region
        $region79: #{tpu_custom_call.1} parent=69 // pred_check
          %p3254 = pneg %p3253
        $region80: #{tpu_custom_call.1} parent=69 // pred_check_branch
          %3256 = sbr.rel (%p3254) target = $region82
        $region81: #{tpu_custom_call.1} parent=69 // pred_region
          %v3257 = vld [vmem:[%s450] sm:$0xff]
          %v3258 = vld [vmem:[%s450 + $0x8] sm:$0xff]
          %v3259 = vld [vmem:[%s450 + $0x10] sm:$0xff]
          %v3260 = vld [vmem:[%s450 + $0x18] sm:$0xff]
          %v3261 = vld [vmem:[%s450 + $0x20] sm:$0xff]
          %v3262 = vld [vmem:[%s450 + $0x28] sm:$0xff]
          %v3263 = vld [vmem:[%s450 + $0x30] sm:$0xff]
          %v3264 = vld [vmem:[%s450 + $0x38] sm:$0xff]
          %v3265 = vld [vmem:[%s450 + $0x40] sm:$0xff]
          %v3266 = vld [vmem:[%s450 + $0x48] sm:$0xff]
          %v3267 = vld [vmem:[%s450 + $0x50] sm:$0xff]
          %v3268 = vld [vmem:[%s450 + $0x58] sm:$0xff]
          %v3269 = vld [vmem:[%s450 + $0x60] sm:$0xff]
          %v3270 = vld [vmem:[%s450 + $0x68] sm:$0xff]
          %v3271 = vld [vmem:[%s450 + $0x70] sm:$0xff]
          %v3272 = vld [vmem:[%s450 + $0x78] sm:$0xff]
          %v3273 = vld [vmem:[%s450 + $0x80] sm:$0xff]
          %v3274 = vld [vmem:[%s450 + $0x88] sm:$0xff]
          %v3275 = vld [vmem:[%s450 + $0x90] sm:$0xff]
          %v3276 = vld [vmem:[%s450 + $0x98] sm:$0xff]
          %v3277 = vld [vmem:[%s450 + $0xa0] sm:$0xff]
          %v3278 = vld [vmem:[%s450 + $0xa8] sm:$0xff]
          %v3279 = vld [vmem:[%s450 + $0xb0] sm:$0xff]
          %v3280 = vld [vmem:[%s450 + $0xb8] sm:$0xff]
          %v3281 = vld [vmem:[%s450 + $0xc0] sm:$0xff]
          %v3282 = vld [vmem:[%s450 + $0xc8] sm:$0xff]
          %v3283 = vld [vmem:[%s450 + $0xd0] sm:$0xff]
          %v3284 = vld [vmem:[%s450 + $0xd8] sm:$0xff]
          %v3285 = vld [vmem:[%s450 + $0xe0] sm:$0xff]
          %v3286 = vld [vmem:[%s450 + $0xe8] sm:$0xff]
          %v3287 = vld [vmem:[%s450 + $0xf0] sm:$0xff]
          %v3288 = vld [vmem:[%s450 + $0xf8] sm:$0xff]
          %v3289 = vld [vmem:[%s450 + $0x100] sm:$0xff]
          %v3290 = vld [vmem:[%s450 + $0x108] sm:$0xff]
          %v3291 = vld [vmem:[%s450 + $0x110] sm:$0xff]
          %v3292 = vld [vmem:[%s450 + $0x118] sm:$0xff]
          %v3293 = vld [vmem:[%s450 + $0x120] sm:$0xff]
          %v3294 = vld [vmem:[%s450 + $0x128] sm:$0xff]
          %v3295 = vld [vmem:[%s450 + $0x130] sm:$0xff]
          %v3296 = vld [vmem:[%s450 + $0x138] sm:$0xff]
          %v3297 = vld [vmem:[%s450 + $0x140] sm:$0xff]
          %v3298 = vld [vmem:[%s450 + $0x148] sm:$0xff]
          %v3299 = vld [vmem:[%s450 + $0x150] sm:$0xff]
          %v3300 = vld [vmem:[%s450 + $0x158] sm:$0xff]
          %v3301 = vld [vmem:[%s450 + $0x160] sm:$0xff]
          %v3302 = vld [vmem:[%s450 + $0x168] sm:$0xff]
          %v3303 = vld [vmem:[%s450 + $0x170] sm:$0xff]
          %v3304 = vld [vmem:[%s450 + $0x178] sm:$0xff]
          %v3305 = vld [vmem:[%s450 + $0x180] sm:$0xff]
          %v3306 = vld [vmem:[%s450 + $0x188] sm:$0xff]
          %v3307 = vld [vmem:[%s450 + $0x190] sm:$0xff]
          %v3308 = vld [vmem:[%s450 + $0x198] sm:$0xff]
          %v3309 = vld [vmem:[%s450 + $0x1a0] sm:$0xff]
          %v3310 = vld [vmem:[%s450 + $0x1a8] sm:$0xff]
          %v3311 = vld [vmem:[%s450 + $0x1b0] sm:$0xff]
          %v3312 = vld [vmem:[%s450 + $0x1b8] sm:$0xff]
          %v3313 = vld [vmem:[%s450 + $0x1c0] sm:$0xff]
          %v3314 = vld [vmem:[%s450 + $0x1c8] sm:$0xff]
          %v3315 = vld [vmem:[%s450 + $0x1d0] sm:$0xff]
          %v3316 = vld [vmem:[%s450 + $0x1d8] sm:$0xff]
          %v3317 = vld [vmem:[%s450 + $0x1e0] sm:$0xff]
          %v3318 = vld [vmem:[%s450 + $0x1e8] sm:$0xff]
          %v3319 = vld [vmem:[%s450 + $0x1f0] sm:$0xff]
          %v3320 = vld [vmem:[%s450 + $0x1f8] sm:$0xff]
          %v3321 = vadd.f32 %v3257, %v2928
          %v3322 = vadd.f32 %v3258, %v3106
          %v3323 = vadd.f32 %v3259, %v2930
          %v3324 = vadd.f32 %v3260, %v3108
          %v3325 = vadd.f32 %v3261, %v2933
          %v3326 = vadd.f32 %v3262, %v3111
          %v3327 = vadd.f32 %v3263, %v2935
          %v3328 = vadd.f32 %v3264, %v3113
          %v3329 = vadd.f32 %v3265, %v2938
          %v3330 = vadd.f32 %v3266, %v3116
          %v3331 = vadd.f32 %v3267, %v2940
          %v3332 = vadd.f32 %v3268, %v3118
          %v3333 = vadd.f32 %v3269, %v2943
          %v3334 = vadd.f32 %v3270, %v3121
          %v3335 = vadd.f32 %v3271, %v2945
          %v3336 = vadd.f32 %v3272, %v3123
          %v3337 = vadd.f32 %v3273, %v2948
          %v3338 = vadd.f32 %v3274, %v3126
          %v3339 = vadd.f32 %v3275, %v2950
          %v3340 = vadd.f32 %v3276, %v3128
          %v3341 = vadd.f32 %v3277, %v2953
          %v3342 = vadd.f32 %v3278, %v3131
          %v3343 = vadd.f32 %v3279, %v2955
          %v3344 = vadd.f32 %v3280, %v3133
          %v3345 = vadd.f32 %v3281, %v2958
          %v3346 = vadd.f32 %v3282, %v3136
          %v3347 = vadd.f32 %v3283, %v2960
          %v3348 = vadd.f32 %v3284, %v3138
          %v3349 = vadd.f32 %v3285, %v2963
          %v3350 = vadd.f32 %v3286, %v3141
          %v3351 = vadd.f32 %v3287, %v2965
          %v3352 = vadd.f32 %v3288, %v3143
          %v3353 = vadd.f32 %v3289, %v2968
          %v3354 = vadd.f32 %v3290, %v3146
          %v3355 = vadd.f32 %v3291, %v2970
          %v3356 = vadd.f32 %v3292, %v3148
          %v3357 = vadd.f32 %v3293, %v2973
          %v3358 = vadd.f32 %v3294, %v3151
          %v3359 = vadd.f32 %v3295, %v2975
          %v3360 = vadd.f32 %v3296, %v3153
          %v3361 = vadd.f32 %v3297, %v2978
          %v3362 = vadd.f32 %v3298, %v3156
          %v3363 = vadd.f32 %v3299, %v2980
          %v3364 = vadd.f32 %v3300, %v3158
          %v3365 = vadd.f32 %v3301, %v2983
          %v3366 = vadd.f32 %v3302, %v3161
          %v3367 = vadd.f32 %v3303, %v2985
          %v3368 = vadd.f32 %v3304, %v3163
          %v3369 = vadd.f32 %v3305, %v2988
          %v3370 = vadd.f32 %v3306, %v3166
          %v3371 = vadd.f32 %v3307, %v2990
          %v3372 = vadd.f32 %v3308, %v3168
          %v3373 = vadd.f32 %v3309, %v2993
          %v3374 = vadd.f32 %v3310, %v3171
          %v3375 = vadd.f32 %v3311, %v2995
          %v3376 = vadd.f32 %v3312, %v3173
          %v3377 = vadd.f32 %v3313, %v2998
          %v3378 = vadd.f32 %v3314, %v3176
          %v3379 = vadd.f32 %v3315, %v3000
          %v3380 = vadd.f32 %v3316, %v3178
          %v3381 = vadd.f32 %v3317, %v3003
          %v3382 = vadd.f32 %v3318, %v3181
          %v3383 = vadd.f32 %v3319, %v3005
          %v3384 = vadd.f32 %v3320, %v3183
          %3385 = vst [vmem:[%s450] sm:$0xff] %v3321
          %3386 = vst.msk [vmem:[%s450 + $0x8] sm:$0xff] %vm516, %v3322
          %3387 = vst [vmem:[%s450 + $0x10] sm:$0xff] %v3323
          %3388 = vst.msk [vmem:[%s450 + $0x18] sm:$0xff] %vm516, %v3324
          %3389 = vst [vmem:[%s450 + $0x20] sm:$0xff] %v3325
          %3390 = vst.msk [vmem:[%s450 + $0x28] sm:$0xff] %vm516, %v3326
          %3391 = vst [vmem:[%s450 + $0x30] sm:$0xff] %v3327
          %3392 = vst.msk [vmem:[%s450 + $0x38] sm:$0xff] %vm516, %v3328
          %3393 = vst [vmem:[%s450 + $0x40] sm:$0xff] %v3329
          %3394 = vst.msk [vmem:[%s450 + $0x48] sm:$0xff] %vm516, %v3330
          %3395 = vst [vmem:[%s450 + $0x50] sm:$0xff] %v3331
          %3396 = vst.msk [vmem:[%s450 + $0x58] sm:$0xff] %vm516, %v3332
          %3397 = vst [vmem:[%s450 + $0x60] sm:$0xff] %v3333
          %3398 = vst.msk [vmem:[%s450 + $0x68] sm:$0xff] %vm516, %v3334
          %3399 = vst [vmem:[%s450 + $0x70] sm:$0xff] %v3335
          %3400 = vst.msk [vmem:[%s450 + $0x78] sm:$0xff] %vm516, %v3336
          %3401 = vst [vmem:[%s450 + $0x80] sm:$0xff] %v3337
          %3402 = vst.msk [vmem:[%s450 + $0x88] sm:$0xff] %vm516, %v3338
          %3403 = vst [vmem:[%s450 + $0x90] sm:$0xff] %v3339
          %3404 = vst.msk [vmem:[%s450 + $0x98] sm:$0xff] %vm516, %v3340
          %3405 = vst [vmem:[%s450 + $0xa0] sm:$0xff] %v3341
          %3406 = vst.msk [vmem:[%s450 + $0xa8] sm:$0xff] %vm516, %v3342
          %3407 = vst [vmem:[%s450 + $0xb0] sm:$0xff] %v3343
          %3408 = vst.msk [vmem:[%s450 + $0xb8] sm:$0xff] %vm516, %v3344
          %3409 = vst [vmem:[%s450 + $0xc0] sm:$0xff] %v3345
          %3410 = vst.msk [vmem:[%s450 + $0xc8] sm:$0xff] %vm516, %v3346
          %3411 = vst [vmem:[%s450 + $0xd0] sm:$0xff] %v3347
          %3412 = vst.msk [vmem:[%s450 + $0xd8] sm:$0xff] %vm516, %v3348
          %3413 = vst [vmem:[%s450 + $0xe0] sm:$0xff] %v3349
          %3414 = vst.msk [vmem:[%s450 + $0xe8] sm:$0xff] %vm516, %v3350
          %3415 = vst [vmem:[%s450 + $0xf0] sm:$0xff] %v3351
          %3416 = vst.msk [vmem:[%s450 + $0xf8] sm:$0xff] %vm516, %v3352
          %3417 = vst [vmem:[%s450 + $0x100] sm:$0xff] %v3353
          %3418 = vst.msk [vmem:[%s450 + $0x108] sm:$0xff] %vm516, %v3354
          %3419 = vst [vmem:[%s450 + $0x110] sm:$0xff] %v3355
          %3420 = vst.msk [vmem:[%s450 + $0x118] sm:$0xff] %vm516, %v3356
          %3421 = vst [vmem:[%s450 + $0x120] sm:$0xff] %v3357
          %3422 = vst.msk [vmem:[%s450 + $0x128] sm:$0xff] %vm516, %v3358
          %3423 = vst [vmem:[%s450 + $0x130] sm:$0xff] %v3359
          %3424 = vst.msk [vmem:[%s450 + $0x138] sm:$0xff] %vm516, %v3360
          %3425 = vst [vmem:[%s450 + $0x140] sm:$0xff] %v3361
          %3426 = vst.msk [vmem:[%s450 + $0x148] sm:$0xff] %vm516, %v3362
          %3427 = vst [vmem:[%s450 + $0x150] sm:$0xff] %v3363
          %3428 = vst.msk [vmem:[%s450 + $0x158] sm:$0xff] %vm516, %v3364
          %3429 = vst [vmem:[%s450 + $0x160] sm:$0xff] %v3365
          %3430 = vst.msk [vmem:[%s450 + $0x168] sm:$0xff] %vm516, %v3366
          %3431 = vst [vmem:[%s450 + $0x170] sm:$0xff] %v3367
          %3432 = vst.msk [vmem:[%s450 + $0x178] sm:$0xff] %vm516, %v3368
          %3433 = vst [vmem:[%s450 + $0x180] sm:$0xff] %v3369
          %3434 = vst.msk [vmem:[%s450 + $0x188] sm:$0xff] %vm516, %v3370
          %3435 = vst [vmem:[%s450 + $0x190] sm:$0xff] %v3371
          %3436 = vst.msk [vmem:[%s450 + $0x198] sm:$0xff] %vm516, %v3372
          %3437 = vst [vmem:[%s450 + $0x1a0] sm:$0xff] %v3373
          %3438 = vst.msk [vmem:[%s450 + $0x1a8] sm:$0xff] %vm516, %v3374
          %3439 = vst [vmem:[%s450 + $0x1b0] sm:$0xff] %v3375
          %3440 = vst.msk [vmem:[%s450 + $0x1b8] sm:$0xff] %vm516, %v3376
          %3441 = vst [vmem:[%s450 + $0x1c0] sm:$0xff] %v3377
          %3442 = vst.msk [vmem:[%s450 + $0x1c8] sm:$0xff] %vm516, %v3378
          %3443 = vst [vmem:[%s450 + $0x1d0] sm:$0xff] %v3379
          %3444 = vst.msk [vmem:[%s450 + $0x1d8] sm:$0xff] %vm516, %v3380
          %3445 = vst [vmem:[%s450 + $0x1e0] sm:$0xff] %v3381
          %3446 = vst.msk [vmem:[%s450 + $0x1e8] sm:$0xff] %vm516, %v3382
          %3447 = vst [vmem:[%s450 + $0x1f0] sm:$0xff] %v3383
          %3448 = vst.msk [vmem:[%s450 + $0x1f8] sm:$0xff] %vm516, %v3384
        $region82: #{tpu_custom_call.1} parent=69 // pred_fallthru
          _
        %s3449 = smul.u32 32, %s19
        %p3450 = scmp.lt.s32.totalorder %s3449, 31
        %s3451 = scalar_select %p3450, %s3449, 31
        %s3452 = smul.addr %s3451, 2
        %s3453 = smul.addr %s3452, 8
        %s3454 = scalar_lea.vmem %s4, %s3453
        // Predicated region
        $region83: #{tpu_custom_call.1} parent=69 // pred_check
          %p3455 = pneg %p151
        $region84: #{tpu_custom_call.1} parent=69 // pred_check_branch
          %3457 = sbr.rel (%p3455) target = $region86
        $region85: #{tpu_custom_call.1} parent=69 // pred_region
          %s3458 = smul.u32 32, %s19
        $region86: #{tpu_custom_call.1} parent=69 // pred_fallthru
          _
        // Predicated region
        $region87: #{tpu_custom_call.1} parent=69 // pred_check
          %p3459 = pneg %p151
        $region88: #{tpu_custom_call.1} parent=69 // pred_check_branch
          %3461 = sbr.rel (%p3459) target = $region90
        $region89: #{tpu_custom_call.1} parent=69 // pred_region
          %s3462 = smul.u32 32, %s19
          %p3463 = scmp.lt.s32.totalorder %s3462, 31
          %s3464 = scalar_select %p3463, %s3462, 31
          %s3465 = smul.addr %s3464, 2
          %s3466 = smul.addr %s3465, 8
          %s3467 = scalar_lea.vmem %s4, %s3466
        $region90: #{tpu_custom_call.1} parent=69 // pred_fallthru
          _
      $region70: #{tpu_custom_call.1} parent=5 // pred_fallthru
        _
      %p3468 = scmp.le.s32.totalorder 2, %s10
      // Predicated region
      $region91: #{tpu_custom_call.1} parent=5 // pred_check
        %p3469 = pneg %p3468
      $region92: #{tpu_custom_call.1} parent=5 // pred_check_branch
        %3471 = sbr.rel (%p3469) target = $region94
      $region93: #{tpu_custom_call.1} parent=5 // pred_region
        %s3472 = ssub.s32 %s10, 2
      $region94: #{tpu_custom_call.1} parent=5 // pred_fallthru
        _
    $region6: #{tpu_custom_call.1} parent=1 // loop_footer
      %s14 = sadd.s32 1, %s10
    $region7: #{tpu_custom_call.1} parent=1 // loop_footer_branch
      %9 = sbr.rel target = $region3
    $region8: #{tpu_custom_call.1} parent=1 // loop_exit
      _

</llo_original>
